<compile_context>
chip_gen: v7x
topology: tpu7x:2x2x1
jax: 0.10.0
libtpu: 0.0.40
codegen_flags: <defaults>
</compile_context>

<pallas_src>
import functools

import jax
import jax.numpy as jnp
from jax import lax
from jax.experimental import pallas as pl
from jax.experimental.pallas import tpu as pltpu


# ------------------------------- helpers ----------------------------------- #

def _pick_tile(dim, target, align):
    """Largest multiple of `align` that divides `dim` and is <= target, else full dim."""
    if dim % align != 0:
        return dim
    t = min(target, dim)
    t -= t % align
    while t >= align:
        if dim % t == 0:
            return t
        t -= align
    return dim


def _vmem_limit(est_bytes):
    # Explicit scoped-VMEM limit with headroom; stays well under v7x's 64 MiB VMEM.
    return int(min(max(2 * est_bytes, 32 << 20), 48 << 20))


# --------------------------- tiled linear kernels --------------------------- #

def _matmul_kernel(x_ref, w_ref, o_ref, acc_ref):
    @pl.when(pl.program_id(2) == 0)
    def _():
        acc_ref[...] = jnp.zeros_like(acc_ref)
    acc_ref[...] += jnp.dot(x_ref[...], w_ref[...],
                            preferred_element_type=jnp.float32)
    @pl.when(pl.program_id(2) == pl.num_programs(2) - 1)
    def _():
        o_ref[...] = acc_ref[...].astype(o_ref.dtype)


def _matmul_bias_kernel(x_ref, w_ref, b_ref, o_ref, acc_ref):
    @pl.when(pl.program_id(2) == 0)
    def _():
        acc_ref[...] = jnp.zeros_like(acc_ref)
    acc_ref[...] += jnp.dot(x_ref[...], w_ref[...],
                            preferred_element_type=jnp.float32)
    @pl.when(pl.program_id(2) == pl.num_programs(2) - 1)
    def _():
        o_ref[...] = (acc_ref[...] + b_ref[...].astype(jnp.float32)).astype(o_ref.dtype)


def linear(x2d, w, b=None, *, tm=256, tn=256, tk=512):
    """x2d: (M, Cin) @ w: (Cin, Cout) [+ b: (Cout,)] -> (M, Cout), tiled + pipelined."""
    M, Cin = x2d.shape
    Cout = w.shape[1]
    tm = _pick_tile(M, tm, 8)
    tn = _pick_tile(Cout, tn, 128)
    tk = _pick_tile(Cin, tk, 128)
    grid = (M // tm, Cout // tn, Cin // tk)

    in_specs = [
        pl.BlockSpec((tm, tk), lambda i, j, k: (i, k)),
        pl.BlockSpec((tk, tn), lambda i, j, k: (k, j)),
    ]
    if b is None:
        kern = _matmul_kernel
        args = (x2d, w)
    else:
        kern = _matmul_bias_kernel
        in_specs.append(pl.BlockSpec((1, tn), lambda i, j, k: (0, j)))
        args = (x2d, w, b.reshape(1, Cout))

    esz = x2d.dtype.itemsize
    est = 2 * (tm * tk + tk * tn + tm * tn + tn) * esz + tm * tn * 4 + (1 << 20)

    return pl.pallas_call(
        kern,
        out_shape=jax.ShapeDtypeStruct((M, Cout), x2d.dtype),
        grid_spec=pltpu.PrefetchScalarGridSpec(
            num_scalar_prefetch=0,
            grid=grid,
            in_specs=in_specs,
            out_specs=pl.BlockSpec((tm, tn), lambda i, j, k: (i, j)),
            scratch_shapes=[pltpu.VMEM((tm, tn), jnp.float32)],
        ),
        compiler_params=pltpu.CompilerParams(
            dimension_semantics=("parallel", "parallel", "arbitrary"),
            vmem_limit_bytes=_vmem_limit(est),
        ),
    )(*args)


# ---------------------------- attention kernel ------------------------------ #

def _mha_kernel(q_ref, k_ref, v_ref, o_ref, *, num_heads, scale):
    # q_ref / k_ref / v_ref / o_ref: (N, C) — all heads of one batch, lane-dense.
    # TODO(synk): switch to flash-style KV tiling (online softmax with m/l/acc
    # scratch, KV as trailing "arbitrary" grid axis) once N*N f32 scores approach
    # the scoped VMEM limit (N >~ 2K), required for v7x's 64 MiB VMEM.
    n, c = q_ref.shape
    hd = c // num_heads
    outs = []
    for h in range(num_heads):                       # static unroll over heads
        sl = pl.ds(h * hd, hd)
        qh = q_ref[:, sl]                            # (N, hd), input dtype
        kh = k_ref[:, sl]
        vh = v_ref[:, sl]
        # q @ k^T via dot_general contracting the last dims (no transposed copy of k).
        s = lax.dot_general(qh, kh, (((1,), (1,)), ((), ())),
                            preferred_element_type=jnp.float32)   # (N, N) f32
        s = s * scale
        m = jnp.max(s, axis=-1, keepdims=True)
        p = jnp.exp(s - m)
        denom = jnp.sum(p, axis=-1, keepdims=True)
        attn = (p * pl.reciprocal(denom, approx=True)).astype(vh.dtype)
        outs.append(jnp.dot(attn, vh, preferred_element_type=jnp.float32))  # (N, hd)
    # Single unmasked lane-dense store of the whole (N, C) block.
    o_ref[...] = jnp.concatenate(outs, axis=-1).astype(o_ref.dtype)


def multihead_attention(qkv3, num_heads, scale):
    """qkv3: (B, N, 3*C); columns [0:C]=q, [C:2C]=k, [2C:3C]=v (head-major inside).
    Returns (B, N, C) with heads already fused on the channel dim (no transpose)."""
    B, N, C3 = qkv3.shape
    C = C3 // 3
    kern = functools.partial(_mha_kernel, num_heads=num_heads, scale=scale)

    esz = qkv3.dtype.itemsize
    est = 8 * N * C * esz + 4 * N * N * 4 + (2 << 20)
    cparams = pltpu.CompilerParams(
        dimension_semantics=("parallel",),
        vmem_limit_bytes=_vmem_limit(est),
    )
    out_spec = pl.BlockSpec((None, N, C), lambda b: (b, 0, 0))

    if C % 128 == 0:
        # Fast path: slice q/k/v straight out of the qkv activation via index_maps
        # (the same array is passed three times with different last-dim block ids).
        def qkv_spec(which):
            return pl.BlockSpec((None, N, C), lambda b: (b, 0, which))
        in_specs = [qkv_spec(0), qkv_spec(1), qkv_spec(2)]
        args = (qkv3, qkv3, qkv3)
    else:
        # Fallback for C not a multiple of 128: split in XLA (extra copies).
        q = qkv3[:, :, 0 * C:1 * C]
        k = qkv3[:, :, 1 * C:2 * C]
        v = qkv3[:, :, 2 * C:3 * C]
        spec = pl.BlockSpec((None, N, C), lambda b: (b, 0, 0))
        in_specs = [spec, spec, spec]
        args = (q, k, v)

    return pl.pallas_call(
        kern,
        out_shape=jax.ShapeDtypeStruct((B, N, C), qkv3.dtype),
        grid_spec=pltpu.PrefetchScalarGridSpec(
            num_scalar_prefetch=0,
            grid=(B,),
            in_specs=in_specs,
            out_specs=out_spec,
        ),
        compiler_params=cparams,
    )(*args)


# ------------------------------ module wrapper ------------------------------ #

def attention_forward(x, params, num_heads):
    """Equivalent of Attention.forward (qkv_bias=False, qk_norm=False, eval mode)."""
    B, N, C = x.shape
    hd = C // num_heads
    scale = float(hd) ** -0.5

    x2d = x.reshape(B * N, C)
    qkv = linear(x2d, params["qkv_w"])       # (B*N, 3C); qkv_bias=False -> no bias path
    qkv = qkv.reshape(B, N, 3 * C)           # free reshape; columns = (q | k | v), head-major

    # q_norm / k_norm are Identity; attn_drop / proj_drop are no-ops (p=0.0).
    o = multihead_attention(qkv, num_heads, scale)  # (B, N, C), already in (B, N, H*hd) layout

    out = linear(o.reshape(B * N, C), params["proj_w"], params["proj_b"])
    return out.reshape(B, N, C)


def init_params(key, dim, num_heads):
    k1, k2, k3 = jax.random.split(key, 3)
    bound = 1.0 / (dim ** 0.5)
    qkv_w = jax.random.uniform(k1, (dim, 3 * dim), jnp.float32, -bound, bound)
    proj_w = jax.random.uniform(k2, (dim, dim), jnp.float32, -bound, bound)
    proj_b = jax.random.uniform(k3, (dim,), jnp.float32, -bound, bound)
    return dict(qkv_w=qkv_w, proj_w=proj_w, proj_b=proj_b)


# Pure-JAX reference for sanity checking (mirrors the PyTorch math).
def attention_reference(x, params, num_heads):
    B, N, C = x.shape
    hd = C // num_heads
    qkv = x.reshape(B * N, C) @ params["qkv_w"]
    qkv = qkv.reshape(B, N, 3, num_heads, hd).transpose(2, 0, 3, 1, 4)
    q, k, v = qkv[0], qkv[1], qkv[2]
    s = jnp.einsum("bhqd,bhkd->bhqk", q, k) * (hd ** -0.5)
    attn = jax.nn.softmax(s, axis=-1)
    o = jnp.einsum("bhqk,bhkd->bhqd", attn, v)
    o = o.transpose(0, 2, 1, 3).reshape(B * N, C)
    return (o @ params["proj_w"] + params["proj_b"]).reshape(B, N, C)


if __name__ == "__main__":
    B, N, C, H = 2, 64, 128, 4   # dim=128, num_heads=4, head_dim=32

    key = jax.random.PRNGKey(0)
    kx, kp = jax.random.split(key)
    x = jax.random.normal(kx, (B, N, C), jnp.float32)
    params = init_params(kp, C, H)

    fwd = jax.jit(functools.partial(attention_forward, num_heads=H))
    out = jax.block_until_ready(fwd(x, params))

    ref = attention_reference(x, params, H)
    assert out.shape == (B, N, C)
    # approx=True reciprocal in the softmax denominator -> slightly looser tolerance.
    assert jnp.allclose(out, ref, atol=2e-3, rtol=2e-3), "mismatch vs reference"

    print("KERNEL_OK")
</pallas_src>

<mosaic_0001>
module attributes {stable_mosaic.version = 11 : i64} {
  func.func @_matmul_kernel(%arg0: i32, %arg1: i32, %arg2: i32, %arg3: memref<128x128xf32, #tpu.memory_space<vmem>>, %arg4: memref<128x128xf32, #tpu.memory_space<vmem>>, %arg5: memref<128x128xf32, #tpu.memory_space<vmem>>, %arg6: memref<128x128xf32, #tpu.memory_space<vmem>>) attributes {dimension_semantics = [#tpu.dimension_semantics<parallel>, #tpu.dimension_semantics<parallel>, #tpu.dimension_semantics<arbitrary>], iteration_bounds = array<i64: 1, 3, 1>, scalar_prefetch = 0 : i64, scratch_operands = 1 : i64, tpu.core_type = #tpu.core_type<tc>, window_params = [{transform_indices = @transform_0, window_bounds = array<i64: 128, 128>}, {transform_indices = @transform_1, window_bounds = array<i64: 128, 128>}, {transform_indices = @transform_2, window_bounds = array<i64: 128, 128>}]} {
    %c0_i32 = arith.constant 0 : i32
    %0 = arith.cmpi eq, %arg2, %c0_i32 : i32
    %1 = arith.extui %0 : i1 to i32
    %c0_i32_0 = arith.constant 0 : i32
    %2 = arith.cmpi ne, %1, %c0_i32_0 : i32
    scf.if %2 {
      %cst_10 = arith.constant 0.000000e+00 : f32
      %12 = vector.broadcast %cst_10 : f32 to vector<128x128xf32>
      %c0_11 = arith.constant 0 : index
      %c0_12 = arith.constant 0 : index
      %13 = vector.load %arg6[%c0_11, %c0_12] : memref<128x128xf32, #tpu.memory_space<vmem>>, vector<128x128xf32>
      tpu.vector_store %arg6[%c0_11, %c0_12], %12 {strides = array<i32>} : memref<128x128xf32, #tpu.memory_space<vmem>>, vector<128x128xf32>,
    } else {
    }
    %c0 = arith.constant 0 : index
    %c0_1 = arith.constant 0 : index
    %3 = vector.load %arg6[%c0, %c0_1] : memref<128x128xf32, #tpu.memory_space<vmem>>, vector<128x128xf32>
    %c0_2 = arith.constant 0 : index
    %c0_3 = arith.constant 0 : index
    %4 = vector.load %arg3[%c0_2, %c0_3] : memref<128x128xf32, #tpu.memory_space<vmem>>, vector<128x128xf32>
    %c0_4 = arith.constant 0 : index
    %c0_5 = arith.constant 0 : index
    %5 = vector.load %arg4[%c0_4, %c0_5] : memref<128x128xf32, #tpu.memory_space<vmem>>, vector<128x128xf32>
    %cst = arith.constant dense<0.000000e+00> : vector<128x128xf32>
    %6 = tpu.matmul %4, %5, %cst {dimension_numbers = #tpu.dot_dimension_numbers<[1], [0], [0], [1], [0, 0, 1, 1], [], []>} : vector<128x128xf32>, vector<128x128xf32>, vector<128x128xf32> -> vector<128x128xf32>
    %7 = arith.addf %3, %6 : vector<128x128xf32>
    %c0_6 = arith.constant 0 : index
    %c0_7 = arith.constant 0 : index
    %8 = vector.load %arg6[%c0_6, %c0_7] : memref<128x128xf32, #tpu.memory_space<vmem>>, vector<128x128xf32>
    tpu.vector_store %arg6[%c0_6, %c0_7], %7 {strides = array<i32>} : memref<128x128xf32, #tpu.memory_space<vmem>>, vector<128x128xf32>,
    %c0_i32_8 = arith.constant 0 : i32
    %9 = arith.cmpi eq, %arg2, %c0_i32_8 : i32
    %10 = arith.extui %9 : i1 to i32
    %c0_i32_9 = arith.constant 0 : i32
    %11 = arith.cmpi ne, %10, %c0_i32_9 : i32
    scf.if %11 {
      %c0_10 = arith.constant 0 : index
      %c0_11 = arith.constant 0 : index
      %12 = vector.load %arg6[%c0_10, %c0_11] : memref<128x128xf32, #tpu.memory_space<vmem>>, vector<128x128xf32>
      %c0_12 = arith.constant 0 : index
      %c0_13 = arith.constant 0 : index
      %13 = vector.load %arg5[%c0_12, %c0_13] : memref<128x128xf32, #tpu.memory_space<vmem>>, vector<128x128xf32>
      tpu.vector_store %arg5[%c0_12, %c0_13], %12 {strides = array<i32>} : memref<128x128xf32, #tpu.memory_space<vmem>>, vector<128x128xf32>,
    } else {
    }
    return
  }
  func.func @transform_0(%arg0: i32, %arg1: i32, %arg2: i32) -> (i32, i32) {
    %c0_i32 = arith.constant 0 : i32
    return %arg0, %arg2 : i32, i32
  }
  func.func @transform_1(%arg0: i32, %arg1: i32, %arg2: i32) -> (i32, i32) {
    %c0_i32 = arith.constant 0 : i32
    return %arg2, %arg1 : i32, i32
  }
  func.func @transform_2(%arg0: i32, %arg1: i32, %arg2: i32) -> (i32, i32) {
    %c0_i32 = arith.constant 0 : i32
    return %arg0, %arg1 : i32, i32
  }
}

module attributes {stable_mosaic.version = 11 : i64} {
  func.func @_matmul_bias_kernel(%arg0: i32, %arg1: i32, %arg2: i32, %arg3: memref<128x128xf32, #tpu.memory_space<vmem>>, %arg4: memref<128x128xf32, #tpu.memory_space<vmem>>, %arg5: memref<1x128xf32, #tpu.memory_space<vmem>>, %arg6: memref<128x128xf32, #tpu.memory_space<vmem>>, %arg7: memref<128x128xf32, #tpu.memory_space<vmem>>) attributes {dimension_semantics = [#tpu.dimension_semantics<parallel>, #tpu.dimension_semantics<parallel>, #tpu.dimension_semantics<arbitrary>], iteration_bounds = array<i64: 1, 1, 1>, scalar_prefetch = 0 : i64, scratch_operands = 1 : i64, tpu.core_type = #tpu.core_type<tc>, window_params = [{transform_indices = @transform_0, window_bounds = array<i64: 128, 128>}, {transform_indices = @transform_1, window_bounds = array<i64: 128, 128>}, {transform_indices = @transform_2, window_bounds = array<i64: 1, 128>}, {transform_indices = @transform_3, window_bounds = array<i64: 128, 128>}]} {
    %c0_i32 = arith.constant 0 : i32
    %0 = arith.cmpi eq, %arg2, %c0_i32 : i32
    %1 = arith.extui %0 : i1 to i32
    %c0_i32_0 = arith.constant 0 : i32
    %2 = arith.cmpi ne, %1, %c0_i32_0 : i32
    scf.if %2 {
      %cst_10 = arith.constant 0.000000e+00 : f32
      %12 = vector.broadcast %cst_10 : f32 to vector<128x128xf32>
      %c0_11 = arith.constant 0 : index
      %c0_12 = arith.constant 0 : index
      %13 = vector.load %arg7[%c0_11, %c0_12] : memref<128x128xf32, #tpu.memory_space<vmem>>, vector<128x128xf32>
      tpu.vector_store %arg7[%c0_11, %c0_12], %12 {strides = array<i32>} : memref<128x128xf32, #tpu.memory_space<vmem>>, vector<128x128xf32>,
    } else {
    }
    %c0 = arith.constant 0 : index
    %c0_1 = arith.constant 0 : index
    %3 = vector.load %arg7[%c0, %c0_1] : memref<128x128xf32, #tpu.memory_space<vmem>>, vector<128x128xf32>
    %c0_2 = arith.constant 0 : index
    %c0_3 = arith.constant 0 : index
    %4 = vector.load %arg3[%c0_2, %c0_3] : memref<128x128xf32, #tpu.memory_space<vmem>>, vector<128x128xf32>
    %c0_4 = arith.constant 0 : index
    %c0_5 = arith.constant 0 : index
    %5 = vector.load %arg4[%c0_4, %c0_5] : memref<128x128xf32, #tpu.memory_space<vmem>>, vector<128x128xf32>
    %cst = arith.constant dense<0.000000e+00> : vector<128x128xf32>
    %6 = tpu.matmul %4, %5, %cst {dimension_numbers = #tpu.dot_dimension_numbers<[1], [0], [0], [1], [0, 0, 1, 1], [], []>} : vector<128x128xf32>, vector<128x128xf32>, vector<128x128xf32> -> vector<128x128xf32>
    %7 = arith.addf %3, %6 : vector<128x128xf32>
    %c0_6 = arith.constant 0 : index
    %c0_7 = arith.constant 0 : index
    %8 = vector.load %arg7[%c0_6, %c0_7] : memref<128x128xf32, #tpu.memory_space<vmem>>, vector<128x128xf32>
    tpu.vector_store %arg7[%c0_6, %c0_7], %7 {strides = array<i32>} : memref<128x128xf32, #tpu.memory_space<vmem>>, vector<128x128xf32>,
    %c0_i32_8 = arith.constant 0 : i32
    %9 = arith.cmpi eq, %arg2, %c0_i32_8 : i32
    %10 = arith.extui %9 : i1 to i32
    %c0_i32_9 = arith.constant 0 : i32
    %11 = arith.cmpi ne, %10, %c0_i32_9 : i32
    scf.if %11 {
      %c0_10 = arith.constant 0 : index
      %c0_11 = arith.constant 0 : index
      %12 = vector.load %arg7[%c0_10, %c0_11] : memref<128x128xf32, #tpu.memory_space<vmem>>, vector<128x128xf32>
      %c0_12 = arith.constant 0 : index
      %c0_13 = arith.constant 0 : index
      %13 = vector.load %arg5[%c0_12, %c0_13] : memref<1x128xf32, #tpu.memory_space<vmem>>, vector<1x128xf32>
      %14 = vector.broadcast %13 : vector<1x128xf32> to vector<128x128xf32>
      %15 = arith.addf %12, %14 : vector<128x128xf32>
      %c0_14 = arith.constant 0 : index
      %c0_15 = arith.constant 0 : index
      %16 = vector.load %arg6[%c0_14, %c0_15] : memref<128x128xf32, #tpu.memory_space<vmem>>, vector<128x128xf32>
      tpu.vector_store %arg6[%c0_14, %c0_15], %15 {strides = array<i32>} : memref<128x128xf32, #tpu.memory_space<vmem>>, vector<128x128xf32>,
    } else {
    }
    return
  }
  func.func @transform_0(%arg0: i32, %arg1: i32, %arg2: i32) -> (i32, i32) {
    %c0_i32 = arith.constant 0 : i32
    return %arg0, %arg2 : i32, i32
  }
  func.func @transform_1(%arg0: i32, %arg1: i32, %arg2: i32) -> (i32, i32) {
    %c0_i32 = arith.constant 0 : i32
    return %arg2, %arg1 : i32, i32
  }
  func.func @transform_2(%arg0: i32, %arg1: i32, %arg2: i32) -> (i32, i32) {
    %c0_i32 = arith.constant 0 : i32
    %c0_i32_0 = arith.constant 0 : i32
    return %c0_i32, %arg1 : i32, i32
  }
  func.func @transform_3(%arg0: i32, %arg1: i32, %arg2: i32) -> (i32, i32) {
    %c0_i32 = arith.constant 0 : i32
    return %arg0, %arg1 : i32, i32
  }
}

module attributes {stable_mosaic.version = 11 : i64} {
  func.func @_mha_kernel(%arg0: i32, %arg1: memref<1x64x128xf32, #tpu.memory_space<vmem>>, %arg2: memref<1x64x128xf32, #tpu.memory_space<vmem>>, %arg3: memref<1x64x128xf32, #tpu.memory_space<vmem>>, %arg4: memref<1x64x128xf32, #tpu.memory_space<vmem>>) attributes {dimension_semantics = [#tpu.dimension_semantics<parallel>], iteration_bounds = array<i64: 2>, scalar_prefetch = 0 : i64, scratch_operands = 0 : i64, tpu.core_type = #tpu.core_type<tc>, window_params = [{transform_indices = @transform_0, window_bounds = array<i64: 1, 64, 128>}, {transform_indices = @transform_1, window_bounds = array<i64: 1, 64, 128>}, {transform_indices = @transform_2, window_bounds = array<i64: 1, 64, 128>}, {transform_indices = @transform_3, window_bounds = array<i64: 1, 64, 128>}]} {
    %c0 = arith.constant 0 : index
    %c0_0 = arith.constant 0 : index
    %c0_1 = arith.constant 0 : index
    %0 = vector.load %arg1[%c0, %c0_0, %c0_1] : memref<1x64x128xf32, #tpu.memory_space<vmem>>, vector<1x64x32xf32>
    %1 = vector.shape_cast %0 : vector<1x64x32xf32> to vector<64x32xf32>
    %c0_2 = arith.constant 0 : index
    %c0_3 = arith.constant 0 : index
    %c0_4 = arith.constant 0 : index
    %2 = vector.load %arg2[%c0_2, %c0_3, %c0_4] : memref<1x64x128xf32, #tpu.memory_space<vmem>>, vector<1x64x32xf32>
    %3 = vector.shape_cast %2 : vector<1x64x32xf32> to vector<64x32xf32>
    %c0_5 = arith.constant 0 : index
    %c0_6 = arith.constant 0 : index
    %c0_7 = arith.constant 0 : index
    %4 = vector.load %arg3[%c0_5, %c0_6, %c0_7] : memref<1x64x128xf32, #tpu.memory_space<vmem>>, vector<1x64x32xf32>
    %5 = vector.shape_cast %4 : vector<1x64x32xf32> to vector<64x32xf32>
    %cst = arith.constant dense<0.000000e+00> : vector<64x64xf32>
    %6 = tpu.matmul %1, %3, %cst {dimension_numbers = #tpu.dot_dimension_numbers<[1], [1], [0], [0], [0, 0, 1, 0], [], []>} : vector<64x32xf32>, vector<64x32xf32>, vector<64x64xf32> -> vector<64x64xf32>
    %cst_8 = arith.constant 0.176776692 : f32
    %7 = vector.broadcast %cst_8 : f32 to vector<64x64xf32>
    %8 = arith.mulf %6, %7 : vector<64x64xf32>
    %cst_9 = arith.constant dense<0xFF800000> : vector<64xf32>
    %9 = vector.multi_reduction <maximumf>, %8, %cst_9 [1] : vector<64x64xf32> to vector<64xf32>
    %10 = vector.shape_cast %9 : vector<64xf32> to vector<64x1xf32>
    %11 = vector.broadcast %10 : vector<64x1xf32> to vector<64x64xf32>
    %12 = arith.subf %8, %11 : vector<64x64xf32>
    %13 = math.exp %12 : vector<64x64xf32>
    %cst_10 = arith.constant dense<0.000000e+00> : vector<64xf32>
    %14 = vector.multi_reduction <add>, %13, %cst_10 [1] : vector<64x64xf32> to vector<64xf32>
    %15 = vector.shape_cast %14 : vector<64xf32> to vector<64x1xf32>
    %16 = tpu.reciprocal %15 {approx = true} : vector<64x1xf32> -> vector<64x1xf32>
    %17 = vector.broadcast %16 : vector<64x1xf32> to vector<64x64xf32>
    %18 = arith.mulf %13, %17 : vector<64x64xf32>
    %cst_11 = arith.constant dense<0.000000e+00> : vector<64x32xf32>
    %19 = tpu.matmul %18, %5, %cst_11 {dimension_numbers = #tpu.dot_dimension_numbers<[1], [0], [0], [1], [0, 0, 1, 1], [], []>} : vector<64x64xf32>, vector<64x32xf32>, vector<64x32xf32> -> vector<64x32xf32>
    %c0_12 = arith.constant 0 : index
    %c0_13 = arith.constant 0 : index
    %c32 = arith.constant 32 : index
    %20 = vector.load %arg1[%c0_12, %c0_13, %c32] : memref<1x64x128xf32, #tpu.memory_space<vmem>>, vector<1x64x32xf32>
    %21 = vector.shape_cast %20 : vector<1x64x32xf32> to vector<64x32xf32>
    %c0_14 = arith.constant 0 : index
    %c0_15 = arith.constant 0 : index
    %c32_16 = arith.constant 32 : index
    %22 = vector.load %arg2[%c0_14, %c0_15, %c32_16] : memref<1x64x128xf32, #tpu.memory_space<vmem>>, vector<1x64x32xf32>
    %23 = vector.shape_cast %22 : vector<1x64x32xf32> to vector<64x32xf32>
    %c0_17 = arith.constant 0 : index
    %c0_18 = arith.constant 0 : index
    %c32_19 = arith.constant 32 : index
    %24 = vector.load %arg3[%c0_17, %c0_18, %c32_19] : memref<1x64x128xf32, #tpu.memory_space<vmem>>, vector<1x64x32xf32>
    %25 = vector.shape_cast %24 : vector<1x64x32xf32> to vector<64x32xf32>
    %cst_20 = arith.constant dense<0.000000e+00> : vector<64x64xf32>
    %26 = tpu.matmul %21, %23, %cst_20 {dimension_numbers = #tpu.dot_dimension_numbers<[1], [1], [0], [0], [0, 0, 1, 0], [], []>} : vector<64x32xf32>, vector<64x32xf32>, vector<64x64xf32> -> vector<64x64xf32>
    %cst_21 = arith.constant 0.176776692 : f32
    %27 = vector.broadcast %cst_21 : f32 to vector<64x64xf32>
    %28 = arith.mulf %26, %27 : vector<64x64xf32>
    %cst_22 = arith.constant dense<0xFF800000> : vector<64xf32>
    %29 = vector.multi_reduction <maximumf>, %28, %cst_22 [1] : vector<64x64xf32> to vector<64xf32>
    %30 = vector.shape_cast %29 : vector<64xf32> to vector<64x1xf32>
    %31 = vector.broadcast %30 : vector<64x1xf32> to vector<64x64xf32>
    %32 = arith.subf %28, %31 : vector<64x64xf32>
    %33 = math.exp %32 : vector<64x64xf32>
    %cst_23 = arith.constant dense<0.000000e+00> : vector<64xf32>
    %34 = vector.multi_reduction <add>, %33, %cst_23 [1] : vector<64x64xf32> to vector<64xf32>
    %35 = vector.shape_cast %34 : vector<64xf32> to vector<64x1xf32>
    %36 = tpu.reciprocal %35 {approx = true} : vector<64x1xf32> -> vector<64x1xf32>
    %37 = vector.broadcast %36 : vector<64x1xf32> to vector<64x64xf32>
    %38 = arith.mulf %33, %37 : vector<64x64xf32>
    %cst_24 = arith.constant dense<0.000000e+00> : vector<64x32xf32>
    %39 = tpu.matmul %38, %25, %cst_24 {dimension_numbers = #tpu.dot_dimension_numbers<[1], [0], [0], [1], [0, 0, 1, 1], [], []>} : vector<64x64xf32>, vector<64x32xf32>, vector<64x32xf32> -> vector<64x32xf32>
    %c0_25 = arith.constant 0 : index
    %c0_26 = arith.constant 0 : index
    %c64 = arith.constant 64 : index
    %40 = vector.load %arg1[%c0_25, %c0_26, %c64] : memref<1x64x128xf32, #tpu.memory_space<vmem>>, vector<1x64x32xf32>
    %41 = vector.shape_cast %40 : vector<1x64x32xf32> to vector<64x32xf32>
    %c0_27 = arith.constant 0 : index
    %c0_28 = arith.constant 0 : index
    %c64_29 = arith.constant 64 : index
    %42 = vector.load %arg2[%c0_27, %c0_28, %c64_29] : memref<1x64x128xf32, #tpu.memory_space<vmem>>, vector<1x64x32xf32>
    %43 = vector.shape_cast %42 : vector<1x64x32xf32> to vector<64x32xf32>
    %c0_30 = arith.constant 0 : index
    %c0_31 = arith.constant 0 : index
    %c64_32 = arith.constant 64 : index
    %44 = vector.load %arg3[%c0_30, %c0_31, %c64_32] : memref<1x64x128xf32, #tpu.memory_space<vmem>>, vector<1x64x32xf32>
    %45 = vector.shape_cast %44 : vector<1x64x32xf32> to vector<64x32xf32>
    %cst_33 = arith.constant dense<0.000000e+00> : vector<64x64xf32>
    %46 = tpu.matmul %41, %43, %cst_33 {dimension_numbers = #tpu.dot_dimension_numbers<[1], [1], [0], [0], [0, 0, 1, 0], [], []>} : vector<64x32xf32>, vector<64x32xf32>, vector<64x64xf32> -> vector<64x64xf32>
    %cst_34 = arith.constant 0.176776692 : f32
    %47 = vector.broadcast %cst_34 : f32 to vector<64x64xf32>
    %48 = arith.mulf %46, %47 : vector<64x64xf32>
    %cst_35 = arith.constant dense<0xFF800000> : vector<64xf32>
    %49 = vector.multi_reduction <maximumf>, %48, %cst_35 [1] : vector<64x64xf32> to vector<64xf32>
    %50 = vector.shape_cast %49 : vector<64xf32> to vector<64x1xf32>
    %51 = vector.broadcast %50 : vector<64x1xf32> to vector<64x64xf32>
    %52 = arith.subf %48, %51 : vector<64x64xf32>
    %53 = math.exp %52 : vector<64x64xf32>
    %cst_36 = arith.constant dense<0.000000e+00> : vector<64xf32>
    %54 = vector.multi_reduction <add>, %53, %cst_36 [1] : vector<64x64xf32> to vector<64xf32>
    %55 = vector.shape_cast %54 : vector<64xf32> to vector<64x1xf32>
    %56 = tpu.reciprocal %55 {approx = true} : vector<64x1xf32> -> vector<64x1xf32>
    %57 = vector.broadcast %56 : vector<64x1xf32> to vector<64x64xf32>
    %58 = arith.mulf %53, %57 : vector<64x64xf32>
    %cst_37 = arith.constant dense<0.000000e+00> : vector<64x32xf32>
    %59 = tpu.matmul %58, %45, %cst_37 {dimension_numbers = #tpu.dot_dimension_numbers<[1], [0], [0], [1], [0, 0, 1, 1], [], []>} : vector<64x64xf32>, vector<64x32xf32>, vector<64x32xf32> -> vector<64x32xf32>
    %c0_38 = arith.constant 0 : index
    %c0_39 = arith.constant 0 : index
    %c96 = arith.constant 96 : index
    %60 = vector.load %arg1[%c0_38, %c0_39, %c96] : memref<1x64x128xf32, #tpu.memory_space<vmem>>, vector<1x64x32xf32>
    %61 = vector.shape_cast %60 : vector<1x64x32xf32> to vector<64x32xf32>
    %c0_40 = arith.constant 0 : index
    %c0_41 = arith.constant 0 : index
    %c96_42 = arith.constant 96 : index
    %62 = vector.load %arg2[%c0_40, %c0_41, %c96_42] : memref<1x64x128xf32, #tpu.memory_space<vmem>>, vector<1x64x32xf32>
    %63 = vector.shape_cast %62 : vector<1x64x32xf32> to vector<64x32xf32>
    %c0_43 = arith.constant 0 : index
    %c0_44 = arith.constant 0 : index
    %c96_45 = arith.constant 96 : index
    %64 = vector.load %arg3[%c0_43, %c0_44, %c96_45] : memref<1x64x128xf32, #tpu.memory_space<vmem>>, vector<1x64x32xf32>
    %65 = vector.shape_cast %64 : vector<1x64x32xf32> to vector<64x32xf32>
    %cst_46 = arith.constant dense<0.000000e+00> : vector<64x64xf32>
    %66 = tpu.matmul %61, %63, %cst_46 {dimension_numbers = #tpu.dot_dimension_numbers<[1], [1], [0], [0], [0, 0, 1, 0], [], []>} : vector<64x32xf32>, vector<64x32xf32>, vector<64x64xf32> -> vector<64x64xf32>
    %cst_47 = arith.constant 0.176776692 : f32
    %67 = vector.broadcast %cst_47 : f32 to vector<64x64xf32>
    %68 = arith.mulf %66, %67 : vector<64x64xf32>
    %cst_48 = arith.constant dense<0xFF800000> : vector<64xf32>
    %69 = vector.multi_reduction <maximumf>, %68, %cst_48 [1] : vector<64x64xf32> to vector<64xf32>
    %70 = vector.shape_cast %69 : vector<64xf32> to vector<64x1xf32>
    %71 = vector.broadcast %70 : vector<64x1xf32> to vector<64x64xf32>
    %72 = arith.subf %68, %71 : vector<64x64xf32>
    %73 = math.exp %72 : vector<64x64xf32>
    %cst_49 = arith.constant dense<0.000000e+00> : vector<64xf32>
    %74 = vector.multi_reduction <add>, %73, %cst_49 [1] : vector<64x64xf32> to vector<64xf32>
    %75 = vector.shape_cast %74 : vector<64xf32> to vector<64x1xf32>
    %76 = tpu.reciprocal %75 {approx = true} : vector<64x1xf32> -> vector<64x1xf32>
    %77 = vector.broadcast %76 : vector<64x1xf32> to vector<64x64xf32>
    %78 = arith.mulf %73, %77 : vector<64x64xf32>
    %cst_50 = arith.constant dense<0.000000e+00> : vector<64x32xf32>
    %79 = tpu.matmul %78, %65, %cst_50 {dimension_numbers = #tpu.dot_dimension_numbers<[1], [0], [0], [1], [0, 0, 1, 1], [], []>} : vector<64x64xf32>, vector<64x32xf32>, vector<64x32xf32> -> vector<64x32xf32>
    %80 = tpu.concatenate %19, %39, %59, %79 in 1 : vector<64x32xf32>, vector<64x32xf32>, vector<64x32xf32>, vector<64x32xf32> -> vector<64x128xf32>
    %c0_51 = arith.constant 0 : index
    %c0_52 = arith.constant 0 : index
    %c0_53 = arith.constant 0 : index
    %81 = vector.load %arg4[%c0_51, %c0_52, %c0_53] : memref<1x64x128xf32, #tpu.memory_space<vmem>>, vector<1x64x128xf32>
    %82 = vector.shape_cast %81 : vector<1x64x128xf32> to vector<64x128xf32>
    %83 = vector.shape_cast %80 : vector<64x128xf32> to vector<1x64x128xf32>
    tpu.vector_store %arg4[%c0_51, %c0_52, %c0_53], %83 {strides = array<i32>} : memref<1x64x128xf32, #tpu.memory_space<vmem>>, vector<1x64x128xf32>,
    return
  }
  func.func @transform_0(%arg0: i32) -> (i32, i32, i32) {
    %c0_i32 = arith.constant 0 : i32
    %c0_i32_0 = arith.constant 0 : i32
    %c0_i32_1 = arith.constant 0 : i32
    return %arg0, %c0_i32, %c0_i32_0 : i32, i32, i32
  }
  func.func @transform_1(%arg0: i32) -> (i32, i32, i32) {
    %c0_i32 = arith.constant 0 : i32
    %c1_i32 = arith.constant 1 : i32
    %c0_i32_0 = arith.constant 0 : i32
    return %arg0, %c0_i32, %c1_i32 : i32, i32, i32
  }
  func.func @transform_2(%arg0: i32) -> (i32, i32, i32) {
    %c0_i32 = arith.constant 0 : i32
    %c2_i32 = arith.constant 2 : i32
    %c0_i32_0 = arith.constant 0 : i32
    return %arg0, %c0_i32, %c2_i32 : i32, i32, i32
  }
  func.func @transform_3(%arg0: i32) -> (i32, i32, i32) {
    %c0_i32 = arith.constant 0 : i32
    %c0_i32_0 = arith.constant 0 : i32
    %c0_i32_1 = arith.constant 0 : i32
    return %arg0, %c0_i32, %c0_i32_0 : i32, i32, i32
  }
}

</mosaic_0001>

<llo_original>
// kernel: attention_forward.5
$region0: #{attention_forward.5}
  #allocation0 [shape = 'u32[]', space=smem, size = 0x4, offset = 0x4, fixed_abs, tag = 'smem constant byte address 0x4 - core index']
  #allocation1 [shape = 'u32[144,128]{1,0:T(1,128)}', space=vmem, size = 0x12000, scoped, tag = 'internal scratch']
  #allocation2 [shape = 'f32[128,128]{1,0:T(8,128)}', space=vmem, size = 0x10000, scoped, tag = 'scratch operand']
  %s0 = inlined_call_operand.vmem [shape: f32[128,128], index: 0, kind: input, shape index: {}]
  %s1 = inlined_call_operand.vmem [shape: f32[128,128], index: 1, kind: input, shape index: {}]
  %s2 = inlined_call_operand.vmem [shape: f32[1,128], index: 2, kind: input, shape index: {}]
  %s3 = inlined_call_operand.hbm [shape: f32[128,128], index: 3, kind: output, shape index: {}]
  %s4 = sld [smem:[#allocation0]]
  $region30: #{attention_forward.5} parent=0
    _
  %s6 = ssub.s32 1, %s4
  %s7 = scalar_select 0, %s6, %s4
  $region1: #{attention_forward.5} parent=0
    #allocation3 [shape = 'u8[65536]{0}', space=vmem, size = 0x10000, scoped, tag = 'output window, operand 0, single buffered']
    #allocation4 [shape = 's32[1]{0}', space=sflag, size = 0x4, scoped, tag = 'scoped memory for attention_forward.5']
    %8 = vsyncpa [#allocation4], 0
    // Predicated region
    $region2: #{attention_forward.5} parent=1 // pred_check
      _
    $region3: #{attention_forward.5} parent=1 // pred_check_branch
      %10 = sbr.rel (0) target = $region5
    $region4: #{attention_forward.5} parent=1 // pred_region
      _
    $region5: #{attention_forward.5} parent=1 // pred_fallthru
      _
    // Predicated region
    $region6: #{attention_forward.5} parent=1 // pred_check
      _
    $region7: #{attention_forward.5} parent=1 // pred_check_branch
      %12 = sbr.rel (0) target = $region9
    $region8: #{attention_forward.5} parent=1 // pred_region
      _
    $region9: #{attention_forward.5} parent=1 // pred_fallthru
      _
    // Predicated region
    $region10: #{attention_forward.5} parent=1 // pred_check
      _
    $region11: #{attention_forward.5} parent=1 // pred_check_branch
      %14 = sbr.rel (0) target = $region13
    $region12: #{attention_forward.5} parent=1 // pred_region
      _
    $region13: #{attention_forward.5} parent=1 // pred_fallthru
      _
    %p15 = scmp.eq.s32.totalorder 0, 0
    // Predicated region
    $region14: #{attention_forward.5} parent=1 // pred_check
      %p16 = pneg %p15
    $region15: #{attention_forward.5} parent=1 // pred_check_branch
      %18 = sbr.rel (%p16) target = $region17
    $region16: #{attention_forward.5} parent=1 // pred_region
      %19 = vst [vmem:[#allocation2] sm:$0xff] 0.0
      %20 = vst [vmem:[#allocation2 + $0x8] sm:$0xff] 0.0
      %21 = vst [vmem:[#allocation2 + $0x10] sm:$0xff] 0.0
      %22 = vst [vmem:[#allocation2 + $0x18] sm:$0xff] 0.0
      %23 = vst [vmem:[#allocation2 + $0x20] sm:$0xff] 0.0
      %24 = vst [vmem:[#allocation2 + $0x28] sm:$0xff] 0.0
      %25 = vst [vmem:[#allocation2 + $0x30] sm:$0xff] 0.0
      %26 = vst [vmem:[#allocation2 + $0x38] sm:$0xff] 0.0
      %27 = vst [vmem:[#allocation2 + $0x40] sm:$0xff] 0.0
      %28 = vst [vmem:[#allocation2 + $0x48] sm:$0xff] 0.0
      %29 = vst [vmem:[#allocation2 + $0x50] sm:$0xff] 0.0
      %30 = vst [vmem:[#allocation2 + $0x58] sm:$0xff] 0.0
      %31 = vst [vmem:[#allocation2 + $0x60] sm:$0xff] 0.0
      %32 = vst [vmem:[#allocation2 + $0x68] sm:$0xff] 0.0
      %33 = vst [vmem:[#allocation2 + $0x70] sm:$0xff] 0.0
      %34 = vst [vmem:[#allocation2 + $0x78] sm:$0xff] 0.0
    $region17: #{attention_forward.5} parent=1 // pred_fallthru
      _
    %v35 = vld [vmem:[#allocation2] sm:$0xff]
    %v36 = vld [vmem:[#allocation2 + $0x8] sm:$0xff]
    %v37 = vld [vmem:[#allocation2 + $0x10] sm:$0xff]
    %v38 = vld [vmem:[#allocation2 + $0x18] sm:$0xff]
    %v39 = vld [vmem:[#allocation2 + $0x20] sm:$0xff]
    %v40 = vld [vmem:[#allocation2 + $0x28] sm:$0xff]
    %v41 = vld [vmem:[#allocation2 + $0x30] sm:$0xff]
    %v42 = vld [vmem:[#allocation2 + $0x38] sm:$0xff]
    %v43 = vld [vmem:[#allocation2 + $0x40] sm:$0xff]
    %v44 = vld [vmem:[#allocation2 + $0x48] sm:$0xff]
    %v45 = vld [vmem:[#allocation2 + $0x50] sm:$0xff]
    %v46 = vld [vmem:[#allocation2 + $0x58] sm:$0xff]
    %v47 = vld [vmem:[#allocation2 + $0x60] sm:$0xff]
    %v48 = vld [vmem:[#allocation2 + $0x68] sm:$0xff]
    %v49 = vld [vmem:[#allocation2 + $0x70] sm:$0xff]
    %v50 = vld [vmem:[#allocation2 + $0x78] sm:$0xff]
    %v51 = vld [vmem:[%s0] sm:$0xff]
    %v52 = vld [vmem:[%s0 + $0x8] sm:$0xff]
    %v53 = vld [vmem:[%s0 + $0x10] sm:$0xff]
    %v54 = vld [vmem:[%s0 + $0x18] sm:$0xff]
    %v55 = vld [vmem:[%s0 + $0x20] sm:$0xff]
    %v56 = vld [vmem:[%s0 + $0x28] sm:$0xff]
    %v57 = vld [vmem:[%s0 + $0x30] sm:$0xff]
    %v58 = vld [vmem:[%s0 + $0x38] sm:$0xff]
    %v59 = vld [vmem:[%s0 + $0x40] sm:$0xff]
    %v60 = vld [vmem:[%s0 + $0x48] sm:$0xff]
    %v61 = vld [vmem:[%s0 + $0x50] sm:$0xff]
    %v62 = vld [vmem:[%s0 + $0x58] sm:$0xff]
    %v63 = vld [vmem:[%s0 + $0x60] sm:$0xff]
    %v64 = vld [vmem:[%s0 + $0x68] sm:$0xff]
    %v65 = vld [vmem:[%s0 + $0x70] sm:$0xff]
    %v66 = vld [vmem:[%s0 + $0x78] sm:$0xff]
    %v67 = vld [vmem:[%s1] sm:$0xff]
    %v68 = vld [vmem:[%s1 + $0x8] sm:$0xff]
    %v69 = vld [vmem:[%s1 + $0x10] sm:$0xff]
    %v70 = vld [vmem:[%s1 + $0x18] sm:$0xff]
    %v71 = vld [vmem:[%s1 + $0x20] sm:$0xff]
    %v72 = vld [vmem:[%s1 + $0x28] sm:$0xff]
    %v73 = vld [vmem:[%s1 + $0x30] sm:$0xff]
    %v74 = vld [vmem:[%s1 + $0x38] sm:$0xff]
    %v75 = vld [vmem:[%s1 + $0x40] sm:$0xff]
    %v76 = vld [vmem:[%s1 + $0x48] sm:$0xff]
    %v77 = vld [vmem:[%s1 + $0x50] sm:$0xff]
    %v78 = vld [vmem:[%s1 + $0x58] sm:$0xff]
    %v79 = vld [vmem:[%s1 + $0x60] sm:$0xff]
    %v80 = vld [vmem:[%s1 + $0x68] sm:$0xff]
    %v81 = vld [vmem:[%s1 + $0x70] sm:$0xff]
    %v82 = vld [vmem:[%s1 + $0x78] sm:$0xff]
    %83 = vmatprep.subr.mxu0 0.0
    %84 = vmatpush1.msra.mxu0 %v67
    %85 = vmatprep.subr.mxu0 0.0
    %86 = vmatpush1.msra.mxu0 %v68
    %87 = vmatprep.subr.mxu0 0.0
    %88 = vmatpush1.msra.mxu0 %v69
    %89 = vmatprep.subr.mxu0 0.0
    %90 = vmatpush1.msra.mxu0 %v70
    %91 = vmatprep.subr.mxu0 0.0
    %92 = vmatpush1.msra.mxu0 %v71
    %93 = vmatprep.subr.mxu0 0.0
    %94 = vmatpush1.msra.mxu0 %v72
    %95 = vmatprep.subr.mxu0 0.0
    %96 = vmatpush1.msra.mxu0 %v73
    %97 = vmatprep.subr.mxu0 0.0
    %98 = vmatpush1.msra.mxu0 %v74
    %99 = vmatprep.subr.mxu0 0.0
    %100 = vmatpush1.msra.mxu0 %v75
    %101 = vmatprep.subr.mxu0 0.0
    %102 = vmatpush1.msra.mxu0 %v76
    %103 = vmatprep.subr.mxu0 0.0
    %104 = vmatpush1.msra.mxu0 %v77
    %105 = vmatprep.subr.mxu0 0.0
    %106 = vmatpush1.msra.mxu0 %v78
    %107 = vmatprep.subr.mxu0 0.0
    %108 = vmatpush1.msra.mxu0 %v79
    %109 = vmatprep.subr.mxu0 0.0
    %110 = vmatpush1.msra.mxu0 %v80
    %111 = vmatprep.subr.mxu0 0.0
    %112 = vmatpush1.msra.mxu0 %v81
    %113 = vmatprep.subr.mxu0 0.0
    %114 = vmatpush1.msra.mxu0 %v82
    %115 = vmatprep.subr.mxu0 0.0
    %116 = vmatpush1.msra.mxu0 0.0
    %117 = vmatprep.subr.mxu0 0.0
    %118 = vmatpush1.msra.mxu0 0.0
    %119 = vmatprep.subr.mxu0 0.0
    %120 = vmatpush1.msra.mxu0 0.0
    %121 = vmatprep.subr.mxu0 0.0
    %122 = vmatpush1.msra.mxu0 0.0
    %123 = vmatprep.subr.mxu0 0.0
    %124 = vmatpush1.msra.mxu0 0.0
    %125 = vmatprep.subr.mxu0 0.0
    %126 = vmatpush1.msra.mxu0 0.0
    %127 = vmatprep.subr.mxu0 0.0
    %128 = vmatpush1.msra.mxu0 0.0
    %129 = vmatprep.subr.mxu0 0.0
    %130 = vmatpush1.msra.mxu0 0.0
    %131 = vmatprep.subr.mxu0 0.0
    %132 = vmatpush1.msra.mxu0 0.0
    %133 = vmatprep.subr.mxu0 0.0
    %134 = vmatpush1.msra.mxu0 0.0
    %135 = vmatprep.subr.mxu0 0.0
    %136 = vmatpush1.msra.mxu0 0.0
    %137 = vmatprep.subr.mxu0 0.0
    %138 = vmatpush1.msra.mxu0 0.0
    %139 = vmatprep.subr.mxu0 0.0
    %140 = vmatpush1.msra.mxu0 0.0
    %141 = vmatprep.subr.mxu0 0.0
    %142 = vmatpush1.msra.mxu0 0.0
    %143 = vmatprep.subr.mxu0 0.0
    %144 = vmatpush1.msra.mxu0 0.0
    %145 = vmatprep.subr.mxu0 0.0
    %146 = vmatpush1.msra.mxu0 0.0
    %147 = vmatprep.mubr.f32.mxu0 0.0
    %148 = vmatmul.mubr.f32.gmra.mrb[0].mxu0 %v51
    %v149 = vpop.f32.mrb[0].mxu0
    %v150 = vadd.f32 0.0, %v149
    %v151 = vpop.f32.mrb[0].mxu0
    %152 = vmatprep.mubr.f32.mxu0 0.0
    %153 = vmatmul.mubr.f32.gmra.mrb[0].mxu0 %v52
    %v154 = vpop.f32.mrb[0].mxu0
    %v155 = vadd.f32 0.0, %v154
    %v156 = vpop.f32.mrb[0].mxu0
    %157 = vmatprep.mubr.f32.mxu0 0.0
    %158 = vmatmul.mubr.f32.gmra.mrb[0].mxu0 %v53
    %v159 = vpop.f32.mrb[0].mxu0
    %v160 = vadd.f32 0.0, %v159
    %v161 = vpop.f32.mrb[0].mxu0
    %162 = vmatprep.mubr.f32.mxu0 0.0
    %163 = vmatmul.mubr.f32.gmra.mrb[0].mxu0 %v54
    %v164 = vpop.f32.mrb[0].mxu0
    %v165 = vadd.f32 0.0, %v164
    %v166 = vpop.f32.mrb[0].mxu0
    %167 = vmatprep.mubr.f32.mxu0 0.0
    %168 = vmatmul.mubr.f32.gmra.mrb[0].mxu0 %v55
    %v169 = vpop.f32.mrb[0].mxu0
    %v170 = vadd.f32 0.0, %v169
    %v171 = vpop.f32.mrb[0].mxu0
    %172 = vmatprep.mubr.f32.mxu0 0.0
    %173 = vmatmul.mubr.f32.gmra.mrb[0].mxu0 %v56
    %v174 = vpop.f32.mrb[0].mxu0
    %v175 = vadd.f32 0.0, %v174
    %v176 = vpop.f32.mrb[0].mxu0
    %177 = vmatprep.mubr.f32.mxu0 0.0
    %178 = vmatmul.mubr.f32.gmra.mrb[0].mxu0 %v57
    %v179 = vpop.f32.mrb[0].mxu0
    %v180 = vadd.f32 0.0, %v179
    %v181 = vpop.f32.mrb[0].mxu0
    %182 = vmatprep.mubr.f32.mxu0 0.0
    %183 = vmatmul.mubr.f32.gmra.mrb[0].mxu0 %v58
    %v184 = vpop.f32.mrb[0].mxu0
    %v185 = vadd.f32 0.0, %v184
    %v186 = vpop.f32.mrb[0].mxu0
    %187 = vmatprep.mubr.f32.mxu0 0.0
    %188 = vmatmul.mubr.f32.gmra.mrb[0].mxu0 %v59
    %v189 = vpop.f32.mrb[0].mxu0
    %v190 = vadd.f32 0.0, %v189
    %v191 = vpop.f32.mrb[0].mxu0
    %192 = vmatprep.mubr.f32.mxu0 0.0
    %193 = vmatmul.mubr.f32.gmra.mrb[0].mxu0 %v60
    %v194 = vpop.f32.mrb[0].mxu0
    %v195 = vadd.f32 0.0, %v194
    %v196 = vpop.f32.mrb[0].mxu0
    %197 = vmatprep.mubr.f32.mxu0 0.0
    %198 = vmatmul.mubr.f32.gmra.mrb[0].mxu0 %v61
    %v199 = vpop.f32.mrb[0].mxu0
    %v200 = vadd.f32 0.0, %v199
    %v201 = vpop.f32.mrb[0].mxu0
    %202 = vmatprep.mubr.f32.mxu0 0.0
    %203 = vmatmul.mubr.f32.gmra.mrb[0].mxu0 %v62
    %v204 = vpop.f32.mrb[0].mxu0
    %v205 = vadd.f32 0.0, %v204
    %v206 = vpop.f32.mrb[0].mxu0
    %207 = vmatprep.mubr.f32.mxu0 0.0
    %208 = vmatmul.mubr.f32.gmra.mrb[0].mxu0 %v63
    %v209 = vpop.f32.mrb[0].mxu0
    %v210 = vadd.f32 0.0, %v209
    %v211 = vpop.f32.mrb[0].mxu0
    %212 = vmatprep.mubr.f32.mxu0 0.0
    %213 = vmatmul.mubr.f32.gmra.mrb[0].mxu0 %v64
    %v214 = vpop.f32.mrb[0].mxu0
    %v215 = vadd.f32 0.0, %v214
    %v216 = vpop.f32.mrb[0].mxu0
    %217 = vmatprep.mubr.f32.mxu0 0.0
    %218 = vmatmul.mubr.f32.gmra.mrb[0].mxu0 %v65
    %v219 = vpop.f32.mrb[0].mxu0
    %v220 = vadd.f32 0.0, %v219
    %v221 = vpop.f32.mrb[0].mxu0
    %222 = vmatprep.mubr.f32.mxu0 0.0
    %223 = vmatmul.mubr.f32.gmra.mrb[0].mxu0 %v66
    %v224 = vpop.f32.mrb[0].mxu0
    %v225 = vadd.f32 0.0, %v224
    %v226 = vpop.f32.mrb[0].mxu0
    %227 = vdwg.mxu0
    %v228 = vadd.f32 %v35, %v150
    %v229 = vadd.f32 %v36, %v155
    %v230 = vadd.f32 %v37, %v160
    %v231 = vadd.f32 %v38, %v165
    %v232 = vadd.f32 %v39, %v170
    %v233 = vadd.f32 %v40, %v175
    %v234 = vadd.f32 %v41, %v180
    %v235 = vadd.f32 %v42, %v185
    %v236 = vadd.f32 %v43, %v190
    %v237 = vadd.f32 %v44, %v195
    %v238 = vadd.f32 %v45, %v200
    %v239 = vadd.f32 %v46, %v205
    %v240 = vadd.f32 %v47, %v210
    %v241 = vadd.f32 %v48, %v215
    %v242 = vadd.f32 %v49, %v220
    %v243 = vadd.f32 %v50, %v225
    %244 = vst [vmem:[#allocation2] sm:$0xff] %v228
    %245 = vst [vmem:[#allocation2 + $0x8] sm:$0xff] %v229
    %246 = vst [vmem:[#allocation2 + $0x10] sm:$0xff] %v230
    %247 = vst [vmem:[#allocation2 + $0x18] sm:$0xff] %v231
    %248 = vst [vmem:[#allocation2 + $0x20] sm:$0xff] %v232
    %249 = vst [vmem:[#allocation2 + $0x28] sm:$0xff] %v233
    %250 = vst [vmem:[#allocation2 + $0x30] sm:$0xff] %v234
    %251 = vst [vmem:[#allocation2 + $0x38] sm:$0xff] %v235
    %252 = vst [vmem:[#allocation2 + $0x40] sm:$0xff] %v236
    %253 = vst [vmem:[#allocation2 + $0x48] sm:$0xff] %v237
    %254 = vst [vmem:[#allocation2 + $0x50] sm:$0xff] %v238
    %255 = vst [vmem:[#allocation2 + $0x58] sm:$0xff] %v239
    %256 = vst [vmem:[#allocation2 + $0x60] sm:$0xff] %v240
    %257 = vst [vmem:[#allocation2 + $0x68] sm:$0xff] %v241
    %258 = vst [vmem:[#allocation2 + $0x70] sm:$0xff] %v242
    %259 = vst [vmem:[#allocation2 + $0x78] sm:$0xff] %v243
    // Predicated region
    $region18: #{attention_forward.5} parent=1 // pred_check
      %p260 = pneg %p15
    $region19: #{attention_forward.5} parent=1 // pred_check_branch
      %262 = sbr.rel (%p260) target = $region21
    $region20: #{attention_forward.5} parent=1 // pred_region
      %v263 = vld [vmem:[#allocation2] sm:$0xff]
      %v264 = vld [vmem:[#allocation2 + $0x8] sm:$0xff]
      %v265 = vld [vmem:[#allocation2 + $0x10] sm:$0xff]
      %v266 = vld [vmem:[#allocation2 + $0x18] sm:$0xff]
      %v267 = vld [vmem:[#allocation2 + $0x20] sm:$0xff]
      %v268 = vld [vmem:[#allocation2 + $0x28] sm:$0xff]
      %v269 = vld [vmem:[#allocation2 + $0x30] sm:$0xff]
      %v270 = vld [vmem:[#allocation2 + $0x38] sm:$0xff]
      %v271 = vld [vmem:[#allocation2 + $0x40] sm:$0xff]
      %v272 = vld [vmem:[#allocation2 + $0x48] sm:$0xff]
      %v273 = vld [vmem:[#allocation2 + $0x50] sm:$0xff]
      %v274 = vld [vmem:[#allocation2 + $0x58] sm:$0xff]
      %v275 = vld [vmem:[#allocation2 + $0x60] sm:$0xff]
      %v276 = vld [vmem:[#allocation2 + $0x68] sm:$0xff]
      %v277 = vld [vmem:[#allocation2 + $0x70] sm:$0xff]
      %v278 = vld [vmem:[#allocation2 + $0x78] sm:$0xff]
      %v279 = vld [vmem:[%s2] sm:$0x1]
      %v281 = vlaneseq
      %v282 = vshrl.u32 %v281, 7
      %v283 = vsub.s32 0, %v282
      %v284 = vrot.slane %v279, %v283
      %v286 = vadd.f32 %v263, %v284
      %v287 = vadd.f32 %v264, %v284
      %v288 = vadd.f32 %v265, %v284
      %v289 = vadd.f32 %v266, %v284
      %v290 = vadd.f32 %v267, %v284
      %v291 = vadd.f32 %v268, %v284
      %v292 = vadd.f32 %v269, %v284
      %v293 = vadd.f32 %v270, %v284
      %v294 = vadd.f32 %v271, %v284
      %v295 = vadd.f32 %v272, %v284
      %v296 = vadd.f32 %v273, %v284
      %v297 = vadd.f32 %v274, %v284
      %v298 = vadd.f32 %v275, %v284
      %v299 = vadd.f32 %v276, %v284
      %v300 = vadd.f32 %v277, %v284
      %v301 = vadd.f32 %v278, %v284
      %302 = vst [vmem:[#allocation3] sm:$0xff] %v286
      %303 = vst [vmem:[#allocation3 + $0x8] sm:$0xff] %v287
      %304 = vst [vmem:[#allocation3 + $0x10] sm:$0xff] %v288
      %305 = vst [vmem:[#allocation3 + $0x18] sm:$0xff] %v289
      %306 = vst [vmem:[#allocation3 + $0x20] sm:$0xff] %v290
      %307 = vst [vmem:[#allocation3 + $0x28] sm:$0xff] %v291
      %308 = vst [vmem:[#allocation3 + $0x30] sm:$0xff] %v292
      %309 = vst [vmem:[#allocation3 + $0x38] sm:$0xff] %v293
      %310 = vst [vmem:[#allocation3 + $0x40] sm:$0xff] %v294
      %311 = vst [vmem:[#allocation3 + $0x48] sm:$0xff] %v295
      %312 = vst [vmem:[#allocation3 + $0x50] sm:$0xff] %v296
      %313 = vst [vmem:[#allocation3 + $0x58] sm:$0xff] %v297
      %314 = vst [vmem:[#allocation3 + $0x60] sm:$0xff] %v298
      %315 = vst [vmem:[#allocation3 + $0x68] sm:$0xff] %v299
      %316 = vst [vmem:[#allocation3 + $0x70] sm:$0xff] %v300
      %317 = vst [vmem:[#allocation3 + $0x78] sm:$0xff] %v301
    $region21: #{attention_forward.5} parent=1 // pred_fallthru
      _
    // Predicated region
    $region22: #{attention_forward.5} parent=1 // pred_check
      _
    $region23: #{attention_forward.5} parent=1 // pred_check_branch
      %319 = sbr.rel (0) target = $region25
    $region24: #{attention_forward.5} parent=1 // pred_region
      %s321 = ssub.s32 2048, 2048
      %322 = vsyncadd [#allocation4], %s321
      %s323 = sshll.u32 [#allocation3], 4
      %s324 = int_to_ptr.vmem [resolvable:$true] %s323
      %329 = dma.vmem_to_hbm [thread:$0]  %s324, 2048, %s3, [#allocation4], 128, 128, 8
    $region25: #{attention_forward.5} parent=1 // pred_fallthru
      _
    // Predicated region
    $region26: #{attention_forward.5} parent=1 // pred_check
      _
    $region27: #{attention_forward.5} parent=1 // pred_check_branch
      %331 = sbr.rel (0) target = $region29
    $region28: #{attention_forward.5} parent=1 // pred_region
      %332 = dma.done [#allocation4], 2048
    $region29: #{attention_forward.5} parent=1 // pred_fallthru
      _
    %333 = vsyncpa [#allocation4], 1

// kernel: attention_forward.3
$region0: #{attention_forward.3}
  #allocation0 [shape = 'u32[]', space=smem, size = 0x4, offset = 0x4, fixed_abs, tag = 'smem constant byte address 0x4 - core index']
  #allocation1 [shape = 'u32[144,128]{1,0:T(1,128)}', space=vmem, size = 0x12000, scoped, tag = 'internal scratch']
  #allocation2 [shape = 'f32[128,128]{1,0:T(8,128)}', space=vmem, size = 0x10000, scoped, tag = 'scratch operand']
  %s0 = inlined_call_operand.hbm [shape: f32[128,128], index: 0, kind: input, shape index: {}]
  %s1 = inlined_call_operand.hbm [shape: f32[128,384], index: 1, kind: input, shape index: {}]
  %s2 = inlined_call_operand.vmem [shape: f32[128,384], index: 2, kind: output, shape index: {}]
  %s3 = sld [smem:[#allocation0]]
  $region91: #{attention_forward.3} parent=0
    _
  %s5 = ssub.s32 1, %s3
  %s6 = scalar_select 0, %s5, %s3
  $region1: #{attention_forward.3} parent=0
    #allocation3 [shape = 'u8[65536]{0}', space=vmem, size = 0x10000, scoped, tag = 'input window, operand 0, single buffered']
    #allocation4 [shape = 's32[2]{0}', space=sflag, size = 0x8, scoped, tag = 'scoped memory for attention_forward.3']
    #allocation5 [shape = 'u8[131072]{0}', space=vmem, size = 0x20000, scoped, tag = 'input window, operand 1']
    #allocation6 [shape = 's32[2]{0}', space=sflag, size = 0x8, scoped, tag = 'scoped memory for attention_forward.3']
    #allocation7 [shape = 'u8[131072]{0}', space=vmem, size = 0x20000, scoped, tag = 'output window, operand 0']
    %7 = vsyncpa [#allocation4], 0
    %8 = vsyncpa [#allocation6], 0
    %s9 = scalar_lea.sflag [#allocation6], 1
    %10 = vsyncpa %s9, 0
    loop: start=0, step=1, limit=5
    $region2: #{attention_forward.3} parent=1 // loop_pre_header
      _
    $region3: #{attention_forward.3} parent=1 // loop_header
      %s12 = sphi 0, %s16
      %p13 = scmp.ge.s32.totalorder %s12, 5
      %s19 = sphi 0, %s38
      %s20 = sphi 0, %s34
      %s21 = sphi 0, %s30
      %s22 = sphi 0, %s19
      %s23 = sphi 0, %s20
      %s24 = sphi 0, %s21
      %s25 = sphi 0, %s22
      %s26 = sphi 0, %s23
      %s27 = sphi 0, %s24
      %s43 = sphi 0, %s45
      %s46 = sphi 0, %s43
      %s47 = sphi 0, %s46
      %s63 = sphi 0, %s47
      %s71 = sphi 0, %s73
      %s74 = sphi 0, %s71
      %s75 = sphi 0, %s74
      %s91 = sphi 0, %s75
      %s99 = sphi 0, %s101
      %s102 = sphi 0, %s99
      %s103 = sphi 0, %s102
      %s119 = sphi 0, %s103
    $region4: #{attention_forward.3} parent=1 // loop_header_branch
      %15 = sbr.rel (%p13) target = $region8
    $region5: #{attention_forward.3} parent=1 // loop_body
      %s17 = ssub.s32 %s12, 1
      %s18 = ssub.s32 %s12, 2
      %s28 = sadd.s32 1, %s21
      %p29 = scmp.ge.s32.totalorder %s28, 1
      %s30 = scalar_select %p29, 0, %s28
      %s31 = sadd.s32 1, %s20
      %s32 = scalar_select %p29, %s31, %s20
      %p33 = scmp.ge.s32.totalorder %s32, 3
      %s34 = scalar_select %p33, 0, %s32
      %s35 = sadd.s32 1, %s19
      %s36 = scalar_select %p33, %s35, %s19
      %p37 = scmp.ge.s32.totalorder %s36, 1
      %s38 = scalar_select %p37, 0, %s36
      %s39 = ssub.s32 %s19, %s38
      %s40 = ssub.s32 %s21, %s30
      %s41 = sor.u32 %s39, %s40
      %p42 = scmp.eq.s32.totalorder %s41, 0
      %s44 = sadd.s32 %s43, 1
      %s45 = scalar_select %p42, %s43, %s44
      %p48 = pneg %p42
      %p49 = scmp.eq.s32.totalorder %s12, 2
      %p50 = por %p48, %p49
      %p51 = scmp.ne.s32.totalorder %s43, %s46
      %p52 = scmp.eq.s32.totalorder %s12, 0
      %p53 = por %p51, %p52
      %p54 = scmp.ne.s32.totalorder %s43, %s46
      %p55 = scmp.eq.s32.totalorder %s17, 2
      %p56 = por %p54, %p55
      %p57 = scmp.ne.s32.totalorder %s46, %s47
      %p58 = scmp.eq.s32.totalorder %s17, 0
      %p59 = por %p57, %p58
      %p60 = scmp.ne.s32.totalorder %s46, %s47
      %p61 = scmp.eq.s32.totalorder %s18, 2
      %p62 = por %p60, %p61
      %p64 = scmp.ne.s32.totalorder %s47, %s63
      %p65 = scmp.eq.s32.totalorder %s18, 0
      %p66 = por %p64, %p65
      %s67 = ssub.s32 %s21, %s30
      %s68 = ssub.s32 %s20, %s34
      %s69 = sor.u32 %s67, %s68
      %p70 = scmp.eq.s32.totalorder %s69, 0
      %s72 = sadd.s32 %s71, 1
      %s73 = scalar_select %p70, %s71, %s72
      %p76 = pneg %p70
      %p77 = scmp.eq.s32.totalorder %s12, 2
      %p78 = por %p76, %p77
      %p79 = scmp.ne.s32.totalorder %s71, %s74
      %p80 = scmp.eq.s32.totalorder %s12, 0
      %p81 = por %p79, %p80
      %p82 = scmp.ne.s32.totalorder %s71, %s74
      %p83 = scmp.eq.s32.totalorder %s17, 2
      %p84 = por %p82, %p83
      %p85 = scmp.ne.s32.totalorder %s74, %s75
      %p86 = scmp.eq.s32.totalorder %s17, 0
      %p87 = por %p85, %p86
      %p88 = scmp.ne.s32.totalorder %s74, %s75
      %p89 = scmp.eq.s32.totalorder %s18, 2
      %p90 = por %p88, %p89
      %p92 = scmp.ne.s32.totalorder %s75, %s91
      %p93 = scmp.eq.s32.totalorder %s18, 0
      %p94 = por %p92, %p93
      %s95 = ssub.s32 %s19, %s38
      %s96 = ssub.s32 %s20, %s34
      %s97 = sor.u32 %s95, %s96
      %p98 = scmp.eq.s32.totalorder %s97, 0
      %s100 = sadd.s32 %s99, 1
      %s101 = scalar_select %p98, %s99, %s100
      %p104 = pneg %p98
      %p105 = scmp.eq.s32.totalorder %s12, 2
      %p106 = por %p104, %p105
      %p107 = scmp.ne.s32.totalorder %s99, %s102
      %p108 = scmp.eq.s32.totalorder %s12, 0
      %p109 = por %p107, %p108
      %p110 = scmp.ne.s32.totalorder %s99, %s102
      %p111 = scmp.eq.s32.totalorder %s17, 2
      %p112 = por %p110, %p111
      %p113 = scmp.ne.s32.totalorder %s102, %s103
      %p114 = scmp.eq.s32.totalorder %s17, 0
      %p115 = por %p113, %p114
      %p116 = scmp.ne.s32.totalorder %s102, %s103
      %p117 = scmp.eq.s32.totalorder %s18, 2
      %p118 = por %p116, %p117
      %p120 = scmp.ne.s32.totalorder %s103, %s119
      %p121 = scmp.eq.s32.totalorder %s18, 0
      %p122 = por %p120, %p121
      %p123 = scmp.le.s32.totalorder 1, %s12
      %p124 = scmp.lt.s32.totalorder %s12, 4
      %p125 = pnand %p123, %p124
      %p126 = pneg %p125
      // Predicated region
      $region9: #{attention_forward.3} parent=5 // pred_check
        _
      $region10: #{attention_forward.3} parent=5 // pred_check_branch
        %128 = sbr.rel (%p125) target = $region12
      $region11: #{attention_forward.3} parent=5 // pred_region
        %s129 = ssub.s32 %s12, 1
        // Predicated region
        $region13: #{attention_forward.3} parent=11 // pred_check
          %p130 = pneg %p59
        $region14: #{attention_forward.3} parent=11 // pred_check_branch
          %132 = sbr.rel (%p130) target = $region16
        $region15: #{attention_forward.3} parent=11 // pred_region
          %s133 = smul.u32 16, %s22
          %s135 = ssub.s32 2048, 2048
          %136 = vsyncadd [#allocation4], %s135
          %s137 = sadd.s32 %s24, %s133
          %s138 = smul.addr %s137, 128
          %s139 = scalar_lea.hbm %s0, %s138
          %s140 = sshll.u32 [#allocation3], 4
          %s141 = int_to_ptr.vmem [resolvable:$true] %s140
          %146 = dma.hbm_to_vmem [thread:$0]  %s139, 2048, %s141, [#allocation4], 128, 128, 8
        $region16: #{attention_forward.3} parent=11 // pred_fallthru
          _
      $region12: #{attention_forward.3} parent=5 // pred_fallthru
        _
      %p147 = scmp.lt.s32.totalorder %s12, 3
      // Predicated region
      $region17: #{attention_forward.3} parent=5 // pred_check
        %p148 = pneg %p147
      $region18: #{attention_forward.3} parent=5 // pred_check_branch
        %150 = sbr.rel (%p148) target = $region20
      $region19: #{attention_forward.3} parent=5 // pred_region
        // Predicated region
        $region21: #{attention_forward.3} parent=19 // pred_check
          %p151 = pneg %p81
        $region22: #{attention_forward.3} parent=19 // pred_check_branch
          %153 = sbr.rel (%p151) target = $region24
        $region23: #{attention_forward.3} parent=19 // pred_region
          %s154 = sand.u32 %s71, 1
          %s155 = scalar_lea.sflag [#allocation6], %s154
          %s156 = sand.u32 %s71, 1
          %s157 = smul.addr %s156, 128
          %s158 = scalar_lea.vmem [#allocation5], %s157
          %s159 = smul.u32 16, %s21
          %s161 = ssub.s32 2048, 2048
          %162 = vsyncadd %s155, %s161
          %s163 = smul.addr %s159, 3
          %s164 = sadd.s32 %s20, %s163
          %s165 = smul.addr %s164, 128
          %s166 = scalar_lea.hbm %s1, %s165
          %s167 = sshll.u32 %s158, 4
          %s168 = int_to_ptr.vmem [resolvable:$true] %s167
          %173 = dma.hbm_to_vmem [thread:$0]  %s166, 2048, %s168, %s155, 384, 128, 8
        $region24: #{attention_forward.3} parent=19 // pred_fallthru
          _
      $region20: #{attention_forward.3} parent=5 // pred_fallthru
        _
      %p174 = scmp.le.s32.totalorder 1, %s12
      %p175 = scmp.lt.s32.totalorder %s12, 4
      %p176 = pnand %p174, %p175
      %p177 = pneg %p176
      // Predicated region
      $region25: #{attention_forward.3} parent=5 // pred_check
        _
      $region26: #{attention_forward.3} parent=5 // pred_check_branch
        %179 = sbr.rel (%p176) target = $region28
      $region27: #{attention_forward.3} parent=5 // pred_region
        %s180 = ssub.s32 %s12, 1
        // Predicated region
        $region29: #{attention_forward.3} parent=27 // pred_check
          %p181 = pneg %p59
        $region30: #{attention_forward.3} parent=27 // pred_check_branch
          %183 = sbr.rel (%p181) target = $region32
        $region31: #{attention_forward.3} parent=27 // pred_region
          %184 = dma.done [#allocation4], 2048
        $region32: #{attention_forward.3} parent=27 // pred_fallthru
          _
        %s185 = sand.u32 %s74, 1
        %s186 = scalar_lea.sflag [#allocation6], %s185
        %s187 = sand.u32 %s74, 1
        %s188 = smul.addr %s187, 128
        %s189 = scalar_lea.vmem [#allocation5], %s188
        // Predicated region
        $region33: #{attention_forward.3} parent=27 // pred_check
          %p190 = pneg %p87
        $region34: #{attention_forward.3} parent=27 // pred_check_branch
          %192 = sbr.rel (%p190) target = $region36
        $region35: #{attention_forward.3} parent=27 // pred_region
          %193 = dma.done %s186, 2048
        $region36: #{attention_forward.3} parent=27 // pred_fallthru
          _
        %p194 = pneg %p59
        %p195 = pneg %p56
        %s196 = sand.u32 %s74, 1
        %s197 = scalar_lea.sflag [#allocation6], %s196
        %s198 = sand.u32 %s74, 1
        %s199 = smul.addr %s198, 128
        %s200 = scalar_lea.vmem [#allocation5], %s199
        %p201 = pneg %p87
        %p202 = pneg %p84
        %p203 = pneg %p115
        %p204 = pneg %p112
        %s205 = sand.u32 %s102, 1
        %s206 = sand.u32 %s102, 1
        %s207 = smul.addr %s206, 128
        %s208 = scalar_lea.vmem [#allocation7], %s207
        %s209 = smul.u32 16, %s22
        %s210 = smul.u32 16, %s24
        %s211 = smul.u32 16, %s22
        %p212 = scmp.eq.s32.totalorder %s24, 0
        // Predicated region
        $region37: #{attention_forward.3} parent=27 // pred_check
          %p213 = pneg %p212
        $region38: #{attention_forward.3} parent=27 // pred_check_branch
          %215 = sbr.rel (%p213) target = $region40
        $region39: #{attention_forward.3} parent=27 // pred_region
          %216 = vst [vmem:[#allocation2] sm:$0xff] 0.0
          %217 = vst [vmem:[#allocation2 + $0x8] sm:$0xff] 0.0
          %218 = vst [vmem:[#allocation2 + $0x10] sm:$0xff] 0.0
          %219 = vst [vmem:[#allocation2 + $0x18] sm:$0xff] 0.0
          %220 = vst [vmem:[#allocation2 + $0x20] sm:$0xff] 0.0
          %221 = vst [vmem:[#allocation2 + $0x28] sm:$0xff] 0.0
          %222 = vst [vmem:[#allocation2 + $0x30] sm:$0xff] 0.0
          %223 = vst [vmem:[#allocation2 + $0x38] sm:$0xff] 0.0
          %224 = vst [vmem:[#allocation2 + $0x40] sm:$0xff] 0.0
          %225 = vst [vmem:[#allocation2 + $0x48] sm:$0xff] 0.0
          %226 = vst [vmem:[#allocation2 + $0x50] sm:$0xff] 0.0
          %227 = vst [vmem:[#allocation2 + $0x58] sm:$0xff] 0.0
          %228 = vst [vmem:[#allocation2 + $0x60] sm:$0xff] 0.0
          %229 = vst [vmem:[#allocation2 + $0x68] sm:$0xff] 0.0
          %230 = vst [vmem:[#allocation2 + $0x70] sm:$0xff] 0.0
          %231 = vst [vmem:[#allocation2 + $0x78] sm:$0xff] 0.0
        $region40: #{attention_forward.3} parent=27 // pred_fallthru
          _
        %v232 = vld [vmem:[#allocation2] sm:$0xff]
        %v233 = vld [vmem:[#allocation2 + $0x8] sm:$0xff]
        %v234 = vld [vmem:[#allocation2 + $0x10] sm:$0xff]
        %v235 = vld [vmem:[#allocation2 + $0x18] sm:$0xff]
        %v236 = vld [vmem:[#allocation2 + $0x20] sm:$0xff]
        %v237 = vld [vmem:[#allocation2 + $0x28] sm:$0xff]
        %v238 = vld [vmem:[#allocation2 + $0x30] sm:$0xff]
        %v239 = vld [vmem:[#allocation2 + $0x38] sm:$0xff]
        %v240 = vld [vmem:[#allocation2 + $0x40] sm:$0xff]
        %v241 = vld [vmem:[#allocation2 + $0x48] sm:$0xff]
        %v242 = vld [vmem:[#allocation2 + $0x50] sm:$0xff]
        %v243 = vld [vmem:[#allocation2 + $0x58] sm:$0xff]
        %v244 = vld [vmem:[#allocation2 + $0x60] sm:$0xff]
        %v245 = vld [vmem:[#allocation2 + $0x68] sm:$0xff]
        %v246 = vld [vmem:[#allocation2 + $0x70] sm:$0xff]
        %v247 = vld [vmem:[#allocation2 + $0x78] sm:$0xff]
        %v248 = vld [vmem:[#allocation3] sm:$0xff]
        %v249 = vld [vmem:[#allocation3 + $0x8] sm:$0xff]
        %v250 = vld [vmem:[#allocation3 + $0x10] sm:$0xff]
        %v251 = vld [vmem:[#allocation3 + $0x18] sm:$0xff]
        %v252 = vld [vmem:[#allocation3 + $0x20] sm:$0xff]
        %v253 = vld [vmem:[#allocation3 + $0x28] sm:$0xff]
        %v254 = vld [vmem:[#allocation3 + $0x30] sm:$0xff]
        %v255 = vld [vmem:[#allocation3 + $0x38] sm:$0xff]
        %v256 = vld [vmem:[#allocation3 + $0x40] sm:$0xff]
        %v257 = vld [vmem:[#allocation3 + $0x48] sm:$0xff]
        %v258 = vld [vmem:[#allocation3 + $0x50] sm:$0xff]
        %v259 = vld [vmem:[#allocation3 + $0x58] sm:$0xff]
        %v260 = vld [vmem:[#allocation3 + $0x60] sm:$0xff]
        %v261 = vld [vmem:[#allocation3 + $0x68] sm:$0xff]
        %v262 = vld [vmem:[#allocation3 + $0x70] sm:$0xff]
        %v263 = vld [vmem:[#allocation3 + $0x78] sm:$0xff]
        %v264 = vld [vmem:[%s189] sm:$0xff]
        %v265 = vld [vmem:[%s189 + $0x8] sm:$0xff]
        %v266 = vld [vmem:[%s189 + $0x10] sm:$0xff]
        %v267 = vld [vmem:[%s189 + $0x18] sm:$0xff]
        %v268 = vld [vmem:[%s189 + $0x20] sm:$0xff]
        %v269 = vld [vmem:[%s189 + $0x28] sm:$0xff]
        %v270 = vld [vmem:[%s189 + $0x30] sm:$0xff]
        %v271 = vld [vmem:[%s189 + $0x38] sm:$0xff]
        %v272 = vld [vmem:[%s189 + $0x40] sm:$0xff]
        %v273 = vld [vmem:[%s189 + $0x48] sm:$0xff]
        %v274 = vld [vmem:[%s189 + $0x50] sm:$0xff]
        %v275 = vld [vmem:[%s189 + $0x58] sm:$0xff]
        %v276 = vld [vmem:[%s189 + $0x60] sm:$0xff]
        %v277 = vld [vmem:[%s189 + $0x68] sm:$0xff]
        %v278 = vld [vmem:[%s189 + $0x70] sm:$0xff]
        %v279 = vld [vmem:[%s189 + $0x78] sm:$0xff]
        %280 = vmatprep.subr.mxu0 0.0
        %281 = vmatpush1.msra.mxu0 %v264
        %282 = vmatprep.subr.mxu0 0.0
        %283 = vmatpush1.msra.mxu0 %v265
        %284 = vmatprep.subr.mxu0 0.0
        %285 = vmatpush1.msra.mxu0 %v266
        %286 = vmatprep.subr.mxu0 0.0
        %287 = vmatpush1.msra.mxu0 %v267
        %288 = vmatprep.subr.mxu0 0.0
        %289 = vmatpush1.msra.mxu0 %v268
        %290 = vmatprep.subr.mxu0 0.0
        %291 = vmatpush1.msra.mxu0 %v269
        %292 = vmatprep.subr.mxu0 0.0
        %293 = vmatpush1.msra.mxu0 %v270
        %294 = vmatprep.subr.mxu0 0.0
        %295 = vmatpush1.msra.mxu0 %v271
        %296 = vmatprep.subr.mxu0 0.0
        %297 = vmatpush1.msra.mxu0 %v272
        %298 = vmatprep.subr.mxu0 0.0
        %299 = vmatpush1.msra.mxu0 %v273
        %300 = vmatprep.subr.mxu0 0.0
        %301 = vmatpush1.msra.mxu0 %v274
        %302 = vmatprep.subr.mxu0 0.0
        %303 = vmatpush1.msra.mxu0 %v275
        %304 = vmatprep.subr.mxu0 0.0
        %305 = vmatpush1.msra.mxu0 %v276
        %306 = vmatprep.subr.mxu0 0.0
        %307 = vmatpush1.msra.mxu0 %v277
        %308 = vmatprep.subr.mxu0 0.0
        %309 = vmatpush1.msra.mxu0 %v278
        %310 = vmatprep.subr.mxu0 0.0
        %311 = vmatpush1.msra.mxu0 %v279
        %312 = vmatprep.subr.mxu0 0.0
        %313 = vmatpush1.msra.mxu0 0.0
        %314 = vmatprep.subr.mxu0 0.0
        %315 = vmatpush1.msra.mxu0 0.0
        %316 = vmatprep.subr.mxu0 0.0
        %317 = vmatpush1.msra.mxu0 0.0
        %318 = vmatprep.subr.mxu0 0.0
        %319 = vmatpush1.msra.mxu0 0.0
        %320 = vmatprep.subr.mxu0 0.0
        %321 = vmatpush1.msra.mxu0 0.0
        %322 = vmatprep.subr.mxu0 0.0
        %323 = vmatpush1.msra.mxu0 0.0
        %324 = vmatprep.subr.mxu0 0.0
        %325 = vmatpush1.msra.mxu0 0.0
        %326 = vmatprep.subr.mxu0 0.0
        %327 = vmatpush1.msra.mxu0 0.0
        %328 = vmatprep.subr.mxu0 0.0
        %329 = vmatpush1.msra.mxu0 0.0
        %330 = vmatprep.subr.mxu0 0.0
        %331 = vmatpush1.msra.mxu0 0.0
        %332 = vmatprep.subr.mxu0 0.0
        %333 = vmatpush1.msra.mxu0 0.0
        %334 = vmatprep.subr.mxu0 0.0
        %335 = vmatpush1.msra.mxu0 0.0
        %336 = vmatprep.subr.mxu0 0.0
        %337 = vmatpush1.msra.mxu0 0.0
        %338 = vmatprep.subr.mxu0 0.0
        %339 = vmatpush1.msra.mxu0 0.0
        %340 = vmatprep.subr.mxu0 0.0
        %341 = vmatpush1.msra.mxu0 0.0
        %342 = vmatprep.subr.mxu0 0.0
        %343 = vmatpush1.msra.mxu0 0.0
        %344 = vmatprep.mubr.f32.mxu0 0.0
        %345 = vmatmul.mubr.f32.gmra.mrb[0].mxu0 %v248
        %v346 = vpop.f32.mrb[0].mxu0
        %v347 = vadd.f32 0.0, %v346
        %v348 = vpop.f32.mrb[0].mxu0
        %349 = vmatprep.mubr.f32.mxu0 0.0
        %350 = vmatmul.mubr.f32.gmra.mrb[0].mxu0 %v249
        %v351 = vpop.f32.mrb[0].mxu0
        %v352 = vadd.f32 0.0, %v351
        %v353 = vpop.f32.mrb[0].mxu0
        %354 = vmatprep.mubr.f32.mxu0 0.0
        %355 = vmatmul.mubr.f32.gmra.mrb[0].mxu0 %v250
        %v356 = vpop.f32.mrb[0].mxu0
        %v357 = vadd.f32 0.0, %v356
        %v358 = vpop.f32.mrb[0].mxu0
        %359 = vmatprep.mubr.f32.mxu0 0.0
        %360 = vmatmul.mubr.f32.gmra.mrb[0].mxu0 %v251
        %v361 = vpop.f32.mrb[0].mxu0
        %v362 = vadd.f32 0.0, %v361
        %v363 = vpop.f32.mrb[0].mxu0
        %364 = vmatprep.mubr.f32.mxu0 0.0
        %365 = vmatmul.mubr.f32.gmra.mrb[0].mxu0 %v252
        %v366 = vpop.f32.mrb[0].mxu0
        %v367 = vadd.f32 0.0, %v366
        %v368 = vpop.f32.mrb[0].mxu0
        %369 = vmatprep.mubr.f32.mxu0 0.0
        %370 = vmatmul.mubr.f32.gmra.mrb[0].mxu0 %v253
        %v371 = vpop.f32.mrb[0].mxu0
        %v372 = vadd.f32 0.0, %v371
        %v373 = vpop.f32.mrb[0].mxu0
        %374 = vmatprep.mubr.f32.mxu0 0.0
        %375 = vmatmul.mubr.f32.gmra.mrb[0].mxu0 %v254
        %v376 = vpop.f32.mrb[0].mxu0
        %v377 = vadd.f32 0.0, %v376
        %v378 = vpop.f32.mrb[0].mxu0
        %379 = vmatprep.mubr.f32.mxu0 0.0
        %380 = vmatmul.mubr.f32.gmra.mrb[0].mxu0 %v255
        %v381 = vpop.f32.mrb[0].mxu0
        %v382 = vadd.f32 0.0, %v381
        %v383 = vpop.f32.mrb[0].mxu0
        %384 = vmatprep.mubr.f32.mxu0 0.0
        %385 = vmatmul.mubr.f32.gmra.mrb[0].mxu0 %v256
        %v386 = vpop.f32.mrb[0].mxu0
        %v387 = vadd.f32 0.0, %v386
        %v388 = vpop.f32.mrb[0].mxu0
        %389 = vmatprep.mubr.f32.mxu0 0.0
        %390 = vmatmul.mubr.f32.gmra.mrb[0].mxu0 %v257
        %v391 = vpop.f32.mrb[0].mxu0
        %v392 = vadd.f32 0.0, %v391
        %v393 = vpop.f32.mrb[0].mxu0
        %394 = vmatprep.mubr.f32.mxu0 0.0
        %395 = vmatmul.mubr.f32.gmra.mrb[0].mxu0 %v258
        %v396 = vpop.f32.mrb[0].mxu0
        %v397 = vadd.f32 0.0, %v396
        %v398 = vpop.f32.mrb[0].mxu0
        %399 = vmatprep.mubr.f32.mxu0 0.0
        %400 = vmatmul.mubr.f32.gmra.mrb[0].mxu0 %v259
        %v401 = vpop.f32.mrb[0].mxu0
        %v402 = vadd.f32 0.0, %v401
        %v403 = vpop.f32.mrb[0].mxu0
        %404 = vmatprep.mubr.f32.mxu0 0.0
        %405 = vmatmul.mubr.f32.gmra.mrb[0].mxu0 %v260
        %v406 = vpop.f32.mrb[0].mxu0
        %v407 = vadd.f32 0.0, %v406
        %v408 = vpop.f32.mrb[0].mxu0
        %409 = vmatprep.mubr.f32.mxu0 0.0
        %410 = vmatmul.mubr.f32.gmra.mrb[0].mxu0 %v261
        %v411 = vpop.f32.mrb[0].mxu0
        %v412 = vadd.f32 0.0, %v411
        %v413 = vpop.f32.mrb[0].mxu0
        %414 = vmatprep.mubr.f32.mxu0 0.0
        %415 = vmatmul.mubr.f32.gmra.mrb[0].mxu0 %v262
        %v416 = vpop.f32.mrb[0].mxu0
        %v417 = vadd.f32 0.0, %v416
        %v418 = vpop.f32.mrb[0].mxu0
        %419 = vmatprep.mubr.f32.mxu0 0.0
        %420 = vmatmul.mubr.f32.gmra.mrb[0].mxu0 %v263
        %v421 = vpop.f32.mrb[0].mxu0
        %v422 = vadd.f32 0.0, %v421
        %v423 = vpop.f32.mrb[0].mxu0
        %424 = vdwg.mxu0
        %v425 = vadd.f32 %v232, %v347
        %v426 = vadd.f32 %v233, %v352
        %v427 = vadd.f32 %v234, %v357
        %v428 = vadd.f32 %v235, %v362
        %v429 = vadd.f32 %v236, %v367
        %v430 = vadd.f32 %v237, %v372
        %v431 = vadd.f32 %v238, %v377
        %v432 = vadd.f32 %v239, %v382
        %v433 = vadd.f32 %v240, %v387
        %v434 = vadd.f32 %v241, %v392
        %v435 = vadd.f32 %v242, %v397
        %v436 = vadd.f32 %v243, %v402
        %v437 = vadd.f32 %v244, %v407
        %v438 = vadd.f32 %v245, %v412
        %v439 = vadd.f32 %v246, %v417
        %v440 = vadd.f32 %v247, %v422
        %441 = vst [vmem:[#allocation2] sm:$0xff] %v425
        %442 = vst [vmem:[#allocation2 + $0x8] sm:$0xff] %v426
        %443 = vst [vmem:[#allocation2 + $0x10] sm:$0xff] %v427
        %444 = vst [vmem:[#allocation2 + $0x18] sm:$0xff] %v428
        %445 = vst [vmem:[#allocation2 + $0x20] sm:$0xff] %v429
        %446 = vst [vmem:[#allocation2 + $0x28] sm:$0xff] %v430
        %447 = vst [vmem:[#allocation2 + $0x30] sm:$0xff] %v431
        %448 = vst [vmem:[#allocation2 + $0x38] sm:$0xff] %v432
        %449 = vst [vmem:[#allocation2 + $0x40] sm:$0xff] %v433
        %450 = vst [vmem:[#allocation2 + $0x48] sm:$0xff] %v434
        %451 = vst [vmem:[#allocation2 + $0x50] sm:$0xff] %v435
        %452 = vst [vmem:[#allocation2 + $0x58] sm:$0xff] %v436
        %453 = vst [vmem:[#allocation2 + $0x60] sm:$0xff] %v437
        %454 = vst [vmem:[#allocation2 + $0x68] sm:$0xff] %v438
        %455 = vst [vmem:[#allocation2 + $0x70] sm:$0xff] %v439
        %456 = vst [vmem:[#allocation2 + $0x78] sm:$0xff] %v440
        // Predicated region
        $region41: #{attention_forward.3} parent=27 // pred_check
          %p457 = pneg %p212
        $region42: #{attention_forward.3} parent=27 // pred_check_branch
          %459 = sbr.rel (%p457) target = $region44
        $region43: #{attention_forward.3} parent=27 // pred_region
          %v460 = vld [vmem:[#allocation2] sm:$0xff]
          %v461 = vld [vmem:[#allocation2 + $0x8] sm:$0xff]
          %v462 = vld [vmem:[#allocation2 + $0x10] sm:$0xff]
          %v463 = vld [vmem:[#allocation2 + $0x18] sm:$0xff]
          %v464 = vld [vmem:[#allocation2 + $0x20] sm:$0xff]
          %v465 = vld [vmem:[#allocation2 + $0x28] sm:$0xff]
          %v466 = vld [vmem:[#allocation2 + $0x30] sm:$0xff]
          %v467 = vld [vmem:[#allocation2 + $0x38] sm:$0xff]
          %v468 = vld [vmem:[#allocation2 + $0x40] sm:$0xff]
          %v469 = vld [vmem:[#allocation2 + $0x48] sm:$0xff]
          %v470 = vld [vmem:[#allocation2 + $0x50] sm:$0xff]
          %v471 = vld [vmem:[#allocation2 + $0x58] sm:$0xff]
          %v472 = vld [vmem:[#allocation2 + $0x60] sm:$0xff]
          %v473 = vld [vmem:[#allocation2 + $0x68] sm:$0xff]
          %v474 = vld [vmem:[#allocation2 + $0x70] sm:$0xff]
          %v475 = vld [vmem:[#allocation2 + $0x78] sm:$0xff]
          %476 = vst [vmem:[%s208] sm:$0xff] %v460
          %477 = vst [vmem:[%s208 + $0x8] sm:$0xff] %v461
          %478 = vst [vmem:[%s208 + $0x10] sm:$0xff] %v462
          %479 = vst [vmem:[%s208 + $0x18] sm:$0xff] %v463
          %480 = vst [vmem:[%s208 + $0x20] sm:$0xff] %v464
          %481 = vst [vmem:[%s208 + $0x28] sm:$0xff] %v465
          %482 = vst [vmem:[%s208 + $0x30] sm:$0xff] %v466
          %483 = vst [vmem:[%s208 + $0x38] sm:$0xff] %v467
          %484 = vst [vmem:[%s208 + $0x40] sm:$0xff] %v468
          %485 = vst [vmem:[%s208 + $0x48] sm:$0xff] %v469
          %486 = vst [vmem:[%s208 + $0x50] sm:$0xff] %v470
          %487 = vst [vmem:[%s208 + $0x58] sm:$0xff] %v471
          %488 = vst [vmem:[%s208 + $0x60] sm:$0xff] %v472
          %489 = vst [vmem:[%s208 + $0x68] sm:$0xff] %v473
          %490 = vst [vmem:[%s208 + $0x70] sm:$0xff] %v474
          %491 = vst [vmem:[%s208 + $0x78] sm:$0xff] %v475
        $region44: #{attention_forward.3} parent=27 // pred_fallthru
          _
        %s492 = sand.u32 %s102, 1
        %s493 = sand.u32 %s102, 1
        %s494 = smul.addr %s493, 128
        %s495 = scalar_lea.vmem [#allocation7], %s494
        // Predicated region
        $region45: #{attention_forward.3} parent=27 // pred_check
          %p496 = pneg %p112
        $region46: #{attention_forward.3} parent=27 // pred_check_branch
          %498 = sbr.rel (%p496) target = $region48
        $region47: #{attention_forward.3} parent=27 // pred_region
          %s499 = smul.u32 16, %s22
          %s500 = smul.addr %s499, 3
          %s501 = sadd.s32 %s23, %s500
          %s502 = smul.addr %s501, 8
          %s503 = scalar_lea.vmem %s2, %s502
          // Predicated region
          $region49: #{attention_forward.3} parent=47 // pred_check
            _
          $region50: #{attention_forward.3} parent=47 // pred_check_branch
            %505 = sbr.rel (0) target = $region52
          $region51: #{attention_forward.3} parent=47 // pred_region
            // Predicated region
            $region53: #{attention_forward.3} parent=51 // pred_check
              _
            $region54: #{attention_forward.3} parent=51 // pred_check_branch
              %507 = sbr.rel (0) target = $region56
            $region55: #{attention_forward.3} parent=51 // pred_region
              // Predicated region
              $region68: #{attention_forward.3} parent=55 // pred_check
                _
              $region69: #{attention_forward.3} parent=55 // pred_check_branch
                %552 = sbr.rel (0) target = $region71
              $region70: #{attention_forward.3} parent=55 // pred_region
                loop: start=0, step=1, limit=1
                $region72: #{attention_forward.3} parent=70 // loop_pre_header
                  _
                $region73: #{attention_forward.3} parent=70 // loop_header
                  %s554 = sphi 0, %s558
                  %p555 = scmp.ge.s32.totalorder %s554, 1
                  %s559 = sphi %s495, %s495
                  %s560 = sphi %s503, %s503
                $region74: #{attention_forward.3} parent=70 // loop_header_branch
                  %557 = sbr.rel (%p555) target = $region78
                $region75: #{attention_forward.3} parent=70 // loop_body
                  %v561 = vld [vmem:[%s559] sm:$0xff]
                  %562 = vst [vmem:[%s560] sm:$0xff] %v561
                  %v563 = vld [vmem:[%s559 + $0x8] sm:$0xff]
                  %564 = vst [vmem:[%s560 + $0x18] sm:$0xff] %v563
                  %v565 = vld [vmem:[%s559 + $0x10] sm:$0xff]
                  %566 = vst [vmem:[%s560 + $0x30] sm:$0xff] %v565
                  %v567 = vld [vmem:[%s559 + $0x18] sm:$0xff]
                  %568 = vst [vmem:[%s560 + $0x48] sm:$0xff] %v567
                  %v569 = vld [vmem:[%s559 + $0x20] sm:$0xff]
                  %570 = vst [vmem:[%s560 + $0x60] sm:$0xff] %v569
                  %v571 = vld [vmem:[%s559 + $0x28] sm:$0xff]
                  %572 = vst [vmem:[%s560 + $0x78] sm:$0xff] %v571
                  %v573 = vld [vmem:[%s559 + $0x30] sm:$0xff]
                  %574 = vst [vmem:[%s560 + $0x90] sm:$0xff] %v573
                  %v575 = vld [vmem:[%s559 + $0x38] sm:$0xff]
                  %576 = vst [vmem:[%s560 + $0xa8] sm:$0xff] %v575
                  %v577 = vld [vmem:[%s559 + $0x40] sm:$0xff]
                  %578 = vst [vmem:[%s560 + $0xc0] sm:$0xff] %v577
                  %v579 = vld [vmem:[%s559 + $0x48] sm:$0xff]
                  %580 = vst [vmem:[%s560 + $0xd8] sm:$0xff] %v579
                  %v581 = vld [vmem:[%s559 + $0x50] sm:$0xff]
                  %582 = vst [vmem:[%s560 + $0xf0] sm:$0xff] %v581
                  %v583 = vld [vmem:[%s559 + $0x58] sm:$0xff]
                  %584 = vst [vmem:[%s560 + $0x108] sm:$0xff] %v583
                  %v585 = vld [vmem:[%s559 + $0x60] sm:$0xff]
                  %586 = vst [vmem:[%s560 + $0x120] sm:$0xff] %v585
                  %v587 = vld [vmem:[%s559 + $0x68] sm:$0xff]
                  %588 = vst [vmem:[%s560 + $0x138] sm:$0xff] %v587
                  %v589 = vld [vmem:[%s559 + $0x70] sm:$0xff]
                  %590 = vst [vmem:[%s560 + $0x150] sm:$0xff] %v589
                  %v591 = vld [vmem:[%s559 + $0x78] sm:$0xff]
                  %592 = vst [vmem:[%s560 + $0x168] sm:$0xff] %v591
                $region76: #{attention_forward.3} parent=70 // loop_footer
                  %s558 = sadd.s32 1, %s554
                $region77: #{attention_forward.3} parent=70 // loop_footer_branch
                  %553 = sbr.rel target = $region73
                $region78: #{attention_forward.3} parent=70 // loop_exit
                  _
              $region71: #{attention_forward.3} parent=55 // pred_fallthru
                _
              // Predicated region
              $region79: #{attention_forward.3} parent=55 // pred_check
                _
              $region80: #{attention_forward.3} parent=55 // pred_check_branch
                %594 = sbr.rel target = $region82
              $region81: #{attention_forward.3} parent=55 // pred_region
                _
              $region82: #{attention_forward.3} parent=55 // pred_fallthru
                _
            $region56: #{attention_forward.3} parent=51 // pred_fallthru
              _
            // Predicated region
            $region57: #{attention_forward.3} parent=51 // pred_check
              _
            $region58: #{attention_forward.3} parent=51 // pred_check_branch
              %509 = sbr.rel target = $region60
            $region59: #{attention_forward.3} parent=51 // pred_region
              loop: start=0, step=1, limit=1
              $region61: #{attention_forward.3} parent=59 // loop_pre_header
                _
              $region62: #{attention_forward.3} parent=59 // loop_header
                %s512 = sphi 0, %s516
                %p513 = scmp.ge.s32.totalorder %s512, 1
                %s517 = sphi %s495, %s495
                %s518 = sphi %s503, %s503
              $region63: #{attention_forward.3} parent=59 // loop_header_branch
                %515 = sbr.rel (%p513) target = $region67
              $region64: #{attention_forward.3} parent=59 // loop_body
                %v519 = vld [vmem:[%s517] sm:$0xff]
                %520 = vst [vmem:[%s518] sm:$0xff] %v519
                %v521 = vld [vmem:[%s517 + $0x8] sm:$0xff]
                %522 = vst [vmem:[%s518 + $0x18] sm:$0xff] %v521
                %v523 = vld [vmem:[%s517 + $0x10] sm:$0xff]
                %524 = vst [vmem:[%s518 + $0x30] sm:$0xff] %v523
                %v525 = vld [vmem:[%s517 + $0x18] sm:$0xff]
                %526 = vst [vmem:[%s518 + $0x48] sm:$0xff] %v525
                %v527 = vld [vmem:[%s517 + $0x20] sm:$0xff]
                %528 = vst [vmem:[%s518 + $0x60] sm:$0xff] %v527
                %v529 = vld [vmem:[%s517 + $0x28] sm:$0xff]
                %530 = vst [vmem:[%s518 + $0x78] sm:$0xff] %v529
                %v531 = vld [vmem:[%s517 + $0x30] sm:$0xff]
                %532 = vst [vmem:[%s518 + $0x90] sm:$0xff] %v531
                %v533 = vld [vmem:[%s517 + $0x38] sm:$0xff]
                %534 = vst [vmem:[%s518 + $0xa8] sm:$0xff] %v533
                %v535 = vld [vmem:[%s517 + $0x40] sm:$0xff]
                %536 = vst [vmem:[%s518 + $0xc0] sm:$0xff] %v535
                %v537 = vld [vmem:[%s517 + $0x48] sm:$0xff]
                %538 = vst [vmem:[%s518 + $0xd8] sm:$0xff] %v537
                %v539 = vld [vmem:[%s517 + $0x50] sm:$0xff]
                %540 = vst [vmem:[%s518 + $0xf0] sm:$0xff] %v539
                %v541 = vld [vmem:[%s517 + $0x58] sm:$0xff]
                %542 = vst [vmem:[%s518 + $0x108] sm:$0xff] %v541
                %v543 = vld [vmem:[%s517 + $0x60] sm:$0xff]
                %544 = vst [vmem:[%s518 + $0x120] sm:$0xff] %v543
                %v545 = vld [vmem:[%s517 + $0x68] sm:$0xff]
                %546 = vst [vmem:[%s518 + $0x138] sm:$0xff] %v545
                %v547 = vld [vmem:[%s517 + $0x70] sm:$0xff]
                %548 = vst [vmem:[%s518 + $0x150] sm:$0xff] %v547
                %v549 = vld [vmem:[%s517 + $0x78] sm:$0xff]
                %550 = vst [vmem:[%s518 + $0x168] sm:$0xff] %v549
              $region65: #{attention_forward.3} parent=59 // loop_footer
                %s516 = sadd.s32 1, %s512
              $region66: #{attention_forward.3} parent=59 // loop_footer_branch
                %511 = sbr.rel target = $region62
              $region67: #{attention_forward.3} parent=59 // loop_exit
                _
            $region60: #{attention_forward.3} parent=51 // pred_fallthru
              _
          $region52: #{attention_forward.3} parent=47 // pred_fallthru
            _
          %595 = vnop
        $region48: #{attention_forward.3} parent=27 // pred_fallthru
          _
      $region28: #{attention_forward.3} parent=5 // pred_fallthru
        _
      %p596 = scmp.le.s32.totalorder 2, %s12
      // Predicated region
      $region83: #{attention_forward.3} parent=5 // pred_check
        %p597 = pneg %p596
      $region84: #{attention_forward.3} parent=5 // pred_check_branch
        %599 = sbr.rel (%p597) target = $region86
      $region85: #{attention_forward.3} parent=5 // pred_region
        %s600 = ssub.s32 %s12, 2
        // Predicated region
        $region87: #{attention_forward.3} parent=85 // pred_check
          %p601 = pneg %p118
        $region88: #{attention_forward.3} parent=85 // pred_check_branch
          %603 = sbr.rel (%p601) target = $region90
        $region89: #{attention_forward.3} parent=85 // pred_region
          %s604 = sand.u32 %s103, 1
          %s605 = sand.u32 %s103, 1
          %s606 = smul.addr %s605, 128
          %s607 = scalar_lea.vmem [#allocation7], %s606
        $region90: #{attention_forward.3} parent=85 // pred_fallthru
          _
      $region86: #{attention_forward.3} parent=5 // pred_fallthru
        _
    $region6: #{attention_forward.3} parent=1 // loop_footer
      %s16 = sadd.s32 1, %s12
    $region7: #{attention_forward.3} parent=1 // loop_footer_branch
      %11 = sbr.rel target = $region3
    $region8: #{attention_forward.3} parent=1 // loop_exit
      _
    %608 = vsyncpa [#allocation4], 1
    %s609 = scalar_lea.sflag [#allocation4], 1
    %610 = vsyncpa %s609, 1
    %611 = vsyncpa [#allocation6], 1
    %s612 = scalar_lea.sflag [#allocation6], 1
    %613 = vsyncpa %s612, 1

// kernel: attention_forward.4
$region0: #{attention_forward.4}
  #allocation0 [shape = 'u32[]', space=smem, size = 0x4, offset = 0x4, fixed_abs, tag = 'smem constant byte address 0x4 - core index']
  #allocation1 [shape = 'u32[144,128]{1,0:T(1,128)}', space=vmem, size = 0x12000, scoped, tag = 'internal scratch']
  %s0 = inlined_call_operand.vmem [shape: f32[2,64,384], index: 0, kind: input, shape index: {}, may-alias: {0,1,2}]
  %s1 = inlined_call_operand.vmem [shape: f32[2,64,384], index: 1, kind: input, shape index: {}, may-alias: {0,1,2}]
  %s2 = inlined_call_operand.vmem [shape: f32[2,64,384], index: 2, kind: input, shape index: {}, may-alias: {0,1,2}]
  %s3 = inlined_call_operand.vmem [shape: f32[2,64,128], index: 3, kind: output, shape index: {}]
  %s4 = sld [smem:[#allocation0]]
  $region159: #{attention_forward.4} parent=0
    _
  %s6 = ssub.s32 1, %s4
  %s7 = scalar_select 0, %s6, %s4
  $region1: #{attention_forward.4} parent=0
    #allocation2 [shape = 'u8[65536]{0}', space=vmem, size = 0x10000, scoped, tag = 'input window, operand 0']
    #allocation3 [shape = 'u8[65536]{0}', space=vmem, size = 0x10000, scoped, tag = 'input window, operand 1']
    #allocation4 [shape = 'u8[65536]{0}', space=vmem, size = 0x10000, scoped, tag = 'input window, operand 2']
    loop: start=0, step=1, limit=4
    $region2: #{attention_forward.4} parent=1 // loop_pre_header
      _
    $region3: #{attention_forward.4} parent=1 // loop_header
      %s9 = sphi 0, %s13
      %p10 = scmp.ge.s32.totalorder %s9, 4
      %s19 = sphi 0, %s21
      %s22 = sphi 0, %s19
      %s23 = sphi 0, %s22
      %s39 = sphi 0, %s23
      %s45 = sphi 0, %s47
      %s48 = sphi 0, %s45
      %s49 = sphi 0, %s48
      %s65 = sphi 0, %s49
      %s71 = sphi 0, %s73
      %s74 = sphi 0, %s71
      %s75 = sphi 0, %s74
      %s91 = sphi 0, %s75
      %s97 = sphi 0, %s99
      %s100 = sphi 0, %s97
      %s101 = sphi 0, %s100
      %s117 = sphi 0, %s101
    $region4: #{attention_forward.4} parent=1 // loop_header_branch
      %12 = sbr.rel (%p10) target = $region8
    $region5: #{attention_forward.4} parent=1 // loop_body
      %s14 = ssub.s32 %s9, 1
      %s15 = ssub.s32 %s9, 2
      %s16 = sadd.s32 %s9, 1
      %s17 = ssub.s32 %s9, %s16
      %p18 = scmp.eq.s32.totalorder %s17, 0
      %s20 = sadd.s32 %s19, 1
      %s21 = scalar_select %p18, %s19, %s20
      %p24 = pneg %p18
      %p25 = scmp.eq.s32.totalorder %s9, 1
      %p26 = por %p24, %p25
      %p27 = scmp.ne.s32.totalorder %s19, %s22
      %p28 = scmp.eq.s32.totalorder %s9, 0
      %p29 = por %p27, %p28
      %p30 = scmp.ne.s32.totalorder %s19, %s22
      %p31 = scmp.eq.s32.totalorder %s14, 1
      %p32 = por %p30, %p31
      %p33 = scmp.ne.s32.totalorder %s22, %s23
      %p34 = scmp.eq.s32.totalorder %s14, 0
      %p35 = por %p33, %p34
      %p36 = scmp.ne.s32.totalorder %s22, %s23
      %p37 = scmp.eq.s32.totalorder %s15, 1
      %p38 = por %p36, %p37
      %p40 = scmp.ne.s32.totalorder %s23, %s39
      %p41 = scmp.eq.s32.totalorder %s15, 0
      %p42 = por %p40, %p41
      %s43 = ssub.s32 %s9, %s16
      %p44 = scmp.eq.s32.totalorder %s43, 0
      %s46 = sadd.s32 %s45, 1
      %s47 = scalar_select %p44, %s45, %s46
      %p50 = pneg %p44
      %p51 = scmp.eq.s32.totalorder %s9, 1
      %p52 = por %p50, %p51
      %p53 = scmp.ne.s32.totalorder %s45, %s48
      %p54 = scmp.eq.s32.totalorder %s9, 0
      %p55 = por %p53, %p54
      %p56 = scmp.ne.s32.totalorder %s45, %s48
      %p57 = scmp.eq.s32.totalorder %s14, 1
      %p58 = por %p56, %p57
      %p59 = scmp.ne.s32.totalorder %s48, %s49
      %p60 = scmp.eq.s32.totalorder %s14, 0
      %p61 = por %p59, %p60
      %p62 = scmp.ne.s32.totalorder %s48, %s49
      %p63 = scmp.eq.s32.totalorder %s15, 1
      %p64 = por %p62, %p63
      %p66 = scmp.ne.s32.totalorder %s49, %s65
      %p67 = scmp.eq.s32.totalorder %s15, 0
      %p68 = por %p66, %p67
      %s69 = ssub.s32 %s9, %s16
      %p70 = scmp.eq.s32.totalorder %s69, 0
      %s72 = sadd.s32 %s71, 1
      %s73 = scalar_select %p70, %s71, %s72
      %p76 = pneg %p70
      %p77 = scmp.eq.s32.totalorder %s9, 1
      %p78 = por %p76, %p77
      %p79 = scmp.ne.s32.totalorder %s71, %s74
      %p80 = scmp.eq.s32.totalorder %s9, 0
      %p81 = por %p79, %p80
      %p82 = scmp.ne.s32.totalorder %s71, %s74
      %p83 = scmp.eq.s32.totalorder %s14, 1
      %p84 = por %p82, %p83
      %p85 = scmp.ne.s32.totalorder %s74, %s75
      %p86 = scmp.eq.s32.totalorder %s14, 0
      %p87 = por %p85, %p86
      %p88 = scmp.ne.s32.totalorder %s74, %s75
      %p89 = scmp.eq.s32.totalorder %s15, 1
      %p90 = por %p88, %p89
      %p92 = scmp.ne.s32.totalorder %s75, %s91
      %p93 = scmp.eq.s32.totalorder %s15, 0
      %p94 = por %p92, %p93
      %s95 = ssub.s32 %s9, %s16
      %p96 = scmp.eq.s32.totalorder %s95, 0
      %s98 = sadd.s32 %s97, 1
      %s99 = scalar_select %p96, %s97, %s98
      %p102 = pneg %p96
      %p103 = scmp.eq.s32.totalorder %s9, 1
      %p104 = por %p102, %p103
      %p105 = scmp.ne.s32.totalorder %s97, %s100
      %p106 = scmp.eq.s32.totalorder %s9, 0
      %p107 = por %p105, %p106
      %p108 = scmp.ne.s32.totalorder %s97, %s100
      %p109 = scmp.eq.s32.totalorder %s14, 1
      %p110 = por %p108, %p109
      %p111 = scmp.ne.s32.totalorder %s100, %s101
      %p112 = scmp.eq.s32.totalorder %s14, 0
      %p113 = por %p111, %p112
      %p114 = scmp.ne.s32.totalorder %s100, %s101
      %p115 = scmp.eq.s32.totalorder %s15, 1
      %p116 = por %p114, %p115
      %p118 = scmp.ne.s32.totalorder %s101, %s117
      %p119 = scmp.eq.s32.totalorder %s15, 0
      %p120 = por %p118, %p119
      %p121 = scmp.le.s32.totalorder 1, %s9
      %p122 = scmp.lt.s32.totalorder %s9, 3
      %p123 = pnand %p121, %p122
      %p124 = pneg %p123
      // Predicated region
      $region9: #{attention_forward.4} parent=5 // pred_check
        _
      $region10: #{attention_forward.4} parent=5 // pred_check_branch
        %126 = sbr.rel (%p123) target = $region12
      $region11: #{attention_forward.4} parent=5 // pred_region
        %s127 = ssub.s32 %s9, 1
      $region12: #{attention_forward.4} parent=5 // pred_fallthru
        _
      %p128 = scmp.lt.s32.totalorder %s9, 2
      // Predicated region
      $region13: #{attention_forward.4} parent=5 // pred_check
        %p129 = pneg %p128
      $region14: #{attention_forward.4} parent=5 // pred_check_branch
        %131 = sbr.rel (%p129) target = $region16
      $region15: #{attention_forward.4} parent=5 // pred_region
        // Predicated region
        $region17: #{attention_forward.4} parent=15 // pred_check
          %p132 = pneg %p29
        $region18: #{attention_forward.4} parent=15 // pred_check_branch
          %134 = sbr.rel (%p132) target = $region20
        $region19: #{attention_forward.4} parent=15 // pred_region
          %s135 = sand.u32 %s19, 1
          %s136 = sand.u32 %s19, 1
          %s137 = smul.addr %s136, 64
          %s138 = scalar_lea.vmem [#allocation2], %s137
          %s139 = smul.addr %s9, 24
          %s140 = smul.addr %s139, 8
          %s141 = scalar_lea.vmem %s0, %s140
          // Predicated region
          $region21: #{attention_forward.4} parent=19 // pred_check
            _
          $region22: #{attention_forward.4} parent=19 // pred_check_branch
            %143 = sbr.rel (0) target = $region24
          $region23: #{attention_forward.4} parent=19 // pred_region
            // Predicated region
            $region25: #{attention_forward.4} parent=23 // pred_check
              _
            $region26: #{attention_forward.4} parent=23 // pred_check_branch
              %145 = sbr.rel (0) target = $region28
            $region27: #{attention_forward.4} parent=23 // pred_region
              // Predicated region
              $region40: #{attention_forward.4} parent=27 // pred_check
                _
              $region41: #{attention_forward.4} parent=27 // pred_check_branch
                %174 = sbr.rel (0) target = $region43
              $region42: #{attention_forward.4} parent=27 // pred_region
                loop: start=0, step=1, limit=1
                $region44: #{attention_forward.4} parent=42 // loop_pre_header
                  _
                $region45: #{attention_forward.4} parent=42 // loop_header
                  %s176 = sphi 0, %s180
                  %p177 = scmp.ge.s32.totalorder %s176, 1
                  %s181 = sphi %s141, %s141
                  %s182 = sphi %s138, %s138
                $region46: #{attention_forward.4} parent=42 // loop_header_branch
                  %179 = sbr.rel (%p177) target = $region50
                $region47: #{attention_forward.4} parent=42 // loop_body
                  %v183 = vld [vmem:[%s181] sm:$0xff]
                  %184 = vst [vmem:[%s182] sm:$0xff] %v183
                  %v185 = vld [vmem:[%s181 + $0x18] sm:$0xff]
                  %186 = vst [vmem:[%s182 + $0x8] sm:$0xff] %v185
                  %v187 = vld [vmem:[%s181 + $0x30] sm:$0xff]
                  %188 = vst [vmem:[%s182 + $0x10] sm:$0xff] %v187
                  %v189 = vld [vmem:[%s181 + $0x48] sm:$0xff]
                  %190 = vst [vmem:[%s182 + $0x18] sm:$0xff] %v189
                  %v191 = vld [vmem:[%s181 + $0x60] sm:$0xff]
                  %192 = vst [vmem:[%s182 + $0x20] sm:$0xff] %v191
                  %v193 = vld [vmem:[%s181 + $0x78] sm:$0xff]
                  %194 = vst [vmem:[%s182 + $0x28] sm:$0xff] %v193
                  %v195 = vld [vmem:[%s181 + $0x90] sm:$0xff]
                  %196 = vst [vmem:[%s182 + $0x30] sm:$0xff] %v195
                  %v197 = vld [vmem:[%s181 + $0xa8] sm:$0xff]
                  %198 = vst [vmem:[%s182 + $0x38] sm:$0xff] %v197
                $region48: #{attention_forward.4} parent=42 // loop_footer
                  %s180 = sadd.s32 1, %s176
                $region49: #{attention_forward.4} parent=42 // loop_footer_branch
                  %175 = sbr.rel target = $region45
                $region50: #{attention_forward.4} parent=42 // loop_exit
                  _
              $region43: #{attention_forward.4} parent=27 // pred_fallthru
                _
              // Predicated region
              $region51: #{attention_forward.4} parent=27 // pred_check
                _
              $region52: #{attention_forward.4} parent=27 // pred_check_branch
                %200 = sbr.rel target = $region54
              $region53: #{attention_forward.4} parent=27 // pred_region
                _
              $region54: #{attention_forward.4} parent=27 // pred_fallthru
                _
            $region28: #{attention_forward.4} parent=23 // pred_fallthru
              _
            // Predicated region
            $region29: #{attention_forward.4} parent=23 // pred_check
              _
            $region30: #{attention_forward.4} parent=23 // pred_check_branch
              %147 = sbr.rel target = $region32
            $region31: #{attention_forward.4} parent=23 // pred_region
              loop: start=0, step=1, limit=1
              $region33: #{attention_forward.4} parent=31 // loop_pre_header
                _
              $region34: #{attention_forward.4} parent=31 // loop_header
                %s150 = sphi 0, %s154
                %p151 = scmp.ge.s32.totalorder %s150, 1
                %s155 = sphi %s141, %s141
                %s156 = sphi %s138, %s138
              $region35: #{attention_forward.4} parent=31 // loop_header_branch
                %153 = sbr.rel (%p151) target = $region39
              $region36: #{attention_forward.4} parent=31 // loop_body
                %v157 = vld [vmem:[%s155] sm:$0xff]
                %158 = vst [vmem:[%s156] sm:$0xff] %v157
                %v159 = vld [vmem:[%s155 + $0x18] sm:$0xff]
                %160 = vst [vmem:[%s156 + $0x8] sm:$0xff] %v159
                %v161 = vld [vmem:[%s155 + $0x30] sm:$0xff]
                %162 = vst [vmem:[%s156 + $0x10] sm:$0xff] %v161
                %v163 = vld [vmem:[%s155 + $0x48] sm:$0xff]
                %164 = vst [vmem:[%s156 + $0x18] sm:$0xff] %v163
                %v165 = vld [vmem:[%s155 + $0x60] sm:$0xff]
                %166 = vst [vmem:[%s156 + $0x20] sm:$0xff] %v165
                %v167 = vld [vmem:[%s155 + $0x78] sm:$0xff]
                %168 = vst [vmem:[%s156 + $0x28] sm:$0xff] %v167
                %v169 = vld [vmem:[%s155 + $0x90] sm:$0xff]
                %170 = vst [vmem:[%s156 + $0x30] sm:$0xff] %v169
                %v171 = vld [vmem:[%s155 + $0xa8] sm:$0xff]
                %172 = vst [vmem:[%s156 + $0x38] sm:$0xff] %v171
              $region37: #{attention_forward.4} parent=31 // loop_footer
                %s154 = sadd.s32 1, %s150
              $region38: #{attention_forward.4} parent=31 // loop_footer_branch
                %149 = sbr.rel target = $region34
              $region39: #{attention_forward.4} parent=31 // loop_exit
                _
            $region32: #{attention_forward.4} parent=23 // pred_fallthru
              _
          $region24: #{attention_forward.4} parent=19 // pred_fallthru
            _
          %201 = vnop
        $region20: #{attention_forward.4} parent=15 // pred_fallthru
          _
        // Predicated region
        $region55: #{attention_forward.4} parent=15 // pred_check
          %p202 = pneg %p55
        $region56: #{attention_forward.4} parent=15 // pred_check_branch
          %204 = sbr.rel (%p202) target = $region58
        $region57: #{attention_forward.4} parent=15 // pred_region
          %s205 = sand.u32 %s45, 1
          %s206 = sand.u32 %s45, 1
          %s207 = smul.addr %s206, 64
          %s208 = scalar_lea.vmem [#allocation3], %s207
          %s209 = smul.addr %s9, 24
          %s210 = sadd.s32 1, %s209
          %s211 = smul.addr %s210, 8
          %s212 = scalar_lea.vmem %s1, %s211
          // Predicated region
          $region59: #{attention_forward.4} parent=57 // pred_check
            _
          $region60: #{attention_forward.4} parent=57 // pred_check_branch
            %214 = sbr.rel (0) target = $region62
          $region61: #{attention_forward.4} parent=57 // pred_region
            // Predicated region
            $region63: #{attention_forward.4} parent=61 // pred_check
              _
            $region64: #{attention_forward.4} parent=61 // pred_check_branch
              %216 = sbr.rel (0) target = $region66
            $region65: #{attention_forward.4} parent=61 // pred_region
              // Predicated region
              $region78: #{attention_forward.4} parent=65 // pred_check
                _
              $region79: #{attention_forward.4} parent=65 // pred_check_branch
                %245 = sbr.rel (0) target = $region81
              $region80: #{attention_forward.4} parent=65 // pred_region
                loop: start=0, step=1, limit=1
                $region82: #{attention_forward.4} parent=80 // loop_pre_header
                  _
                $region83: #{attention_forward.4} parent=80 // loop_header
                  %s247 = sphi 0, %s251
                  %p248 = scmp.ge.s32.totalorder %s247, 1
                  %s252 = sphi %s212, %s212
                  %s253 = sphi %s208, %s208
                $region84: #{attention_forward.4} parent=80 // loop_header_branch
                  %250 = sbr.rel (%p248) target = $region88
                $region85: #{attention_forward.4} parent=80 // loop_body
                  %v254 = vld [vmem:[%s252] sm:$0xff]
                  %255 = vst [vmem:[%s253] sm:$0xff] %v254
                  %v256 = vld [vmem:[%s252 + $0x18] sm:$0xff]
                  %257 = vst [vmem:[%s253 + $0x8] sm:$0xff] %v256
                  %v258 = vld [vmem:[%s252 + $0x30] sm:$0xff]
                  %259 = vst [vmem:[%s253 + $0x10] sm:$0xff] %v258
                  %v260 = vld [vmem:[%s252 + $0x48] sm:$0xff]
                  %261 = vst [vmem:[%s253 + $0x18] sm:$0xff] %v260
                  %v262 = vld [vmem:[%s252 + $0x60] sm:$0xff]
                  %263 = vst [vmem:[%s253 + $0x20] sm:$0xff] %v262
                  %v264 = vld [vmem:[%s252 + $0x78] sm:$0xff]
                  %265 = vst [vmem:[%s253 + $0x28] sm:$0xff] %v264
                  %v266 = vld [vmem:[%s252 + $0x90] sm:$0xff]
                  %267 = vst [vmem:[%s253 + $0x30] sm:$0xff] %v266
                  %v268 = vld [vmem:[%s252 + $0xa8] sm:$0xff]
                  %269 = vst [vmem:[%s253 + $0x38] sm:$0xff] %v268
                $region86: #{attention_forward.4} parent=80 // loop_footer
                  %s251 = sadd.s32 1, %s247
                $region87: #{attention_forward.4} parent=80 // loop_footer_branch
                  %246 = sbr.rel target = $region83
                $region88: #{attention_forward.4} parent=80 // loop_exit
                  _
              $region81: #{attention_forward.4} parent=65 // pred_fallthru
                _
              // Predicated region
              $region89: #{attention_forward.4} parent=65 // pred_check
                _
              $region90: #{attention_forward.4} parent=65 // pred_check_branch
                %271 = sbr.rel target = $region92
              $region91: #{attention_forward.4} parent=65 // pred_region
                _
              $region92: #{attention_forward.4} parent=65 // pred_fallthru
                _
            $region66: #{attention_forward.4} parent=61 // pred_fallthru
              _
            // Predicated region
            $region67: #{attention_forward.4} parent=61 // pred_check
              _
            $region68: #{attention_forward.4} parent=61 // pred_check_branch
              %218 = sbr.rel target = $region70
            $region69: #{attention_forward.4} parent=61 // pred_region
              loop: start=0, step=1, limit=1
              $region71: #{attention_forward.4} parent=69 // loop_pre_header
                _
              $region72: #{attention_forward.4} parent=69 // loop_header
                %s221 = sphi 0, %s225
                %p222 = scmp.ge.s32.totalorder %s221, 1
                %s226 = sphi %s212, %s212
                %s227 = sphi %s208, %s208
              $region73: #{attention_forward.4} parent=69 // loop_header_branch
                %224 = sbr.rel (%p222) target = $region77
              $region74: #{attention_forward.4} parent=69 // loop_body
                %v228 = vld [vmem:[%s226] sm:$0xff]
                %229 = vst [vmem:[%s227] sm:$0xff] %v228
                %v230 = vld [vmem:[%s226 + $0x18] sm:$0xff]
                %231 = vst [vmem:[%s227 + $0x8] sm:$0xff] %v230
                %v232 = vld [vmem:[%s226 + $0x30] sm:$0xff]
                %233 = vst [vmem:[%s227 + $0x10] sm:$0xff] %v232
                %v234 = vld [vmem:[%s226 + $0x48] sm:$0xff]
                %235 = vst [vmem:[%s227 + $0x18] sm:$0xff] %v234
                %v236 = vld [vmem:[%s226 + $0x60] sm:$0xff]
                %237 = vst [vmem:[%s227 + $0x20] sm:$0xff] %v236
                %v238 = vld [vmem:[%s226 + $0x78] sm:$0xff]
                %239 = vst [vmem:[%s227 + $0x28] sm:$0xff] %v238
                %v240 = vld [vmem:[%s226 + $0x90] sm:$0xff]
                %241 = vst [vmem:[%s227 + $0x30] sm:$0xff] %v240
                %v242 = vld [vmem:[%s226 + $0xa8] sm:$0xff]
                %243 = vst [vmem:[%s227 + $0x38] sm:$0xff] %v242
              $region75: #{attention_forward.4} parent=69 // loop_footer
                %s225 = sadd.s32 1, %s221
              $region76: #{attention_forward.4} parent=69 // loop_footer_branch
                %220 = sbr.rel target = $region72
              $region77: #{attention_forward.4} parent=69 // loop_exit
                _
            $region70: #{attention_forward.4} parent=61 // pred_fallthru
              _
          $region62: #{attention_forward.4} parent=57 // pred_fallthru
            _
          %272 = vnop
        $region58: #{attention_forward.4} parent=15 // pred_fallthru
          _
        // Predicated region
        $region93: #{attention_forward.4} parent=15 // pred_check
          %p273 = pneg %p81
        $region94: #{attention_forward.4} parent=15 // pred_check_branch
          %275 = sbr.rel (%p273) target = $region96
        $region95: #{attention_forward.4} parent=15 // pred_region
          %s276 = sand.u32 %s71, 1
          %s277 = sand.u32 %s71, 1
          %s278 = smul.addr %s277, 64
          %s279 = scalar_lea.vmem [#allocation4], %s278
          %s280 = smul.addr %s9, 24
          %s281 = sadd.s32 2, %s280
          %s282 = smul.addr %s281, 8
          %s283 = scalar_lea.vmem %s2, %s282
          // Predicated region
          $region97: #{attention_forward.4} parent=95 // pred_check
            _
          $region98: #{attention_forward.4} parent=95 // pred_check_branch
            %285 = sbr.rel (0) target = $region100
          $region99: #{attention_forward.4} parent=95 // pred_region
            // Predicated region
            $region101: #{attention_forward.4} parent=99 // pred_check
              _
            $region102: #{attention_forward.4} parent=99 // pred_check_branch
              %287 = sbr.rel (0) target = $region104
            $region103: #{attention_forward.4} parent=99 // pred_region
              // Predicated region
              $region116: #{attention_forward.4} parent=103 // pred_check
                _
              $region117: #{attention_forward.4} parent=103 // pred_check_branch
                %316 = sbr.rel (0) target = $region119
              $region118: #{attention_forward.4} parent=103 // pred_region
                loop: start=0, step=1, limit=1
                $region120: #{attention_forward.4} parent=118 // loop_pre_header
                  _
                $region121: #{attention_forward.4} parent=118 // loop_header
                  %s318 = sphi 0, %s322
                  %p319 = scmp.ge.s32.totalorder %s318, 1
                  %s323 = sphi %s283, %s283
                  %s324 = sphi %s279, %s279
                $region122: #{attention_forward.4} parent=118 // loop_header_branch
                  %321 = sbr.rel (%p319) target = $region126
                $region123: #{attention_forward.4} parent=118 // loop_body
                  %v325 = vld [vmem:[%s323] sm:$0xff]
                  %326 = vst [vmem:[%s324] sm:$0xff] %v325
                  %v327 = vld [vmem:[%s323 + $0x18] sm:$0xff]
                  %328 = vst [vmem:[%s324 + $0x8] sm:$0xff] %v327
                  %v329 = vld [vmem:[%s323 + $0x30] sm:$0xff]
                  %330 = vst [vmem:[%s324 + $0x10] sm:$0xff] %v329
                  %v331 = vld [vmem:[%s323 + $0x48] sm:$0xff]
                  %332 = vst [vmem:[%s324 + $0x18] sm:$0xff] %v331
                  %v333 = vld [vmem:[%s323 + $0x60] sm:$0xff]
                  %334 = vst [vmem:[%s324 + $0x20] sm:$0xff] %v333
                  %v335 = vld [vmem:[%s323 + $0x78] sm:$0xff]
                  %336 = vst [vmem:[%s324 + $0x28] sm:$0xff] %v335
                  %v337 = vld [vmem:[%s323 + $0x90] sm:$0xff]
                  %338 = vst [vmem:[%s324 + $0x30] sm:$0xff] %v337
                  %v339 = vld [vmem:[%s323 + $0xa8] sm:$0xff]
                  %340 = vst [vmem:[%s324 + $0x38] sm:$0xff] %v339
                $region124: #{attention_forward.4} parent=118 // loop_footer
                  %s322 = sadd.s32 1, %s318
                $region125: #{attention_forward.4} parent=118 // loop_footer_branch
                  %317 = sbr.rel target = $region121
                $region126: #{attention_forward.4} parent=118 // loop_exit
                  _
              $region119: #{attention_forward.4} parent=103 // pred_fallthru
                _
              // Predicated region
              $region127: #{attention_forward.4} parent=103 // pred_check
                _
              $region128: #{attention_forward.4} parent=103 // pred_check_branch
                %342 = sbr.rel target = $region130
              $region129: #{attention_forward.4} parent=103 // pred_region
                _
              $region130: #{attention_forward.4} parent=103 // pred_fallthru
                _
            $region104: #{attention_forward.4} parent=99 // pred_fallthru
              _
            // Predicated region
            $region105: #{attention_forward.4} parent=99 // pred_check
              _
            $region106: #{attention_forward.4} parent=99 // pred_check_branch
              %289 = sbr.rel target = $region108
            $region107: #{attention_forward.4} parent=99 // pred_region
              loop: start=0, step=1, limit=1
              $region109: #{attention_forward.4} parent=107 // loop_pre_header
                _
              $region110: #{attention_forward.4} parent=107 // loop_header
                %s292 = sphi 0, %s296
                %p293 = scmp.ge.s32.totalorder %s292, 1
                %s297 = sphi %s283, %s283
                %s298 = sphi %s279, %s279
              $region111: #{attention_forward.4} parent=107 // loop_header_branch
                %295 = sbr.rel (%p293) target = $region115
              $region112: #{attention_forward.4} parent=107 // loop_body
                %v299 = vld [vmem:[%s297] sm:$0xff]
                %300 = vst [vmem:[%s298] sm:$0xff] %v299
                %v301 = vld [vmem:[%s297 + $0x18] sm:$0xff]
                %302 = vst [vmem:[%s298 + $0x8] sm:$0xff] %v301
                %v303 = vld [vmem:[%s297 + $0x30] sm:$0xff]
                %304 = vst [vmem:[%s298 + $0x10] sm:$0xff] %v303
                %v305 = vld [vmem:[%s297 + $0x48] sm:$0xff]
                %306 = vst [vmem:[%s298 + $0x18] sm:$0xff] %v305
                %v307 = vld [vmem:[%s297 + $0x60] sm:$0xff]
                %308 = vst [vmem:[%s298 + $0x20] sm:$0xff] %v307
                %v309 = vld [vmem:[%s297 + $0x78] sm:$0xff]
                %310 = vst [vmem:[%s298 + $0x28] sm:$0xff] %v309
                %v311 = vld [vmem:[%s297 + $0x90] sm:$0xff]
                %312 = vst [vmem:[%s298 + $0x30] sm:$0xff] %v311
                %v313 = vld [vmem:[%s297 + $0xa8] sm:$0xff]
                %314 = vst [vmem:[%s298 + $0x38] sm:$0xff] %v313
              $region113: #{attention_forward.4} parent=107 // loop_footer
                %s296 = sadd.s32 1, %s292
              $region114: #{attention_forward.4} parent=107 // loop_footer_branch
                %291 = sbr.rel target = $region110
              $region115: #{attention_forward.4} parent=107 // loop_exit
                _
            $region108: #{attention_forward.4} parent=99 // pred_fallthru
              _
          $region100: #{attention_forward.4} parent=95 // pred_fallthru
            _
          %343 = vnop
        $region96: #{attention_forward.4} parent=15 // pred_fallthru
          _
      $region16: #{attention_forward.4} parent=5 // pred_fallthru
        _
      %p344 = scmp.le.s32.totalorder 1, %s9
      %p345 = scmp.lt.s32.totalorder %s9, 3
      %p346 = pnand %p344, %p345
      %p347 = pneg %p346
      // Predicated region
      $region131: #{attention_forward.4} parent=5 // pred_check
        _
      $region132: #{attention_forward.4} parent=5 // pred_check_branch
        %349 = sbr.rel (%p346) target = $region134
      $region133: #{attention_forward.4} parent=5 // pred_region
        %s350 = ssub.s32 %s9, 1
        %s351 = sand.u32 %s22, 1
        %s352 = sand.u32 %s22, 1
        %s353 = smul.addr %s352, 64
        %s354 = scalar_lea.vmem [#allocation2], %s353
        // Predicated region
        $region135: #{attention_forward.4} parent=133 // pred_check
          %p355 = pneg %p35
        $region136: #{attention_forward.4} parent=133 // pred_check_branch
          %357 = sbr.rel (%p355) target = $region138
        $region137: #{attention_forward.4} parent=133 // pred_region
          _
        $region138: #{attention_forward.4} parent=133 // pred_fallthru
          _
        %s358 = sand.u32 %s48, 1
        %s359 = sand.u32 %s48, 1
        %s360 = smul.addr %s359, 64
        %s361 = scalar_lea.vmem [#allocation3], %s360
        // Predicated region
        $region139: #{attention_forward.4} parent=133 // pred_check
          %p362 = pneg %p61
        $region140: #{attention_forward.4} parent=133 // pred_check_branch
          %364 = sbr.rel (%p362) target = $region142
        $region141: #{attention_forward.4} parent=133 // pred_region
          _
        $region142: #{attention_forward.4} parent=133 // pred_fallthru
          _
        %s365 = sand.u32 %s74, 1
        %s366 = sand.u32 %s74, 1
        %s367 = smul.addr %s366, 64
        %s368 = scalar_lea.vmem [#allocation4], %s367
        // Predicated region
        $region143: #{attention_forward.4} parent=133 // pred_check
          %p369 = pneg %p87
        $region144: #{attention_forward.4} parent=133 // pred_check_branch
          %371 = sbr.rel (%p369) target = $region146
        $region145: #{attention_forward.4} parent=133 // pred_region
          _
        $region146: #{attention_forward.4} parent=133 // pred_fallthru
          _
        %s372 = sand.u32 %s22, 1
        %s373 = sand.u32 %s22, 1
        %s374 = smul.addr %s373, 64
        %s375 = scalar_lea.vmem [#allocation2], %s374
        %p376 = pneg %p35
        %p377 = pneg %p32
        %s378 = sand.u32 %s48, 1
        %s379 = sand.u32 %s48, 1
        %s380 = smul.addr %s379, 64
        %s381 = scalar_lea.vmem [#allocation3], %s380
        %p382 = pneg %p61
        %p383 = pneg %p58
        %s384 = sand.u32 %s74, 1
        %s385 = sand.u32 %s74, 1
        %s386 = smul.addr %s385, 64
        %s387 = scalar_lea.vmem [#allocation4], %s386
        %p388 = pneg %p87
        %p389 = pneg %p84
        %p390 = pneg %p113
        %p391 = pneg %p110
        %p392 = scmp.lt.s32.totalorder %s14, 1
        %s393 = scalar_select %p392, %s14, 1
        %s394 = smul.addr %s393, 8
        %s395 = smul.addr %s394, 8
        %s396 = scalar_lea.vmem %s3, %s395
        %p397 = scmp.lt.s32.totalorder %s14, 1
        %s398 = scalar_select %p397, %s14, 1
        %s399 = smul.addr %s398, 8
        %s400 = smul.addr %s399, 8
        %s401 = scalar_lea.vmem %s3, %s400
        %v402 = vld [vmem:[%s354] sm:$0xff]
        %v403 = vld [vmem:[%s354 + $0x8] sm:$0xff]
        %v404 = vld [vmem:[%s354 + $0x10] sm:$0xff]
        %v405 = vld [vmem:[%s354 + $0x18] sm:$0xff]
        %v406 = vld [vmem:[%s354 + $0x20] sm:$0xff]
        %v407 = vld [vmem:[%s354 + $0x28] sm:$0xff]
        %v408 = vld [vmem:[%s354 + $0x30] sm:$0xff]
        %v409 = vld [vmem:[%s354 + $0x38] sm:$0xff]
        %v410 = vld [vmem:[%s361] sm:$0xff]
        %v411 = vld [vmem:[%s361 + $0x8] sm:$0xff]
        %v412 = vld [vmem:[%s361 + $0x10] sm:$0xff]
        %v413 = vld [vmem:[%s361 + $0x18] sm:$0xff]
        %v414 = vld [vmem:[%s361 + $0x20] sm:$0xff]
        %v415 = vld [vmem:[%s361 + $0x28] sm:$0xff]
        %v416 = vld [vmem:[%s361 + $0x30] sm:$0xff]
        %v417 = vld [vmem:[%s361 + $0x38] sm:$0xff]
        %v418 = vld [vmem:[%s368] sm:$0xff]
        %v419 = vld [vmem:[%s368 + $0x8] sm:$0xff]
        %v420 = vld [vmem:[%s368 + $0x10] sm:$0xff]
        %v421 = vld [vmem:[%s368 + $0x18] sm:$0xff]
        %v422 = vld [vmem:[%s368 + $0x20] sm:$0xff]
        %v423 = vld [vmem:[%s368 + $0x28] sm:$0xff]
        %v424 = vld [vmem:[%s368 + $0x30] sm:$0xff]
        %v425 = vld [vmem:[%s368 + $0x38] sm:$0xff]
        %vm426 = vcmask 261120
        %v428 = vsel %vm426, %v402, 0
        %v431 = vsel %vm426, %v403, 0
        %v434 = vsel %vm426, %v404, 0
        %v437 = vsel %vm426, %v405, 0
        %v440 = vsel %vm426, %v406, 0
        %v443 = vsel %vm426, %v407, 0
        %v446 = vsel %vm426, %v408, 0
        %v449 = vsel %vm426, %v409, 0
        %v452 = vsel %vm426, %v410, 0
        %v455 = vsel %vm426, %v411, 0
        %v458 = vsel %vm426, %v412, 0
        %v461 = vsel %vm426, %v413, 0
        %v464 = vsel %vm426, %v414, 0
        %v467 = vsel %vm426, %v415, 0
        %v470 = vsel %vm426, %v416, 0
        %v473 = vsel %vm426, %v417, 0
        %475 = vmatprep.subr.mxu0 0.0
        %476 = vmatpush1.xpose.msra.mxu0 %v452
        %477 = vmatprep.subr.mxu0 0.0
        %478 = vmatpush1.xpose.msra.mxu0 %v455
        %479 = vmatprep.subr.mxu0 0.0
        %480 = vmatpush1.xpose.msra.mxu0 %v458
        %481 = vmatprep.subr.mxu0 0.0
        %482 = vmatpush1.xpose.msra.mxu0 %v461
        %483 = vmatprep.subr.mxu0 0.0
        %484 = vmatpush1.xpose.msra.mxu0 %v464
        %485 = vmatprep.subr.mxu0 0.0
        %486 = vmatpush1.xpose.msra.mxu0 %v467
        %487 = vmatprep.subr.mxu0 0.0
        %488 = vmatpush1.xpose.msra.mxu0 %v470
        %489 = vmatprep.subr.mxu0 0.0
        %490 = vmatpush1.xpose.msra.mxu0 %v473
        %491 = vmatprep.subr.mxu0 0.0
        %492 = vmatpush1.xpose.msra.mxu0 0.0
        %493 = vmatprep.subr.mxu0 0.0
        %494 = vmatpush1.xpose.msra.mxu0 0.0
        %495 = vmatprep.subr.mxu0 0.0
        %496 = vmatpush1.xpose.msra.mxu0 0.0
        %497 = vmatprep.subr.mxu0 0.0
        %498 = vmatpush1.xpose.msra.mxu0 0.0
        %499 = vmatprep.subr.mxu0 0.0
        %500 = vmatpush1.xpose.msra.mxu0 0.0
        %501 = vmatprep.subr.mxu0 0.0
        %502 = vmatpush1.xpose.msra.mxu0 0.0
        %503 = vmatprep.subr.mxu0 0.0
        %504 = vmatpush1.xpose.msra.mxu0 0.0
        %505 = vmatprep.subr.mxu0 0.0
        %506 = vmatpush1.xpose.msra.mxu0 0.0
        %507 = vmatprep.subr.mxu0 0.0
        %508 = vmatpush1.xpose.msra.mxu0 0.0
        %509 = vmatprep.subr.mxu0 0.0
        %510 = vmatpush1.xpose.msra.mxu0 0.0
        %511 = vmatprep.subr.mxu0 0.0
        %512 = vmatpush1.xpose.msra.mxu0 0.0
        %513 = vmatprep.subr.mxu0 0.0
        %514 = vmatpush1.xpose.msra.mxu0 0.0
        %515 = vmatprep.subr.mxu0 0.0
        %516 = vmatpush1.xpose.msra.mxu0 0.0
        %517 = vmatprep.subr.mxu0 0.0
        %518 = vmatpush1.xpose.msra.mxu0 0.0
        %519 = vmatprep.subr.mxu0 0.0
        %520 = vmatpush1.xpose.msra.mxu0 0.0
        %521 = vmatprep.subr.mxu0 0.0
        %522 = vmatpush1.xpose.msra.mxu0 0.0
        %523 = vmatprep.subr.mxu0 0.0
        %524 = vmatpush1.xpose.msra.mxu0 0.0
        %525 = vmatprep.subr.mxu0 0.0
        %526 = vmatpush1.xpose.msra.mxu0 0.0
        %527 = vmatprep.subr.mxu0 0.0
        %528 = vmatpush1.xpose.msra.mxu0 0.0
        %529 = vmatprep.subr.mxu0 0.0
        %530 = vmatpush1.xpose.msra.mxu0 0.0
        %531 = vmatprep.subr.mxu0 0.0
        %532 = vmatpush1.xpose.msra.mxu0 0.0
        %533 = vmatprep.subr.mxu0 0.0
        %534 = vmatpush1.xpose.msra.mxu0 0.0
        %535 = vmatprep.subr.mxu0 0.0
        %536 = vmatpush1.xpose.msra.mxu0 0.0
        %537 = vmatprep.subr.mxu0 0.0
        %538 = vmatpush1.xpose.msra.mxu0 0.0
        %539 = vmatprep.mubr.f32.mxu0 0.0
        %540 = vmatmul.mubr.f32.gmra.mrb[0].mxu0 %v428
        %v541 = vpop.f32.mrb[0].mxu0
        %v542 = vadd.f32 0.0, %v541
        %v543 = vpop.f32.mrb[0].mxu0
        %544 = vmatprep.mubr.f32.mxu0 0.0
        %545 = vmatmul.mubr.f32.gmra.mrb[0].mxu0 %v431
        %v546 = vpop.f32.mrb[0].mxu0
        %v547 = vadd.f32 0.0, %v546
        %v548 = vpop.f32.mrb[0].mxu0
        %549 = vmatprep.mubr.f32.mxu0 0.0
        %550 = vmatmul.mubr.f32.gmra.mrb[0].mxu0 %v434
        %v551 = vpop.f32.mrb[0].mxu0
        %v552 = vadd.f32 0.0, %v551
        %v553 = vpop.f32.mrb[0].mxu0
        %554 = vmatprep.mubr.f32.mxu0 0.0
        %555 = vmatmul.mubr.f32.gmra.mrb[0].mxu0 %v437
        %v556 = vpop.f32.mrb[0].mxu0
        %v557 = vadd.f32 0.0, %v556
        %v558 = vpop.f32.mrb[0].mxu0
        %559 = vmatprep.mubr.f32.mxu0 0.0
        %560 = vmatmul.mubr.f32.gmra.mrb[0].mxu0 %v440
        %v561 = vpop.f32.mrb[0].mxu0
        %v562 = vadd.f32 0.0, %v561
        %v563 = vpop.f32.mrb[0].mxu0
        %564 = vmatprep.mubr.f32.mxu0 0.0
        %565 = vmatmul.mubr.f32.gmra.mrb[0].mxu0 %v443
        %v566 = vpop.f32.mrb[0].mxu0
        %v567 = vadd.f32 0.0, %v566
        %v568 = vpop.f32.mrb[0].mxu0
        %569 = vmatprep.mubr.f32.mxu0 0.0
        %570 = vmatmul.mubr.f32.gmra.mrb[0].mxu0 %v446
        %v571 = vpop.f32.mrb[0].mxu0
        %v572 = vadd.f32 0.0, %v571
        %v573 = vpop.f32.mrb[0].mxu0
        %574 = vmatprep.mubr.f32.mxu0 0.0
        %575 = vmatmul.mubr.f32.gmra.mrb[0].mxu0 %v449
        %v576 = vpop.f32.mrb[0].mxu0
        %v577 = vadd.f32 0.0, %v576
        %v578 = vpop.f32.mrb[0].mxu0
        %579 = vdwg.mxu0
        %v580 = vmul.f32 %v542, 0.17677669
        %v581 = vmul.f32 %v547, 0.17677669
        %v582 = vmul.f32 %v552, 0.17677669
        %v583 = vmul.f32 %v557, 0.17677669
        %v584 = vmul.f32 %v562, 0.17677669
        %v585 = vmul.f32 %v567, 0.17677669
        %v586 = vmul.f32 %v572, 0.17677669
        %v587 = vmul.f32 %v577, 0.17677669
        %vm588 = vcmask 523264
        %v589 = vsel %vm588, %v580, -inf
        %590 = vmax.xlane.f32.xlu0 %v589
        %v591 = vpop.xlane.xlu0 %590
        %v592 = vsel %vm588, %v581, -inf
        %593 = vmax.xlane.f32.xlu0 %v592
        %v594 = vpop.xlane.xlu0 %593
        %v595 = vsel %vm588, %v582, -inf
        %596 = vmax.xlane.f32.xlu0 %v595
        %v597 = vpop.xlane.xlu0 %596
        %v598 = vsel %vm588, %v583, -inf
        %599 = vmax.xlane.f32.xlu0 %v598
        %v600 = vpop.xlane.xlu0 %599
        %v601 = vsel %vm588, %v584, -inf
        %602 = vmax.xlane.f32.xlu0 %v601
        %v603 = vpop.xlane.xlu0 %602
        %v604 = vsel %vm588, %v585, -inf
        %605 = vmax.xlane.f32.xlu0 %v604
        %v606 = vpop.xlane.xlu0 %605
        %v607 = vsel %vm588, %v586, -inf
        %608 = vmax.xlane.f32.xlu0 %v607
        %v609 = vpop.xlane.xlu0 %608
        %v610 = vsel %vm588, %v587, -inf
        %611 = vmax.xlane.f32.xlu0 %v610
        %v612 = vpop.xlane.xlu0 %611
        %v613 = vsub.f32 %v580, %v591
        %v614 = vsub.f32 %v581, %v594
        %v615 = vsub.f32 %v582, %v597
        %v616 = vsub.f32 %v583, %v600
        %v617 = vsub.f32 %v584, %v603
        %v618 = vsub.f32 %v585, %v606
        %v619 = vsub.f32 %v586, %v609
        %v620 = vsub.f32 %v587, %v612
        %v621 = vmul.f32 %v613, 1.442695
        %v622 = vpow.pop %v621
        %v623 = vmul.f32 %v614, 1.442695
        %v624 = vpow.pop %v623
        %v625 = vmul.f32 %v615, 1.442695
        %v626 = vpow.pop %v625
        %v627 = vmul.f32 %v616, 1.442695
        %v628 = vpow.pop %v627
        %v629 = vmul.f32 %v617, 1.442695
        %v630 = vpow.pop %v629
        %v631 = vmul.f32 %v618, 1.442695
        %v632 = vpow.pop %v631
        %v633 = vmul.f32 %v619, 1.442695
        %v634 = vpow.pop %v633
        %v635 = vmul.f32 %v620, 1.442695
        %v636 = vpow.pop %v635
        %v637 = vsel %vm588, %v622, 0.0
        %638 = vadd.xlane.f32.xlu0 %v637
        %v639 = vpop.xlane.xlu0 %638
        %v640 = vsel %vm588, %v624, 0.0
        %641 = vadd.xlane.f32.xlu0 %v640
        %v642 = vpop.xlane.xlu0 %641
        %v643 = vsel %vm588, %v626, 0.0
        %644 = vadd.xlane.f32.xlu0 %v643
        %v645 = vpop.xlane.xlu0 %644
        %v646 = vsel %vm588, %v628, 0.0
        %647 = vadd.xlane.f32.xlu0 %v646
        %v648 = vpop.xlane.xlu0 %647
        %v649 = vsel %vm588, %v630, 0.0
        %650 = vadd.xlane.f32.xlu0 %v649
        %v651 = vpop.xlane.xlu0 %650
        %v652 = vsel %vm588, %v632, 0.0
        %653 = vadd.xlane.f32.xlu0 %v652
        %v654 = vpop.xlane.xlu0 %653
        %v655 = vsel %vm588, %v634, 0.0
        %656 = vadd.xlane.f32.xlu0 %v655
        %v657 = vpop.xlane.xlu0 %656
        %v658 = vsel %vm588, %v636, 0.0
        %659 = vadd.xlane.f32.xlu0 %v658
        %v660 = vpop.xlane.xlu0 %659
        %v661 = vrcp.pop %v639
        %v662 = vrcp.pop %v642
        %v663 = vrcp.pop %v645
        %v664 = vrcp.pop %v648
        %v665 = vrcp.pop %v651
        %v666 = vrcp.pop %v654
        %v667 = vrcp.pop %v657
        %v668 = vrcp.pop %v660
        %v669 = vmul.f32 %v622, %v661
        %v670 = vmul.f32 %v624, %v662
        %v671 = vmul.f32 %v626, %v663
        %v672 = vmul.f32 %v628, %v664
        %v673 = vmul.f32 %v630, %v665
        %v674 = vmul.f32 %v632, %v666
        %v675 = vmul.f32 %v634, %v667
        %v676 = vmul.f32 %v636, %v668
        %v678 = vsel %vm588, %v669, 0
        %v681 = vsel %vm588, %v670, 0
        %v684 = vsel %vm588, %v671, 0
        %v687 = vsel %vm588, %v672, 0
        %v690 = vsel %vm588, %v673, 0
        %v693 = vsel %vm588, %v674, 0
        %v696 = vsel %vm588, %v675, 0
        %v699 = vsel %vm588, %v676, 0
        %701 = vmatprep.subr.mxu0 0.0
        %702 = vmatpush1.msra.mxu0 %v418
        %703 = vmatprep.subr.mxu0 0.0
        %704 = vmatpush1.msra.mxu0 %v419
        %705 = vmatprep.subr.mxu0 0.0
        %706 = vmatpush1.msra.mxu0 %v420
        %707 = vmatprep.subr.mxu0 0.0
        %708 = vmatpush1.msra.mxu0 %v421
        %709 = vmatprep.subr.mxu0 0.0
        %710 = vmatpush1.msra.mxu0 %v422
        %711 = vmatprep.subr.mxu0 0.0
        %712 = vmatpush1.msra.mxu0 %v423
        %713 = vmatprep.subr.mxu0 0.0
        %714 = vmatpush1.msra.mxu0 %v424
        %715 = vmatprep.subr.mxu0 0.0
        %716 = vmatpush1.msra.mxu0 %v425
        %717 = vmatprep.subr.mxu0 0.0
        %718 = vmatpush1.msra.mxu0 0.0
        %719 = vmatprep.subr.mxu0 0.0
        %720 = vmatpush1.msra.mxu0 0.0
        %721 = vmatprep.subr.mxu0 0.0
        %722 = vmatpush1.msra.mxu0 0.0
        %723 = vmatprep.subr.mxu0 0.0
        %724 = vmatpush1.msra.mxu0 0.0
        %725 = vmatprep.subr.mxu0 0.0
        %726 = vmatpush1.msra.mxu0 0.0
        %727 = vmatprep.subr.mxu0 0.0
        %728 = vmatpush1.msra.mxu0 0.0
        %729 = vmatprep.subr.mxu0 0.0
        %730 = vmatpush1.msra.mxu0 0.0
        %731 = vmatprep.subr.mxu0 0.0
        %732 = vmatpush1.msra.mxu0 0.0
        %733 = vmatprep.subr.mxu0 0.0
        %734 = vmatpush1.msra.mxu0 0.0
        %735 = vmatprep.subr.mxu0 0.0
        %736 = vmatpush1.msra.mxu0 0.0
        %737 = vmatprep.subr.mxu0 0.0
        %738 = vmatpush1.msra.mxu0 0.0
        %739 = vmatprep.subr.mxu0 0.0
        %740 = vmatpush1.msra.mxu0 0.0
        %741 = vmatprep.subr.mxu0 0.0
        %742 = vmatpush1.msra.mxu0 0.0
        %743 = vmatprep.subr.mxu0 0.0
        %744 = vmatpush1.msra.mxu0 0.0
        %745 = vmatprep.subr.mxu0 0.0
        %746 = vmatpush1.msra.mxu0 0.0
        %747 = vmatprep.subr.mxu0 0.0
        %748 = vmatpush1.msra.mxu0 0.0
        %749 = vmatprep.subr.mxu0 0.0
        %750 = vmatpush1.msra.mxu0 0.0
        %751 = vmatprep.subr.mxu0 0.0
        %752 = vmatpush1.msra.mxu0 0.0
        %753 = vmatprep.subr.mxu0 0.0
        %754 = vmatpush1.msra.mxu0 0.0
        %755 = vmatprep.subr.mxu0 0.0
        %756 = vmatpush1.msra.mxu0 0.0
        %757 = vmatprep.subr.mxu0 0.0
        %758 = vmatpush1.msra.mxu0 0.0
        %759 = vmatprep.subr.mxu0 0.0
        %760 = vmatpush1.msra.mxu0 0.0
        %761 = vmatprep.subr.mxu0 0.0
        %762 = vmatpush1.msra.mxu0 0.0
        %763 = vmatprep.subr.mxu0 0.0
        %764 = vmatpush1.msra.mxu0 0.0
        %765 = vmatprep.mubr.f32.mxu0 0.0
        %766 = vmatmul.mubr.f32.gmra.mrb[0].mxu0 %v678
        %v767 = vpop.f32.mrb[0].mxu0
        %v768 = vadd.f32 0.0, %v767
        %v769 = vpop.f32.mrb[0].mxu0
        %770 = vmatprep.mubr.f32.mxu0 0.0
        %771 = vmatmul.mubr.f32.gmra.mrb[0].mxu0 %v681
        %v772 = vpop.f32.mrb[0].mxu0
        %v773 = vadd.f32 0.0, %v772
        %v774 = vpop.f32.mrb[0].mxu0
        %775 = vmatprep.mubr.f32.mxu0 0.0
        %776 = vmatmul.mubr.f32.gmra.mrb[0].mxu0 %v684
        %v777 = vpop.f32.mrb[0].mxu0
        %v778 = vadd.f32 0.0, %v777
        %v779 = vpop.f32.mrb[0].mxu0
        %780 = vmatprep.mubr.f32.mxu0 0.0
        %781 = vmatmul.mubr.f32.gmra.mrb[0].mxu0 %v687
        %v782 = vpop.f32.mrb[0].mxu0
        %v783 = vadd.f32 0.0, %v782
        %v784 = vpop.f32.mrb[0].mxu0
        %785 = vmatprep.mubr.f32.mxu0 0.0
        %786 = vmatmul.mubr.f32.gmra.mrb[0].mxu0 %v690
        %v787 = vpop.f32.mrb[0].mxu0
        %v788 = vadd.f32 0.0, %v787
        %v789 = vpop.f32.mrb[0].mxu0
        %790 = vmatprep.mubr.f32.mxu0 0.0
        %791 = vmatmul.mubr.f32.gmra.mrb[0].mxu0 %v693
        %v792 = vpop.f32.mrb[0].mxu0
        %v793 = vadd.f32 0.0, %v792
        %v794 = vpop.f32.mrb[0].mxu0
        %795 = vmatprep.mubr.f32.mxu0 0.0
        %796 = vmatmul.mubr.f32.gmra.mrb[0].mxu0 %v696
        %v797 = vpop.f32.mrb[0].mxu0
        %v798 = vadd.f32 0.0, %v797
        %v799 = vpop.f32.mrb[0].mxu0
        %800 = vmatprep.mubr.f32.mxu0 0.0
        %801 = vmatmul.mubr.f32.gmra.mrb[0].mxu0 %v699
        %v802 = vpop.f32.mrb[0].mxu0
        %v803 = vadd.f32 0.0, %v802
        %v804 = vpop.f32.mrb[0].mxu0
        %805 = vdwg.mxu0
        %806 = vrot.lane.b32.xlu0 %v402, 96
        %v807 = vpop.permute.xlu0 %806
        %808 = vrot.lane.b32.xlu0 %v403, 96
        %v809 = vpop.permute.xlu0 %808
        %810 = vrot.lane.b32.xlu0 %v404, 96
        %v811 = vpop.permute.xlu0 %810
        %812 = vrot.lane.b32.xlu0 %v405, 96
        %v813 = vpop.permute.xlu0 %812
        %814 = vrot.lane.b32.xlu0 %v406, 96
        %v815 = vpop.permute.xlu0 %814
        %816 = vrot.lane.b32.xlu0 %v407, 96
        %v817 = vpop.permute.xlu0 %816
        %818 = vrot.lane.b32.xlu0 %v408, 96
        %v819 = vpop.permute.xlu0 %818
        %820 = vrot.lane.b32.xlu0 %v409, 96
        %v821 = vpop.permute.xlu0 %820
        %822 = vrot.lane.b32.xlu0 %v410, 96
        %v823 = vpop.permute.xlu0 %822
        %824 = vrot.lane.b32.xlu0 %v411, 96
        %v825 = vpop.permute.xlu0 %824
        %826 = vrot.lane.b32.xlu0 %v412, 96
        %v827 = vpop.permute.xlu0 %826
        %828 = vrot.lane.b32.xlu0 %v413, 96
        %v829 = vpop.permute.xlu0 %828
        %830 = vrot.lane.b32.xlu0 %v414, 96
        %v831 = vpop.permute.xlu0 %830
        %832 = vrot.lane.b32.xlu0 %v415, 96
        %v833 = vpop.permute.xlu0 %832
        %834 = vrot.lane.b32.xlu0 %v416, 96
        %v835 = vpop.permute.xlu0 %834
        %836 = vrot.lane.b32.xlu0 %v417, 96
        %v837 = vpop.permute.xlu0 %836
        %v838 = vsel %vm426, %v807, 0
        %v840 = vsel %vm426, %v809, 0
        %v842 = vsel %vm426, %v811, 0
        %v844 = vsel %vm426, %v813, 0
        %v846 = vsel %vm426, %v815, 0
        %v848 = vsel %vm426, %v817, 0
        %v850 = vsel %vm426, %v819, 0
        %v852 = vsel %vm426, %v821, 0
        %v854 = vsel %vm426, %v823, 0
        %v856 = vsel %vm426, %v825, 0
        %v858 = vsel %vm426, %v827, 0
        %v860 = vsel %vm426, %v829, 0
        %v862 = vsel %vm426, %v831, 0
        %v864 = vsel %vm426, %v833, 0
        %v866 = vsel %vm426, %v835, 0
        %v868 = vsel %vm426, %v837, 0
        %870 = vmatprep.subr.mxu0 0.0
        %871 = vmatpush1.xpose.msra.mxu0 %v854
        %872 = vmatprep.subr.mxu0 0.0
        %873 = vmatpush1.xpose.msra.mxu0 %v856
        %874 = vmatprep.subr.mxu0 0.0
        %875 = vmatpush1.xpose.msra.mxu0 %v858
        %876 = vmatprep.subr.mxu0 0.0
        %877 = vmatpush1.xpose.msra.mxu0 %v860
        %878 = vmatprep.subr.mxu0 0.0
        %879 = vmatpush1.xpose.msra.mxu0 %v862
        %880 = vmatprep.subr.mxu0 0.0
        %881 = vmatpush1.xpose.msra.mxu0 %v864
        %882 = vmatprep.subr.mxu0 0.0
        %883 = vmatpush1.xpose.msra.mxu0 %v866
        %884 = vmatprep.subr.mxu0 0.0
        %885 = vmatpush1.xpose.msra.mxu0 %v868
        %886 = vmatprep.subr.mxu0 0.0
        %887 = vmatpush1.xpose.msra.mxu0 0.0
        %888 = vmatprep.subr.mxu0 0.0
        %889 = vmatpush1.xpose.msra.mxu0 0.0
        %890 = vmatprep.subr.mxu0 0.0
        %891 = vmatpush1.xpose.msra.mxu0 0.0
        %892 = vmatprep.subr.mxu0 0.0
        %893 = vmatpush1.xpose.msra.mxu0 0.0
        %894 = vmatprep.subr.mxu0 0.0
        %895 = vmatpush1.xpose.msra.mxu0 0.0
        %896 = vmatprep.subr.mxu0 0.0
        %897 = vmatpush1.xpose.msra.mxu0 0.0
        %898 = vmatprep.subr.mxu0 0.0
        %899 = vmatpush1.xpose.msra.mxu0 0.0
        %900 = vmatprep.subr.mxu0 0.0
        %901 = vmatpush1.xpose.msra.mxu0 0.0
        %902 = vmatprep.subr.mxu0 0.0
        %903 = vmatpush1.xpose.msra.mxu0 0.0
        %904 = vmatprep.subr.mxu0 0.0
        %905 = vmatpush1.xpose.msra.mxu0 0.0
        %906 = vmatprep.subr.mxu0 0.0
        %907 = vmatpush1.xpose.msra.mxu0 0.0
        %908 = vmatprep.subr.mxu0 0.0
        %909 = vmatpush1.xpose.msra.mxu0 0.0
        %910 = vmatprep.subr.mxu0 0.0
        %911 = vmatpush1.xpose.msra.mxu0 0.0
        %912 = vmatprep.subr.mxu0 0.0
        %913 = vmatpush1.xpose.msra.mxu0 0.0
        %914 = vmatprep.subr.mxu0 0.0
        %915 = vmatpush1.xpose.msra.mxu0 0.0
        %916 = vmatprep.subr.mxu0 0.0
        %917 = vmatpush1.xpose.msra.mxu0 0.0
        %918 = vmatprep.subr.mxu0 0.0
        %919 = vmatpush1.xpose.msra.mxu0 0.0
        %920 = vmatprep.subr.mxu0 0.0
        %921 = vmatpush1.xpose.msra.mxu0 0.0
        %922 = vmatprep.subr.mxu0 0.0
        %923 = vmatpush1.xpose.msra.mxu0 0.0
        %924 = vmatprep.subr.mxu0 0.0
        %925 = vmatpush1.xpose.msra.mxu0 0.0
        %926 = vmatprep.subr.mxu0 0.0
        %927 = vmatpush1.xpose.msra.mxu0 0.0
        %928 = vmatprep.subr.mxu0 0.0
        %929 = vmatpush1.xpose.msra.mxu0 0.0
        %930 = vmatprep.subr.mxu0 0.0
        %931 = vmatpush1.xpose.msra.mxu0 0.0
        %932 = vmatprep.subr.mxu0 0.0
        %933 = vmatpush1.xpose.msra.mxu0 0.0
        %934 = vmatprep.mubr.f32.mxu0 0.0
        %935 = vmatmul.mubr.f32.gmra.mrb[0].mxu0 %v838
        %v936 = vpop.f32.mrb[0].mxu0
        %v937 = vadd.f32 0.0, %v936
        %v938 = vpop.f32.mrb[0].mxu0
        %939 = vmatprep.mubr.f32.mxu0 0.0
        %940 = vmatmul.mubr.f32.gmra.mrb[0].mxu0 %v840
        %v941 = vpop.f32.mrb[0].mxu0
        %v942 = vadd.f32 0.0, %v941
        %v943 = vpop.f32.mrb[0].mxu0
        %944 = vmatprep.mubr.f32.mxu0 0.0
        %945 = vmatmul.mubr.f32.gmra.mrb[0].mxu0 %v842
        %v946 = vpop.f32.mrb[0].mxu0
        %v947 = vadd.f32 0.0, %v946
        %v948 = vpop.f32.mrb[0].mxu0
        %949 = vmatprep.mubr.f32.mxu0 0.0
        %950 = vmatmul.mubr.f32.gmra.mrb[0].mxu0 %v844
        %v951 = vpop.f32.mrb[0].mxu0
        %v952 = vadd.f32 0.0, %v951
        %v953 = vpop.f32.mrb[0].mxu0
        %954 = vmatprep.mubr.f32.mxu0 0.0
        %955 = vmatmul.mubr.f32.gmra.mrb[0].mxu0 %v846
        %v956 = vpop.f32.mrb[0].mxu0
        %v957 = vadd.f32 0.0, %v956
        %v958 = vpop.f32.mrb[0].mxu0
        %959 = vmatprep.mubr.f32.mxu0 0.0
        %960 = vmatmul.mubr.f32.gmra.mrb[0].mxu0 %v848
        %v961 = vpop.f32.mrb[0].mxu0
        %v962 = vadd.f32 0.0, %v961
        %v963 = vpop.f32.mrb[0].mxu0
        %964 = vmatprep.mubr.f32.mxu0 0.0
        %965 = vmatmul.mubr.f32.gmra.mrb[0].mxu0 %v850
        %v966 = vpop.f32.mrb[0].mxu0
        %v967 = vadd.f32 0.0, %v966
        %v968 = vpop.f32.mrb[0].mxu0
        %969 = vmatprep.mubr.f32.mxu0 0.0
        %970 = vmatmul.mubr.f32.gmra.mrb[0].mxu0 %v852
        %v971 = vpop.f32.mrb[0].mxu0
        %v972 = vadd.f32 0.0, %v971
        %v973 = vpop.f32.mrb[0].mxu0
        %974 = vdwg.mxu0
        %v975 = vmul.f32 %v937, 0.17677669
        %v976 = vmul.f32 %v942, 0.17677669
        %v977 = vmul.f32 %v947, 0.17677669
        %v978 = vmul.f32 %v952, 0.17677669
        %v979 = vmul.f32 %v957, 0.17677669
        %v980 = vmul.f32 %v962, 0.17677669
        %v981 = vmul.f32 %v967, 0.17677669
        %v982 = vmul.f32 %v972, 0.17677669
        %v983 = vsel %vm588, %v975, -inf
        %984 = vmax.xlane.f32.xlu0 %v983
        %v985 = vpop.xlane.xlu0 %984
        %v986 = vsel %vm588, %v976, -inf
        %987 = vmax.xlane.f32.xlu0 %v986
        %v988 = vpop.xlane.xlu0 %987
        %v989 = vsel %vm588, %v977, -inf
        %990 = vmax.xlane.f32.xlu0 %v989
        %v991 = vpop.xlane.xlu0 %990
        %v992 = vsel %vm588, %v978, -inf
        %993 = vmax.xlane.f32.xlu0 %v992
        %v994 = vpop.xlane.xlu0 %993
        %v995 = vsel %vm588, %v979, -inf
        %996 = vmax.xlane.f32.xlu0 %v995
        %v997 = vpop.xlane.xlu0 %996
        %v998 = vsel %vm588, %v980, -inf
        %999 = vmax.xlane.f32.xlu0 %v998
        %v1000 = vpop.xlane.xlu0 %999
        %v1001 = vsel %vm588, %v981, -inf
        %1002 = vmax.xlane.f32.xlu0 %v1001
        %v1003 = vpop.xlane.xlu0 %1002
        %v1004 = vsel %vm588, %v982, -inf
        %1005 = vmax.xlane.f32.xlu0 %v1004
        %v1006 = vpop.xlane.xlu0 %1005
        %v1007 = vsub.f32 %v975, %v985
        %v1008 = vsub.f32 %v976, %v988
        %v1009 = vsub.f32 %v977, %v991
        %v1010 = vsub.f32 %v978, %v994
        %v1011 = vsub.f32 %v979, %v997
        %v1012 = vsub.f32 %v980, %v1000
        %v1013 = vsub.f32 %v981, %v1003
        %v1014 = vsub.f32 %v982, %v1006
        %v1015 = vmul.f32 %v1007, 1.442695
        %v1016 = vpow.pop %v1015
        %v1017 = vmul.f32 %v1008, 1.442695
        %v1018 = vpow.pop %v1017
        %v1019 = vmul.f32 %v1009, 1.442695
        %v1020 = vpow.pop %v1019
        %v1021 = vmul.f32 %v1010, 1.442695
        %v1022 = vpow.pop %v1021
        %v1023 = vmul.f32 %v1011, 1.442695
        %v1024 = vpow.pop %v1023
        %v1025 = vmul.f32 %v1012, 1.442695
        %v1026 = vpow.pop %v1025
        %v1027 = vmul.f32 %v1013, 1.442695
        %v1028 = vpow.pop %v1027
        %v1029 = vmul.f32 %v1014, 1.442695
        %v1030 = vpow.pop %v1029
        %v1031 = vsel %vm588, %v1016, 0.0
        %1032 = vadd.xlane.f32.xlu0 %v1031
        %v1033 = vpop.xlane.xlu0 %1032
        %v1034 = vsel %vm588, %v1018, 0.0
        %1035 = vadd.xlane.f32.xlu0 %v1034
        %v1036 = vpop.xlane.xlu0 %1035
        %v1037 = vsel %vm588, %v1020, 0.0
        %1038 = vadd.xlane.f32.xlu0 %v1037
        %v1039 = vpop.xlane.xlu0 %1038
        %v1040 = vsel %vm588, %v1022, 0.0
        %1041 = vadd.xlane.f32.xlu0 %v1040
        %v1042 = vpop.xlane.xlu0 %1041
        %v1043 = vsel %vm588, %v1024, 0.0
        %1044 = vadd.xlane.f32.xlu0 %v1043
        %v1045 = vpop.xlane.xlu0 %1044
        %v1046 = vsel %vm588, %v1026, 0.0
        %1047 = vadd.xlane.f32.xlu0 %v1046
        %v1048 = vpop.xlane.xlu0 %1047
        %v1049 = vsel %vm588, %v1028, 0.0
        %1050 = vadd.xlane.f32.xlu0 %v1049
        %v1051 = vpop.xlane.xlu0 %1050
        %v1052 = vsel %vm588, %v1030, 0.0
        %1053 = vadd.xlane.f32.xlu0 %v1052
        %v1054 = vpop.xlane.xlu0 %1053
        %v1055 = vrcp.pop %v1033
        %v1056 = vrcp.pop %v1036
        %v1057 = vrcp.pop %v1039
        %v1058 = vrcp.pop %v1042
        %v1059 = vrcp.pop %v1045
        %v1060 = vrcp.pop %v1048
        %v1061 = vrcp.pop %v1051
        %v1062 = vrcp.pop %v1054
        %v1063 = vmul.f32 %v1016, %v1055
        %v1064 = vmul.f32 %v1018, %v1056
        %v1065 = vmul.f32 %v1020, %v1057
        %v1066 = vmul.f32 %v1022, %v1058
        %v1067 = vmul.f32 %v1024, %v1059
        %v1068 = vmul.f32 %v1026, %v1060
        %v1069 = vmul.f32 %v1028, %v1061
        %v1070 = vmul.f32 %v1030, %v1062
        %1079 = vrot.lane.b32.xlu0 %v418, 96
        %v1080 = vpop.permute.xlu0 %1079
        %1081 = vrot.lane.b32.xlu0 %v419, 96
        %v1082 = vpop.permute.xlu0 %1081
        %1083 = vrot.lane.b32.xlu0 %v420, 96
        %v1084 = vpop.permute.xlu0 %1083
        %1085 = vrot.lane.b32.xlu0 %v421, 96
        %v1086 = vpop.permute.xlu0 %1085
        %1087 = vrot.lane.b32.xlu0 %v422, 96
        %v1088 = vpop.permute.xlu0 %1087
        %1089 = vrot.lane.b32.xlu0 %v423, 96
        %v1090 = vpop.permute.xlu0 %1089
        %1091 = vrot.lane.b32.xlu0 %v424, 96
        %v1092 = vpop.permute.xlu0 %1091
        %1093 = vrot.lane.b32.xlu0 %v425, 96
        %v1094 = vpop.permute.xlu0 %1093
        %v1104 = vsel %vm588, %v1063, 0
        %v1107 = vsel %vm588, %v1064, 0
        %v1110 = vsel %vm588, %v1065, 0
        %v1113 = vsel %vm588, %v1066, 0
        %v1116 = vsel %vm588, %v1067, 0
        %v1119 = vsel %vm588, %v1068, 0
        %v1122 = vsel %vm588, %v1069, 0
        %v1125 = vsel %vm588, %v1070, 0
        %1127 = vmatprep.subr.mxu0 0.0
        %1128 = vmatpush1.msra.mxu0 %v1080
        %1129 = vmatprep.subr.mxu0 0.0
        %1130 = vmatpush1.msra.mxu0 %v1082
        %1131 = vmatprep.subr.mxu0 0.0
        %1132 = vmatpush1.msra.mxu0 %v1084
        %1133 = vmatprep.subr.mxu0 0.0
        %1134 = vmatpush1.msra.mxu0 %v1086
        %1135 = vmatprep.subr.mxu0 0.0
        %1136 = vmatpush1.msra.mxu0 %v1088
        %1137 = vmatprep.subr.mxu0 0.0
        %1138 = vmatpush1.msra.mxu0 %v1090
        %1139 = vmatprep.subr.mxu0 0.0
        %1140 = vmatpush1.msra.mxu0 %v1092
        %1141 = vmatprep.subr.mxu0 0.0
        %1142 = vmatpush1.msra.mxu0 %v1094
        %1143 = vmatprep.subr.mxu0 0.0
        %1144 = vmatpush1.msra.mxu0 0.0
        %1145 = vmatprep.subr.mxu0 0.0
        %1146 = vmatpush1.msra.mxu0 0.0
        %1147 = vmatprep.subr.mxu0 0.0
        %1148 = vmatpush1.msra.mxu0 0.0
        %1149 = vmatprep.subr.mxu0 0.0
        %1150 = vmatpush1.msra.mxu0 0.0
        %1151 = vmatprep.subr.mxu0 0.0
        %1152 = vmatpush1.msra.mxu0 0.0
        %1153 = vmatprep.subr.mxu0 0.0
        %1154 = vmatpush1.msra.mxu0 0.0
        %1155 = vmatprep.subr.mxu0 0.0
        %1156 = vmatpush1.msra.mxu0 0.0
        %1157 = vmatprep.subr.mxu0 0.0
        %1158 = vmatpush1.msra.mxu0 0.0
        %1159 = vmatprep.subr.mxu0 0.0
        %1160 = vmatpush1.msra.mxu0 0.0
        %1161 = vmatprep.subr.mxu0 0.0
        %1162 = vmatpush1.msra.mxu0 0.0
        %1163 = vmatprep.subr.mxu0 0.0
        %1164 = vmatpush1.msra.mxu0 0.0
        %1165 = vmatprep.subr.mxu0 0.0
        %1166 = vmatpush1.msra.mxu0 0.0
        %1167 = vmatprep.subr.mxu0 0.0
        %1168 = vmatpush1.msra.mxu0 0.0
        %1169 = vmatprep.subr.mxu0 0.0
        %1170 = vmatpush1.msra.mxu0 0.0
        %1171 = vmatprep.subr.mxu0 0.0
        %1172 = vmatpush1.msra.mxu0 0.0
        %1173 = vmatprep.subr.mxu0 0.0
        %1174 = vmatpush1.msra.mxu0 0.0
        %1175 = vmatprep.subr.mxu0 0.0
        %1176 = vmatpush1.msra.mxu0 0.0
        %1177 = vmatprep.subr.mxu0 0.0
        %1178 = vmatpush1.msra.mxu0 0.0
        %1179 = vmatprep.subr.mxu0 0.0
        %1180 = vmatpush1.msra.mxu0 0.0
        %1181 = vmatprep.subr.mxu0 0.0
        %1182 = vmatpush1.msra.mxu0 0.0
        %1183 = vmatprep.subr.mxu0 0.0
        %1184 = vmatpush1.msra.mxu0 0.0
        %1185 = vmatprep.subr.mxu0 0.0
        %1186 = vmatpush1.msra.mxu0 0.0
        %1187 = vmatprep.subr.mxu0 0.0
        %1188 = vmatpush1.msra.mxu0 0.0
        %1189 = vmatprep.subr.mxu0 0.0
        %1190 = vmatpush1.msra.mxu0 0.0
        %1191 = vmatprep.mubr.f32.mxu0 0.0
        %1192 = vmatmul.mubr.f32.gmra.mrb[0].mxu0 %v1104
        %v1193 = vpop.f32.mrb[0].mxu0
        %v1194 = vadd.f32 0.0, %v1193
        %v1195 = vpop.f32.mrb[0].mxu0
        %1196 = vmatprep.mubr.f32.mxu0 0.0
        %1197 = vmatmul.mubr.f32.gmra.mrb[0].mxu0 %v1107
        %v1198 = vpop.f32.mrb[0].mxu0
        %v1199 = vadd.f32 0.0, %v1198
        %v1200 = vpop.f32.mrb[0].mxu0
        %1201 = vmatprep.mubr.f32.mxu0 0.0
        %1202 = vmatmul.mubr.f32.gmra.mrb[0].mxu0 %v1110
        %v1203 = vpop.f32.mrb[0].mxu0
        %v1204 = vadd.f32 0.0, %v1203
        %v1205 = vpop.f32.mrb[0].mxu0
        %1206 = vmatprep.mubr.f32.mxu0 0.0
        %1207 = vmatmul.mubr.f32.gmra.mrb[0].mxu0 %v1113
        %v1208 = vpop.f32.mrb[0].mxu0
        %v1209 = vadd.f32 0.0, %v1208
        %v1210 = vpop.f32.mrb[0].mxu0
        %1211 = vmatprep.mubr.f32.mxu0 0.0
        %1212 = vmatmul.mubr.f32.gmra.mrb[0].mxu0 %v1116
        %v1213 = vpop.f32.mrb[0].mxu0
        %v1214 = vadd.f32 0.0, %v1213
        %v1215 = vpop.f32.mrb[0].mxu0
        %1216 = vmatprep.mubr.f32.mxu0 0.0
        %1217 = vmatmul.mubr.f32.gmra.mrb[0].mxu0 %v1119
        %v1218 = vpop.f32.mrb[0].mxu0
        %v1219 = vadd.f32 0.0, %v1218
        %v1220 = vpop.f32.mrb[0].mxu0
        %1221 = vmatprep.mubr.f32.mxu0 0.0
        %1222 = vmatmul.mubr.f32.gmra.mrb[0].mxu0 %v1122
        %v1223 = vpop.f32.mrb[0].mxu0
        %v1224 = vadd.f32 0.0, %v1223
        %v1225 = vpop.f32.mrb[0].mxu0
        %1226 = vmatprep.mubr.f32.mxu0 0.0
        %1227 = vmatmul.mubr.f32.gmra.mrb[0].mxu0 %v1125
        %v1228 = vpop.f32.mrb[0].mxu0
        %v1229 = vadd.f32 0.0, %v1228
        %v1230 = vpop.f32.mrb[0].mxu0
        %1231 = vdwg.mxu0
        %1232 = vrot.lane.b32.xlu0 %v402, 64
        %v1233 = vpop.permute.xlu0 %1232
        %1234 = vrot.lane.b32.xlu0 %v403, 64
        %v1235 = vpop.permute.xlu0 %1234
        %1236 = vrot.lane.b32.xlu0 %v404, 64
        %v1237 = vpop.permute.xlu0 %1236
        %1238 = vrot.lane.b32.xlu0 %v405, 64
        %v1239 = vpop.permute.xlu0 %1238
        %1240 = vrot.lane.b32.xlu0 %v406, 64
        %v1241 = vpop.permute.xlu0 %1240
        %1242 = vrot.lane.b32.xlu0 %v407, 64
        %v1243 = vpop.permute.xlu0 %1242
        %1244 = vrot.lane.b32.xlu0 %v408, 64
        %v1245 = vpop.permute.xlu0 %1244
        %1246 = vrot.lane.b32.xlu0 %v409, 64
        %v1247 = vpop.permute.xlu0 %1246
        %1248 = vrot.lane.b32.xlu0 %v410, 64
        %v1249 = vpop.permute.xlu0 %1248
        %1250 = vrot.lane.b32.xlu0 %v411, 64
        %v1251 = vpop.permute.xlu0 %1250
        %1252 = vrot.lane.b32.xlu0 %v412, 64
        %v1253 = vpop.permute.xlu0 %1252
        %1254 = vrot.lane.b32.xlu0 %v413, 64
        %v1255 = vpop.permute.xlu0 %1254
        %1256 = vrot.lane.b32.xlu0 %v414, 64
        %v1257 = vpop.permute.xlu0 %1256
        %1258 = vrot.lane.b32.xlu0 %v415, 64
        %v1259 = vpop.permute.xlu0 %1258
        %1260 = vrot.lane.b32.xlu0 %v416, 64
        %v1261 = vpop.permute.xlu0 %1260
        %1262 = vrot.lane.b32.xlu0 %v417, 64
        %v1263 = vpop.permute.xlu0 %1262
        %v1264 = vsel %vm426, %v1233, 0
        %v1266 = vsel %vm426, %v1235, 0
        %v1268 = vsel %vm426, %v1237, 0
        %v1270 = vsel %vm426, %v1239, 0
        %v1272 = vsel %vm426, %v1241, 0
        %v1274 = vsel %vm426, %v1243, 0
        %v1276 = vsel %vm426, %v1245, 0
        %v1278 = vsel %vm426, %v1247, 0
        %v1280 = vsel %vm426, %v1249, 0
        %v1282 = vsel %vm426, %v1251, 0
        %v1284 = vsel %vm426, %v1253, 0
        %v1286 = vsel %vm426, %v1255, 0
        %v1288 = vsel %vm426, %v1257, 0
        %v1290 = vsel %vm426, %v1259, 0
        %v1292 = vsel %vm426, %v1261, 0
        %v1294 = vsel %vm426, %v1263, 0
        %1296 = vmatprep.subr.mxu0 0.0
        %1297 = vmatpush1.xpose.msra.mxu0 %v1280
        %1298 = vmatprep.subr.mxu0 0.0
        %1299 = vmatpush1.xpose.msra.mxu0 %v1282
        %1300 = vmatprep.subr.mxu0 0.0
        %1301 = vmatpush1.xpose.msra.mxu0 %v1284
        %1302 = vmatprep.subr.mxu0 0.0
        %1303 = vmatpush1.xpose.msra.mxu0 %v1286
        %1304 = vmatprep.subr.mxu0 0.0
        %1305 = vmatpush1.xpose.msra.mxu0 %v1288
        %1306 = vmatprep.subr.mxu0 0.0
        %1307 = vmatpush1.xpose.msra.mxu0 %v1290
        %1308 = vmatprep.subr.mxu0 0.0
        %1309 = vmatpush1.xpose.msra.mxu0 %v1292
        %1310 = vmatprep.subr.mxu0 0.0
        %1311 = vmatpush1.xpose.msra.mxu0 %v1294
        %1312 = vmatprep.subr.mxu0 0.0
        %1313 = vmatpush1.xpose.msra.mxu0 0.0
        %1314 = vmatprep.subr.mxu0 0.0
        %1315 = vmatpush1.xpose.msra.mxu0 0.0
        %1316 = vmatprep.subr.mxu0 0.0
        %1317 = vmatpush1.xpose.msra.mxu0 0.0
        %1318 = vmatprep.subr.mxu0 0.0
        %1319 = vmatpush1.xpose.msra.mxu0 0.0
        %1320 = vmatprep.subr.mxu0 0.0
        %1321 = vmatpush1.xpose.msra.mxu0 0.0
        %1322 = vmatprep.subr.mxu0 0.0
        %1323 = vmatpush1.xpose.msra.mxu0 0.0
        %1324 = vmatprep.subr.mxu0 0.0
        %1325 = vmatpush1.xpose.msra.mxu0 0.0
        %1326 = vmatprep.subr.mxu0 0.0
        %1327 = vmatpush1.xpose.msra.mxu0 0.0
        %1328 = vmatprep.subr.mxu0 0.0
        %1329 = vmatpush1.xpose.msra.mxu0 0.0
        %1330 = vmatprep.subr.mxu0 0.0
        %1331 = vmatpush1.xpose.msra.mxu0 0.0
        %1332 = vmatprep.subr.mxu0 0.0
        %1333 = vmatpush1.xpose.msra.mxu0 0.0
        %1334 = vmatprep.subr.mxu0 0.0
        %1335 = vmatpush1.xpose.msra.mxu0 0.0
        %1336 = vmatprep.subr.mxu0 0.0
        %1337 = vmatpush1.xpose.msra.mxu0 0.0
        %1338 = vmatprep.subr.mxu0 0.0
        %1339 = vmatpush1.xpose.msra.mxu0 0.0
        %1340 = vmatprep.subr.mxu0 0.0
        %1341 = vmatpush1.xpose.msra.mxu0 0.0
        %1342 = vmatprep.subr.mxu0 0.0
        %1343 = vmatpush1.xpose.msra.mxu0 0.0
        %1344 = vmatprep.subr.mxu0 0.0
        %1345 = vmatpush1.xpose.msra.mxu0 0.0
        %1346 = vmatprep.subr.mxu0 0.0
        %1347 = vmatpush1.xpose.msra.mxu0 0.0
        %1348 = vmatprep.subr.mxu0 0.0
        %1349 = vmatpush1.xpose.msra.mxu0 0.0
        %1350 = vmatprep.subr.mxu0 0.0
        %1351 = vmatpush1.xpose.msra.mxu0 0.0
        %1352 = vmatprep.subr.mxu0 0.0
        %1353 = vmatpush1.xpose.msra.mxu0 0.0
        %1354 = vmatprep.subr.mxu0 0.0
        %1355 = vmatpush1.xpose.msra.mxu0 0.0
        %1356 = vmatprep.subr.mxu0 0.0
        %1357 = vmatpush1.xpose.msra.mxu0 0.0
        %1358 = vmatprep.subr.mxu0 0.0
        %1359 = vmatpush1.xpose.msra.mxu0 0.0
        %1360 = vmatprep.mubr.f32.mxu0 0.0
        %1361 = vmatmul.mubr.f32.gmra.mrb[0].mxu0 %v1264
        %v1362 = vpop.f32.mrb[0].mxu0
        %v1363 = vadd.f32 0.0, %v1362
        %v1364 = vpop.f32.mrb[0].mxu0
        %1365 = vmatprep.mubr.f32.mxu0 0.0
        %1366 = vmatmul.mubr.f32.gmra.mrb[0].mxu0 %v1266
        %v1367 = vpop.f32.mrb[0].mxu0
        %v1368 = vadd.f32 0.0, %v1367
        %v1369 = vpop.f32.mrb[0].mxu0
        %1370 = vmatprep.mubr.f32.mxu0 0.0
        %1371 = vmatmul.mubr.f32.gmra.mrb[0].mxu0 %v1268
        %v1372 = vpop.f32.mrb[0].mxu0
        %v1373 = vadd.f32 0.0, %v1372
        %v1374 = vpop.f32.mrb[0].mxu0
        %1375 = vmatprep.mubr.f32.mxu0 0.0
        %1376 = vmatmul.mubr.f32.gmra.mrb[0].mxu0 %v1270
        %v1377 = vpop.f32.mrb[0].mxu0
        %v1378 = vadd.f32 0.0, %v1377
        %v1379 = vpop.f32.mrb[0].mxu0
        %1380 = vmatprep.mubr.f32.mxu0 0.0
        %1381 = vmatmul.mubr.f32.gmra.mrb[0].mxu0 %v1272
        %v1382 = vpop.f32.mrb[0].mxu0
        %v1383 = vadd.f32 0.0, %v1382
        %v1384 = vpop.f32.mrb[0].mxu0
        %1385 = vmatprep.mubr.f32.mxu0 0.0
        %1386 = vmatmul.mubr.f32.gmra.mrb[0].mxu0 %v1274
        %v1387 = vpop.f32.mrb[0].mxu0
        %v1388 = vadd.f32 0.0, %v1387
        %v1389 = vpop.f32.mrb[0].mxu0
        %1390 = vmatprep.mubr.f32.mxu0 0.0
        %1391 = vmatmul.mubr.f32.gmra.mrb[0].mxu0 %v1276
        %v1392 = vpop.f32.mrb[0].mxu0
        %v1393 = vadd.f32 0.0, %v1392
        %v1394 = vpop.f32.mrb[0].mxu0
        %1395 = vmatprep.mubr.f32.mxu0 0.0
        %1396 = vmatmul.mubr.f32.gmra.mrb[0].mxu0 %v1278
        %v1397 = vpop.f32.mrb[0].mxu0
        %v1398 = vadd.f32 0.0, %v1397
        %v1399 = vpop.f32.mrb[0].mxu0
        %1400 = vdwg.mxu0
        %v1401 = vmul.f32 %v1363, 0.17677669
        %v1402 = vmul.f32 %v1368, 0.17677669
        %v1403 = vmul.f32 %v1373, 0.17677669
        %v1404 = vmul.f32 %v1378, 0.17677669
        %v1405 = vmul.f32 %v1383, 0.17677669
        %v1406 = vmul.f32 %v1388, 0.17677669
        %v1407 = vmul.f32 %v1393, 0.17677669
        %v1408 = vmul.f32 %v1398, 0.17677669
        %v1409 = vsel %vm588, %v1401, -inf
        %1410 = vmax.xlane.f32.xlu0 %v1409
        %v1411 = vpop.xlane.xlu0 %1410
        %v1412 = vsel %vm588, %v1402, -inf
        %1413 = vmax.xlane.f32.xlu0 %v1412
        %v1414 = vpop.xlane.xlu0 %1413
        %v1415 = vsel %vm588, %v1403, -inf
        %1416 = vmax.xlane.f32.xlu0 %v1415
        %v1417 = vpop.xlane.xlu0 %1416
        %v1418 = vsel %vm588, %v1404, -inf
        %1419 = vmax.xlane.f32.xlu0 %v1418
        %v1420 = vpop.xlane.xlu0 %1419
        %v1421 = vsel %vm588, %v1405, -inf
        %1422 = vmax.xlane.f32.xlu0 %v1421
        %v1423 = vpop.xlane.xlu0 %1422
        %v1424 = vsel %vm588, %v1406, -inf
        %1425 = vmax.xlane.f32.xlu0 %v1424
        %v1426 = vpop.xlane.xlu0 %1425
        %v1427 = vsel %vm588, %v1407, -inf
        %1428 = vmax.xlane.f32.xlu0 %v1427
        %v1429 = vpop.xlane.xlu0 %1428
        %v1430 = vsel %vm588, %v1408, -inf
        %1431 = vmax.xlane.f32.xlu0 %v1430
        %v1432 = vpop.xlane.xlu0 %1431
        %v1433 = vsub.f32 %v1401, %v1411
        %v1434 = vsub.f32 %v1402, %v1414
        %v1435 = vsub.f32 %v1403, %v1417
        %v1436 = vsub.f32 %v1404, %v1420
        %v1437 = vsub.f32 %v1405, %v1423
        %v1438 = vsub.f32 %v1406, %v1426
        %v1439 = vsub.f32 %v1407, %v1429
        %v1440 = vsub.f32 %v1408, %v1432
        %v1441 = vmul.f32 %v1433, 1.442695
        %v1442 = vpow.pop %v1441
        %v1443 = vmul.f32 %v1434, 1.442695
        %v1444 = vpow.pop %v1443
        %v1445 = vmul.f32 %v1435, 1.442695
        %v1446 = vpow.pop %v1445
        %v1447 = vmul.f32 %v1436, 1.442695
        %v1448 = vpow.pop %v1447
        %v1449 = vmul.f32 %v1437, 1.442695
        %v1450 = vpow.pop %v1449
        %v1451 = vmul.f32 %v1438, 1.442695
        %v1452 = vpow.pop %v1451
        %v1453 = vmul.f32 %v1439, 1.442695
        %v1454 = vpow.pop %v1453
        %v1455 = vmul.f32 %v1440, 1.442695
        %v1456 = vpow.pop %v1455
        %v1457 = vsel %vm588, %v1442, 0.0
        %1458 = vadd.xlane.f32.xlu0 %v1457
        %v1459 = vpop.xlane.xlu0 %1458
        %v1460 = vsel %vm588, %v1444, 0.0
        %1461 = vadd.xlane.f32.xlu0 %v1460
        %v1462 = vpop.xlane.xlu0 %1461
        %v1463 = vsel %vm588, %v1446, 0.0
        %1464 = vadd.xlane.f32.xlu0 %v1463
        %v1465 = vpop.xlane.xlu0 %1464
        %v1466 = vsel %vm588, %v1448, 0.0
        %1467 = vadd.xlane.f32.xlu0 %v1466
        %v1468 = vpop.xlane.xlu0 %1467
        %v1469 = vsel %vm588, %v1450, 0.0
        %1470 = vadd.xlane.f32.xlu0 %v1469
        %v1471 = vpop.xlane.xlu0 %1470
        %v1472 = vsel %vm588, %v1452, 0.0
        %1473 = vadd.xlane.f32.xlu0 %v1472
        %v1474 = vpop.xlane.xlu0 %1473
        %v1475 = vsel %vm588, %v1454, 0.0
        %1476 = vadd.xlane.f32.xlu0 %v1475
        %v1477 = vpop.xlane.xlu0 %1476
        %v1478 = vsel %vm588, %v1456, 0.0
        %1479 = vadd.xlane.f32.xlu0 %v1478
        %v1480 = vpop.xlane.xlu0 %1479
        %v1481 = vrcp.pop %v1459
        %v1482 = vrcp.pop %v1462
        %v1483 = vrcp.pop %v1465
        %v1484 = vrcp.pop %v1468
        %v1485 = vrcp.pop %v1471
        %v1486 = vrcp.pop %v1474
        %v1487 = vrcp.pop %v1477
        %v1488 = vrcp.pop %v1480
        %v1489 = vmul.f32 %v1442, %v1481
        %v1490 = vmul.f32 %v1444, %v1482
        %v1491 = vmul.f32 %v1446, %v1483
        %v1492 = vmul.f32 %v1448, %v1484
        %v1493 = vmul.f32 %v1450, %v1485
        %v1494 = vmul.f32 %v1452, %v1486
        %v1495 = vmul.f32 %v1454, %v1487
        %v1496 = vmul.f32 %v1456, %v1488
        %1497 = vrot.lane.b32.xlu0 %v418, 64
        %v1498 = vpop.permute.xlu0 %1497
        %1499 = vrot.lane.b32.xlu0 %v419, 64
        %v1500 = vpop.permute.xlu0 %1499
        %1501 = vrot.lane.b32.xlu0 %v420, 64
        %v1502 = vpop.permute.xlu0 %1501
        %1503 = vrot.lane.b32.xlu0 %v421, 64
        %v1504 = vpop.permute.xlu0 %1503
        %1505 = vrot.lane.b32.xlu0 %v422, 64
        %v1506 = vpop.permute.xlu0 %1505
        %1507 = vrot.lane.b32.xlu0 %v423, 64
        %v1508 = vpop.permute.xlu0 %1507
        %1509 = vrot.lane.b32.xlu0 %v424, 64
        %v1510 = vpop.permute.xlu0 %1509
        %1511 = vrot.lane.b32.xlu0 %v425, 64
        %v1512 = vpop.permute.xlu0 %1511
        %v1522 = vsel %vm588, %v1489, 0
        %v1525 = vsel %vm588, %v1490, 0
        %v1528 = vsel %vm588, %v1491, 0
        %v1531 = vsel %vm588, %v1492, 0
        %v1534 = vsel %vm588, %v1493, 0
        %v1537 = vsel %vm588, %v1494, 0
        %v1540 = vsel %vm588, %v1495, 0
        %v1543 = vsel %vm588, %v1496, 0
        %1545 = vmatprep.subr.mxu0 0.0
        %1546 = vmatpush1.msra.mxu0 %v1498
        %1547 = vmatprep.subr.mxu0 0.0
        %1548 = vmatpush1.msra.mxu0 %v1500
        %1549 = vmatprep.subr.mxu0 0.0
        %1550 = vmatpush1.msra.mxu0 %v1502
        %1551 = vmatprep.subr.mxu0 0.0
        %1552 = vmatpush1.msra.mxu0 %v1504
        %1553 = vmatprep.subr.mxu0 0.0
        %1554 = vmatpush1.msra.mxu0 %v1506
        %1555 = vmatprep.subr.mxu0 0.0
        %1556 = vmatpush1.msra.mxu0 %v1508
        %1557 = vmatprep.subr.mxu0 0.0
        %1558 = vmatpush1.msra.mxu0 %v1510
        %1559 = vmatprep.subr.mxu0 0.0
        %1560 = vmatpush1.msra.mxu0 %v1512
        %1561 = vmatprep.subr.mxu0 0.0
        %1562 = vmatpush1.msra.mxu0 0.0
        %1563 = vmatprep.subr.mxu0 0.0
        %1564 = vmatpush1.msra.mxu0 0.0
        %1565 = vmatprep.subr.mxu0 0.0
        %1566 = vmatpush1.msra.mxu0 0.0
        %1567 = vmatprep.subr.mxu0 0.0
        %1568 = vmatpush1.msra.mxu0 0.0
        %1569 = vmatprep.subr.mxu0 0.0
        %1570 = vmatpush1.msra.mxu0 0.0
        %1571 = vmatprep.subr.mxu0 0.0
        %1572 = vmatpush1.msra.mxu0 0.0
        %1573 = vmatprep.subr.mxu0 0.0
        %1574 = vmatpush1.msra.mxu0 0.0
        %1575 = vmatprep.subr.mxu0 0.0
        %1576 = vmatpush1.msra.mxu0 0.0
        %1577 = vmatprep.subr.mxu0 0.0
        %1578 = vmatpush1.msra.mxu0 0.0
        %1579 = vmatprep.subr.mxu0 0.0
        %1580 = vmatpush1.msra.mxu0 0.0
        %1581 = vmatprep.subr.mxu0 0.0
        %1582 = vmatpush1.msra.mxu0 0.0
        %1583 = vmatprep.subr.mxu0 0.0
        %1584 = vmatpush1.msra.mxu0 0.0
        %1585 = vmatprep.subr.mxu0 0.0
        %1586 = vmatpush1.msra.mxu0 0.0
        %1587 = vmatprep.subr.mxu0 0.0
        %1588 = vmatpush1.msra.mxu0 0.0
        %1589 = vmatprep.subr.mxu0 0.0
        %1590 = vmatpush1.msra.mxu0 0.0
        %1591 = vmatprep.subr.mxu0 0.0
        %1592 = vmatpush1.msra.mxu0 0.0
        %1593 = vmatprep.subr.mxu0 0.0
        %1594 = vmatpush1.msra.mxu0 0.0
        %1595 = vmatprep.subr.mxu0 0.0
        %1596 = vmatpush1.msra.mxu0 0.0
        %1597 = vmatprep.subr.mxu0 0.0
        %1598 = vmatpush1.msra.mxu0 0.0
        %1599 = vmatprep.subr.mxu0 0.0
        %1600 = vmatpush1.msra.mxu0 0.0
        %1601 = vmatprep.subr.mxu0 0.0
        %1602 = vmatpush1.msra.mxu0 0.0
        %1603 = vmatprep.subr.mxu0 0.0
        %1604 = vmatpush1.msra.mxu0 0.0
        %1605 = vmatprep.subr.mxu0 0.0
        %1606 = vmatpush1.msra.mxu0 0.0
        %1607 = vmatprep.subr.mxu0 0.0
        %1608 = vmatpush1.msra.mxu0 0.0
        %1609 = vmatprep.mubr.f32.mxu0 0.0
        %1610 = vmatmul.mubr.f32.gmra.mrb[0].mxu0 %v1522
        %v1611 = vpop.f32.mrb[0].mxu0
        %v1612 = vadd.f32 0.0, %v1611
        %v1613 = vpop.f32.mrb[0].mxu0
        %1614 = vmatprep.mubr.f32.mxu0 0.0
        %1615 = vmatmul.mubr.f32.gmra.mrb[0].mxu0 %v1525
        %v1616 = vpop.f32.mrb[0].mxu0
        %v1617 = vadd.f32 0.0, %v1616
        %v1618 = vpop.f32.mrb[0].mxu0
        %1619 = vmatprep.mubr.f32.mxu0 0.0
        %1620 = vmatmul.mubr.f32.gmra.mrb[0].mxu0 %v1528
        %v1621 = vpop.f32.mrb[0].mxu0
        %v1622 = vadd.f32 0.0, %v1621
        %v1623 = vpop.f32.mrb[0].mxu0
        %1624 = vmatprep.mubr.f32.mxu0 0.0
        %1625 = vmatmul.mubr.f32.gmra.mrb[0].mxu0 %v1531
        %v1626 = vpop.f32.mrb[0].mxu0
        %v1627 = vadd.f32 0.0, %v1626
        %v1628 = vpop.f32.mrb[0].mxu0
        %1629 = vmatprep.mubr.f32.mxu0 0.0
        %1630 = vmatmul.mubr.f32.gmra.mrb[0].mxu0 %v1534
        %v1631 = vpop.f32.mrb[0].mxu0
        %v1632 = vadd.f32 0.0, %v1631
        %v1633 = vpop.f32.mrb[0].mxu0
        %1634 = vmatprep.mubr.f32.mxu0 0.0
        %1635 = vmatmul.mubr.f32.gmra.mrb[0].mxu0 %v1537
        %v1636 = vpop.f32.mrb[0].mxu0
        %v1637 = vadd.f32 0.0, %v1636
        %v1638 = vpop.f32.mrb[0].mxu0
        %1639 = vmatprep.mubr.f32.mxu0 0.0
        %1640 = vmatmul.mubr.f32.gmra.mrb[0].mxu0 %v1540
        %v1641 = vpop.f32.mrb[0].mxu0
        %v1642 = vadd.f32 0.0, %v1641
        %v1643 = vpop.f32.mrb[0].mxu0
        %1644 = vmatprep.mubr.f32.mxu0 0.0
        %1645 = vmatmul.mubr.f32.gmra.mrb[0].mxu0 %v1543
        %v1646 = vpop.f32.mrb[0].mxu0
        %v1647 = vadd.f32 0.0, %v1646
        %v1648 = vpop.f32.mrb[0].mxu0
        %1649 = vdwg.mxu0
        %1650 = vrot.lane.b32.xlu0 %v402, 32
        %v1651 = vpop.permute.xlu0 %1650
        %1652 = vrot.lane.b32.xlu0 %v403, 32
        %v1653 = vpop.permute.xlu0 %1652
        %1654 = vrot.lane.b32.xlu0 %v404, 32
        %v1655 = vpop.permute.xlu0 %1654
        %1656 = vrot.lane.b32.xlu0 %v405, 32
        %v1657 = vpop.permute.xlu0 %1656
        %1658 = vrot.lane.b32.xlu0 %v406, 32
        %v1659 = vpop.permute.xlu0 %1658
        %1660 = vrot.lane.b32.xlu0 %v407, 32
        %v1661 = vpop.permute.xlu0 %1660
        %1662 = vrot.lane.b32.xlu0 %v408, 32
        %v1663 = vpop.permute.xlu0 %1662
        %1664 = vrot.lane.b32.xlu0 %v409, 32
        %v1665 = vpop.permute.xlu0 %1664
        %1666 = vrot.lane.b32.xlu0 %v410, 32
        %v1667 = vpop.permute.xlu0 %1666
        %1668 = vrot.lane.b32.xlu0 %v411, 32
        %v1669 = vpop.permute.xlu0 %1668
        %1670 = vrot.lane.b32.xlu0 %v412, 32
        %v1671 = vpop.permute.xlu0 %1670
        %1672 = vrot.lane.b32.xlu0 %v413, 32
        %v1673 = vpop.permute.xlu0 %1672
        %1674 = vrot.lane.b32.xlu0 %v414, 32
        %v1675 = vpop.permute.xlu0 %1674
        %1676 = vrot.lane.b32.xlu0 %v415, 32
        %v1677 = vpop.permute.xlu0 %1676
        %1678 = vrot.lane.b32.xlu0 %v416, 32
        %v1679 = vpop.permute.xlu0 %1678
        %1680 = vrot.lane.b32.xlu0 %v417, 32
        %v1681 = vpop.permute.xlu0 %1680
        %v1682 = vsel %vm426, %v1651, 0
        %v1684 = vsel %vm426, %v1653, 0
        %v1686 = vsel %vm426, %v1655, 0
        %v1688 = vsel %vm426, %v1657, 0
        %v1690 = vsel %vm426, %v1659, 0
        %v1692 = vsel %vm426, %v1661, 0
        %v1694 = vsel %vm426, %v1663, 0
        %v1696 = vsel %vm426, %v1665, 0
        %v1698 = vsel %vm426, %v1667, 0
        %v1700 = vsel %vm426, %v1669, 0
        %v1702 = vsel %vm426, %v1671, 0
        %v1704 = vsel %vm426, %v1673, 0
        %v1706 = vsel %vm426, %v1675, 0
        %v1708 = vsel %vm426, %v1677, 0
        %v1710 = vsel %vm426, %v1679, 0
        %v1712 = vsel %vm426, %v1681, 0
        %1714 = vmatprep.subr.mxu0 0.0
        %1715 = vmatpush1.xpose.msra.mxu0 %v1698
        %1716 = vmatprep.subr.mxu0 0.0
        %1717 = vmatpush1.xpose.msra.mxu0 %v1700
        %1718 = vmatprep.subr.mxu0 0.0
        %1719 = vmatpush1.xpose.msra.mxu0 %v1702
        %1720 = vmatprep.subr.mxu0 0.0
        %1721 = vmatpush1.xpose.msra.mxu0 %v1704
        %1722 = vmatprep.subr.mxu0 0.0
        %1723 = vmatpush1.xpose.msra.mxu0 %v1706
        %1724 = vmatprep.subr.mxu0 0.0
        %1725 = vmatpush1.xpose.msra.mxu0 %v1708
        %1726 = vmatprep.subr.mxu0 0.0
        %1727 = vmatpush1.xpose.msra.mxu0 %v1710
        %1728 = vmatprep.subr.mxu0 0.0
        %1729 = vmatpush1.xpose.msra.mxu0 %v1712
        %1730 = vmatprep.subr.mxu0 0.0
        %1731 = vmatpush1.xpose.msra.mxu0 0.0
        %1732 = vmatprep.subr.mxu0 0.0
        %1733 = vmatpush1.xpose.msra.mxu0 0.0
        %1734 = vmatprep.subr.mxu0 0.0
        %1735 = vmatpush1.xpose.msra.mxu0 0.0
        %1736 = vmatprep.subr.mxu0 0.0
        %1737 = vmatpush1.xpose.msra.mxu0 0.0
        %1738 = vmatprep.subr.mxu0 0.0
        %1739 = vmatpush1.xpose.msra.mxu0 0.0
        %1740 = vmatprep.subr.mxu0 0.0
        %1741 = vmatpush1.xpose.msra.mxu0 0.0
        %1742 = vmatprep.subr.mxu0 0.0
        %1743 = vmatpush1.xpose.msra.mxu0 0.0
        %1744 = vmatprep.subr.mxu0 0.0
        %1745 = vmatpush1.xpose.msra.mxu0 0.0
        %1746 = vmatprep.subr.mxu0 0.0
        %1747 = vmatpush1.xpose.msra.mxu0 0.0
        %1748 = vmatprep.subr.mxu0 0.0
        %1749 = vmatpush1.xpose.msra.mxu0 0.0
        %1750 = vmatprep.subr.mxu0 0.0
        %1751 = vmatpush1.xpose.msra.mxu0 0.0
        %1752 = vmatprep.subr.mxu0 0.0
        %1753 = vmatpush1.xpose.msra.mxu0 0.0
        %1754 = vmatprep.subr.mxu0 0.0
        %1755 = vmatpush1.xpose.msra.mxu0 0.0
        %1756 = vmatprep.subr.mxu0 0.0
        %1757 = vmatpush1.xpose.msra.mxu0 0.0
        %1758 = vmatprep.subr.mxu0 0.0
        %1759 = vmatpush1.xpose.msra.mxu0 0.0
        %1760 = vmatprep.subr.mxu0 0.0
        %1761 = vmatpush1.xpose.msra.mxu0 0.0
        %1762 = vmatprep.subr.mxu0 0.0
        %1763 = vmatpush1.xpose.msra.mxu0 0.0
        %1764 = vmatprep.subr.mxu0 0.0
        %1765 = vmatpush1.xpose.msra.mxu0 0.0
        %1766 = vmatprep.subr.mxu0 0.0
        %1767 = vmatpush1.xpose.msra.mxu0 0.0
        %1768 = vmatprep.subr.mxu0 0.0
        %1769 = vmatpush1.xpose.msra.mxu0 0.0
        %1770 = vmatprep.subr.mxu0 0.0
        %1771 = vmatpush1.xpose.msra.mxu0 0.0
        %1772 = vmatprep.subr.mxu0 0.0
        %1773 = vmatpush1.xpose.msra.mxu0 0.0
        %1774 = vmatprep.subr.mxu0 0.0
        %1775 = vmatpush1.xpose.msra.mxu0 0.0
        %1776 = vmatprep.subr.mxu0 0.0
        %1777 = vmatpush1.xpose.msra.mxu0 0.0
        %1778 = vmatprep.mubr.f32.mxu0 0.0
        %1779 = vmatmul.mubr.f32.gmra.mrb[0].mxu0 %v1682
        %v1780 = vpop.f32.mrb[0].mxu0
        %v1781 = vadd.f32 0.0, %v1780
        %v1782 = vpop.f32.mrb[0].mxu0
        %1783 = vmatprep.mubr.f32.mxu0 0.0
        %1784 = vmatmul.mubr.f32.gmra.mrb[0].mxu0 %v1684
        %v1785 = vpop.f32.mrb[0].mxu0
        %v1786 = vadd.f32 0.0, %v1785
        %v1787 = vpop.f32.mrb[0].mxu0
        %1788 = vmatprep.mubr.f32.mxu0 0.0
        %1789 = vmatmul.mubr.f32.gmra.mrb[0].mxu0 %v1686
        %v1790 = vpop.f32.mrb[0].mxu0
        %v1791 = vadd.f32 0.0, %v1790
        %v1792 = vpop.f32.mrb[0].mxu0
        %1793 = vmatprep.mubr.f32.mxu0 0.0
        %1794 = vmatmul.mubr.f32.gmra.mrb[0].mxu0 %v1688
        %v1795 = vpop.f32.mrb[0].mxu0
        %v1796 = vadd.f32 0.0, %v1795
        %v1797 = vpop.f32.mrb[0].mxu0
        %1798 = vmatprep.mubr.f32.mxu0 0.0
        %1799 = vmatmul.mubr.f32.gmra.mrb[0].mxu0 %v1690
        %v1800 = vpop.f32.mrb[0].mxu0
        %v1801 = vadd.f32 0.0, %v1800
        %v1802 = vpop.f32.mrb[0].mxu0
        %1803 = vmatprep.mubr.f32.mxu0 0.0
        %1804 = vmatmul.mubr.f32.gmra.mrb[0].mxu0 %v1692
        %v1805 = vpop.f32.mrb[0].mxu0
        %v1806 = vadd.f32 0.0, %v1805
        %v1807 = vpop.f32.mrb[0].mxu0
        %1808 = vmatprep.mubr.f32.mxu0 0.0
        %1809 = vmatmul.mubr.f32.gmra.mrb[0].mxu0 %v1694
        %v1810 = vpop.f32.mrb[0].mxu0
        %v1811 = vadd.f32 0.0, %v1810
        %v1812 = vpop.f32.mrb[0].mxu0
        %1813 = vmatprep.mubr.f32.mxu0 0.0
        %1814 = vmatmul.mubr.f32.gmra.mrb[0].mxu0 %v1696
        %v1815 = vpop.f32.mrb[0].mxu0
        %v1816 = vadd.f32 0.0, %v1815
        %v1817 = vpop.f32.mrb[0].mxu0
        %1818 = vdwg.mxu0
        %v1819 = vmul.f32 %v1781, 0.17677669
        %v1820 = vmul.f32 %v1786, 0.17677669
        %v1821 = vmul.f32 %v1791, 0.17677669
        %v1822 = vmul.f32 %v1796, 0.17677669
        %v1823 = vmul.f32 %v1801, 0.17677669
        %v1824 = vmul.f32 %v1806, 0.17677669
        %v1825 = vmul.f32 %v1811, 0.17677669
        %v1826 = vmul.f32 %v1816, 0.17677669
        %v1827 = vsel %vm588, %v1819, -inf
        %1828 = vmax.xlane.f32.xlu0 %v1827
        %v1829 = vpop.xlane.xlu0 %1828
        %v1830 = vsel %vm588, %v1820, -inf
        %1831 = vmax.xlane.f32.xlu0 %v1830
        %v1832 = vpop.xlane.xlu0 %1831
        %v1833 = vsel %vm588, %v1821, -inf
        %1834 = vmax.xlane.f32.xlu0 %v1833
        %v1835 = vpop.xlane.xlu0 %1834
        %v1836 = vsel %vm588, %v1822, -inf
        %1837 = vmax.xlane.f32.xlu0 %v1836
        %v1838 = vpop.xlane.xlu0 %1837
        %v1839 = vsel %vm588, %v1823, -inf
        %1840 = vmax.xlane.f32.xlu0 %v1839
        %v1841 = vpop.xlane.xlu0 %1840
        %v1842 = vsel %vm588, %v1824, -inf
        %1843 = vmax.xlane.f32.xlu0 %v1842
        %v1844 = vpop.xlane.xlu0 %1843
        %v1845 = vsel %vm588, %v1825, -inf
        %1846 = vmax.xlane.f32.xlu0 %v1845
        %v1847 = vpop.xlane.xlu0 %1846
        %v1848 = vsel %vm588, %v1826, -inf
        %1849 = vmax.xlane.f32.xlu0 %v1848
        %v1850 = vpop.xlane.xlu0 %1849
        %v1851 = vsub.f32 %v1819, %v1829
        %v1852 = vsub.f32 %v1820, %v1832
        %v1853 = vsub.f32 %v1821, %v1835
        %v1854 = vsub.f32 %v1822, %v1838
        %v1855 = vsub.f32 %v1823, %v1841
        %v1856 = vsub.f32 %v1824, %v1844
        %v1857 = vsub.f32 %v1825, %v1847
        %v1858 = vsub.f32 %v1826, %v1850
        %v1859 = vmul.f32 %v1851, 1.442695
        %v1860 = vpow.pop %v1859
        %v1861 = vmul.f32 %v1852, 1.442695
        %v1862 = vpow.pop %v1861
        %v1863 = vmul.f32 %v1853, 1.442695
        %v1864 = vpow.pop %v1863
        %v1865 = vmul.f32 %v1854, 1.442695
        %v1866 = vpow.pop %v1865
        %v1867 = vmul.f32 %v1855, 1.442695
        %v1868 = vpow.pop %v1867
        %v1869 = vmul.f32 %v1856, 1.442695
        %v1870 = vpow.pop %v1869
        %v1871 = vmul.f32 %v1857, 1.442695
        %v1872 = vpow.pop %v1871
        %v1873 = vmul.f32 %v1858, 1.442695
        %v1874 = vpow.pop %v1873
        %v1875 = vsel %vm588, %v1860, 0.0
        %1876 = vadd.xlane.f32.xlu0 %v1875
        %v1877 = vpop.xlane.xlu0 %1876
        %v1878 = vsel %vm588, %v1862, 0.0
        %1879 = vadd.xlane.f32.xlu0 %v1878
        %v1880 = vpop.xlane.xlu0 %1879
        %v1881 = vsel %vm588, %v1864, 0.0
        %1882 = vadd.xlane.f32.xlu0 %v1881
        %v1883 = vpop.xlane.xlu0 %1882
        %v1884 = vsel %vm588, %v1866, 0.0
        %1885 = vadd.xlane.f32.xlu0 %v1884
        %v1886 = vpop.xlane.xlu0 %1885
        %v1887 = vsel %vm588, %v1868, 0.0
        %1888 = vadd.xlane.f32.xlu0 %v1887
        %v1889 = vpop.xlane.xlu0 %1888
        %v1890 = vsel %vm588, %v1870, 0.0
        %1891 = vadd.xlane.f32.xlu0 %v1890
        %v1892 = vpop.xlane.xlu0 %1891
        %v1893 = vsel %vm588, %v1872, 0.0
        %1894 = vadd.xlane.f32.xlu0 %v1893
        %v1895 = vpop.xlane.xlu0 %1894
        %v1896 = vsel %vm588, %v1874, 0.0
        %1897 = vadd.xlane.f32.xlu0 %v1896
        %v1898 = vpop.xlane.xlu0 %1897
        %v1899 = vrcp.pop %v1877
        %v1900 = vrcp.pop %v1880
        %v1901 = vrcp.pop %v1883
        %v1902 = vrcp.pop %v1886
        %v1903 = vrcp.pop %v1889
        %v1904 = vrcp.pop %v1892
        %v1905 = vrcp.pop %v1895
        %v1906 = vrcp.pop %v1898
        %v1907 = vmul.f32 %v1860, %v1899
        %v1908 = vmul.f32 %v1862, %v1900
        %v1909 = vmul.f32 %v1864, %v1901
        %v1910 = vmul.f32 %v1866, %v1902
        %v1911 = vmul.f32 %v1868, %v1903
        %v1912 = vmul.f32 %v1870, %v1904
        %v1913 = vmul.f32 %v1872, %v1905
        %v1914 = vmul.f32 %v1874, %v1906
        %1915 = vrot.lane.b32.xlu0 %v418, 32
        %v1916 = vpop.permute.xlu0 %1915
        %1917 = vrot.lane.b32.xlu0 %v419, 32
        %v1918 = vpop.permute.xlu0 %1917
        %1919 = vrot.lane.b32.xlu0 %v420, 32
        %v1920 = vpop.permute.xlu0 %1919
        %1921 = vrot.lane.b32.xlu0 %v421, 32
        %v1922 = vpop.permute.xlu0 %1921
        %1923 = vrot.lane.b32.xlu0 %v422, 32
        %v1924 = vpop.permute.xlu0 %1923
        %1925 = vrot.lane.b32.xlu0 %v423, 32
        %v1926 = vpop.permute.xlu0 %1925
        %1927 = vrot.lane.b32.xlu0 %v424, 32
        %v1928 = vpop.permute.xlu0 %1927
        %1929 = vrot.lane.b32.xlu0 %v425, 32
        %v1930 = vpop.permute.xlu0 %1929
        %v1940 = vsel %vm588, %v1907, 0
        %v1943 = vsel %vm588, %v1908, 0
        %v1946 = vsel %vm588, %v1909, 0
        %v1949 = vsel %vm588, %v1910, 0
        %v1952 = vsel %vm588, %v1911, 0
        %v1955 = vsel %vm588, %v1912, 0
        %v1958 = vsel %vm588, %v1913, 0
        %v1961 = vsel %vm588, %v1914, 0
        %1963 = vmatprep.subr.mxu0 0.0
        %1964 = vmatpush1.msra.mxu0 %v1916
        %1965 = vmatprep.subr.mxu0 0.0
        %1966 = vmatpush1.msra.mxu0 %v1918
        %1967 = vmatprep.subr.mxu0 0.0
        %1968 = vmatpush1.msra.mxu0 %v1920
        %1969 = vmatprep.subr.mxu0 0.0
        %1970 = vmatpush1.msra.mxu0 %v1922
        %1971 = vmatprep.subr.mxu0 0.0
        %1972 = vmatpush1.msra.mxu0 %v1924
        %1973 = vmatprep.subr.mxu0 0.0
        %1974 = vmatpush1.msra.mxu0 %v1926
        %1975 = vmatprep.subr.mxu0 0.0
        %1976 = vmatpush1.msra.mxu0 %v1928
        %1977 = vmatprep.subr.mxu0 0.0
        %1978 = vmatpush1.msra.mxu0 %v1930
        %1979 = vmatprep.subr.mxu0 0.0
        %1980 = vmatpush1.msra.mxu0 0.0
        %1981 = vmatprep.subr.mxu0 0.0
        %1982 = vmatpush1.msra.mxu0 0.0
        %1983 = vmatprep.subr.mxu0 0.0
        %1984 = vmatpush1.msra.mxu0 0.0
        %1985 = vmatprep.subr.mxu0 0.0
        %1986 = vmatpush1.msra.mxu0 0.0
        %1987 = vmatprep.subr.mxu0 0.0
        %1988 = vmatpush1.msra.mxu0 0.0
        %1989 = vmatprep.subr.mxu0 0.0
        %1990 = vmatpush1.msra.mxu0 0.0
        %1991 = vmatprep.subr.mxu0 0.0
        %1992 = vmatpush1.msra.mxu0 0.0
        %1993 = vmatprep.subr.mxu0 0.0
        %1994 = vmatpush1.msra.mxu0 0.0
        %1995 = vmatprep.subr.mxu0 0.0
        %1996 = vmatpush1.msra.mxu0 0.0
        %1997 = vmatprep.subr.mxu0 0.0
        %1998 = vmatpush1.msra.mxu0 0.0
        %1999 = vmatprep.subr.mxu0 0.0
        %2000 = vmatpush1.msra.mxu0 0.0
        %2001 = vmatprep.subr.mxu0 0.0
        %2002 = vmatpush1.msra.mxu0 0.0
        %2003 = vmatprep.subr.mxu0 0.0
        %2004 = vmatpush1.msra.mxu0 0.0
        %2005 = vmatprep.subr.mxu0 0.0
        %2006 = vmatpush1.msra.mxu0 0.0
        %2007 = vmatprep.subr.mxu0 0.0
        %2008 = vmatpush1.msra.mxu0 0.0
        %2009 = vmatprep.subr.mxu0 0.0
        %2010 = vmatpush1.msra.mxu0 0.0
        %2011 = vmatprep.subr.mxu0 0.0
        %2012 = vmatpush1.msra.mxu0 0.0
        %2013 = vmatprep.subr.mxu0 0.0
        %2014 = vmatpush1.msra.mxu0 0.0
        %2015 = vmatprep.subr.mxu0 0.0
        %2016 = vmatpush1.msra.mxu0 0.0
        %2017 = vmatprep.subr.mxu0 0.0
        %2018 = vmatpush1.msra.mxu0 0.0
        %2019 = vmatprep.subr.mxu0 0.0
        %2020 = vmatpush1.msra.mxu0 0.0
        %2021 = vmatprep.subr.mxu0 0.0
        %2022 = vmatpush1.msra.mxu0 0.0
        %2023 = vmatprep.subr.mxu0 0.0
        %2024 = vmatpush1.msra.mxu0 0.0
        %2025 = vmatprep.subr.mxu0 0.0
        %2026 = vmatpush1.msra.mxu0 0.0
        %2027 = vmatprep.mubr.f32.mxu0 0.0
        %2028 = vmatmul.mubr.f32.gmra.mrb[0].mxu0 %v1940
        %v2029 = vpop.f32.mrb[0].mxu0
        %v2030 = vadd.f32 0.0, %v2029
        %v2031 = vpop.f32.mrb[0].mxu0
        %2032 = vmatprep.mubr.f32.mxu0 0.0
        %2033 = vmatmul.mubr.f32.gmra.mrb[0].mxu0 %v1943
        %v2034 = vpop.f32.mrb[0].mxu0
        %v2035 = vadd.f32 0.0, %v2034
        %v2036 = vpop.f32.mrb[0].mxu0
        %2037 = vmatprep.mubr.f32.mxu0 0.0
        %2038 = vmatmul.mubr.f32.gmra.mrb[0].mxu0 %v1946
        %v2039 = vpop.f32.mrb[0].mxu0
        %v2040 = vadd.f32 0.0, %v2039
        %v2041 = vpop.f32.mrb[0].mxu0
        %2042 = vmatprep.mubr.f32.mxu0 0.0
        %2043 = vmatmul.mubr.f32.gmra.mrb[0].mxu0 %v1949
        %v2044 = vpop.f32.mrb[0].mxu0
        %v2045 = vadd.f32 0.0, %v2044
        %v2046 = vpop.f32.mrb[0].mxu0
        %2047 = vmatprep.mubr.f32.mxu0 0.0
        %2048 = vmatmul.mubr.f32.gmra.mrb[0].mxu0 %v1952
        %v2049 = vpop.f32.mrb[0].mxu0
        %v2050 = vadd.f32 0.0, %v2049
        %v2051 = vpop.f32.mrb[0].mxu0
        %2052 = vmatprep.mubr.f32.mxu0 0.0
        %2053 = vmatmul.mubr.f32.gmra.mrb[0].mxu0 %v1955
        %v2054 = vpop.f32.mrb[0].mxu0
        %v2055 = vadd.f32 0.0, %v2054
        %v2056 = vpop.f32.mrb[0].mxu0
        %2057 = vmatprep.mubr.f32.mxu0 0.0
        %2058 = vmatmul.mubr.f32.gmra.mrb[0].mxu0 %v1958
        %v2059 = vpop.f32.mrb[0].mxu0
        %v2060 = vadd.f32 0.0, %v2059
        %v2061 = vpop.f32.mrb[0].mxu0
        %2062 = vmatprep.mubr.f32.mxu0 0.0
        %2063 = vmatmul.mubr.f32.gmra.mrb[0].mxu0 %v1961
        %v2064 = vpop.f32.mrb[0].mxu0
        %v2065 = vadd.f32 0.0, %v2064
        %v2066 = vpop.f32.mrb[0].mxu0
        %2067 = vdwg.mxu0
        %2076 = vrot.lane.b32.xlu0 %v1194, 32
        %v2077 = vpop.permute.xlu0 %2076
        %2078 = vrot.lane.b32.xlu0 %v1199, 32
        %v2079 = vpop.permute.xlu0 %2078
        %2080 = vrot.lane.b32.xlu0 %v1204, 32
        %v2081 = vpop.permute.xlu0 %2080
        %2082 = vrot.lane.b32.xlu0 %v1209, 32
        %v2083 = vpop.permute.xlu0 %2082
        %2084 = vrot.lane.b32.xlu0 %v1214, 32
        %v2085 = vpop.permute.xlu0 %2084
        %2086 = vrot.lane.b32.xlu0 %v1219, 32
        %v2087 = vpop.permute.xlu0 %2086
        %2088 = vrot.lane.b32.xlu0 %v1224, 32
        %v2089 = vpop.permute.xlu0 %2088
        %2090 = vrot.lane.b32.xlu0 %v1229, 32
        %v2091 = vpop.permute.xlu0 %2090
        %2108 = vrot.lane.b32.xlu0 %v1612, 64
        %v2109 = vpop.permute.xlu0 %2108
        %2110 = vrot.lane.b32.xlu0 %v1617, 64
        %v2111 = vpop.permute.xlu0 %2110
        %2112 = vrot.lane.b32.xlu0 %v1622, 64
        %v2113 = vpop.permute.xlu0 %2112
        %2114 = vrot.lane.b32.xlu0 %v1627, 64
        %v2115 = vpop.permute.xlu0 %2114
        %2116 = vrot.lane.b32.xlu0 %v1632, 64
        %v2117 = vpop.permute.xlu0 %2116
        %2118 = vrot.lane.b32.xlu0 %v1637, 64
        %v2119 = vpop.permute.xlu0 %2118
        %2120 = vrot.lane.b32.xlu0 %v1642, 64
        %v2121 = vpop.permute.xlu0 %2120
        %2122 = vrot.lane.b32.xlu0 %v1647, 64
        %v2123 = vpop.permute.xlu0 %2122
        %2140 = vrot.lane.b32.xlu0 %v2030, 96
        %v2141 = vpop.permute.xlu0 %2140
        %2142 = vrot.lane.b32.xlu0 %v2035, 96
        %v2143 = vpop.permute.xlu0 %2142
        %2144 = vrot.lane.b32.xlu0 %v2040, 96
        %v2145 = vpop.permute.xlu0 %2144
        %2146 = vrot.lane.b32.xlu0 %v2045, 96
        %v2147 = vpop.permute.xlu0 %2146
        %2148 = vrot.lane.b32.xlu0 %v2050, 96
        %v2149 = vpop.permute.xlu0 %2148
        %2150 = vrot.lane.b32.xlu0 %v2055, 96
        %v2151 = vpop.permute.xlu0 %2150
        %2152 = vrot.lane.b32.xlu0 %v2060, 96
        %v2153 = vpop.permute.xlu0 %2152
        %2154 = vrot.lane.b32.xlu0 %v2065, 96
        %v2155 = vpop.permute.xlu0 %2154
        %v2164 = vsel %vm426, %v768, %v2077
        %v2165 = vsel %vm426, %v773, %v2079
        %v2166 = vsel %vm426, %v778, %v2081
        %v2167 = vsel %vm426, %v783, %v2083
        %v2168 = vsel %vm426, %v788, %v2085
        %v2169 = vsel %vm426, %v793, %v2087
        %v2170 = vsel %vm426, %v798, %v2089
        %v2171 = vsel %vm426, %v803, %v2091
        %v2172 = vsel %vm588, %v2164, %v2109
        %v2173 = vsel %vm588, %v2165, %v2111
        %v2174 = vsel %vm588, %v2166, %v2113
        %v2175 = vsel %vm588, %v2167, %v2115
        %v2176 = vsel %vm588, %v2168, %v2117
        %v2177 = vsel %vm588, %v2169, %v2119
        %v2178 = vsel %vm588, %v2170, %v2121
        %v2179 = vsel %vm588, %v2171, %v2123
        %vm2180 = vcmask 785408
        %v2181 = vsel %vm2180, %v2172, %v2141
        %v2182 = vsel %vm2180, %v2173, %v2143
        %v2183 = vsel %vm2180, %v2174, %v2145
        %v2184 = vsel %vm2180, %v2175, %v2147
        %v2185 = vsel %vm2180, %v2176, %v2149
        %v2186 = vsel %vm2180, %v2177, %v2151
        %v2187 = vsel %vm2180, %v2178, %v2153
        %v2188 = vsel %vm2180, %v2179, %v2155
        %2189 = vst [vmem:[%s401] sm:$0xff] %v2181
        %2190 = vst [vmem:[%s401 + $0x8] sm:$0xff] %v2182
        %2191 = vst [vmem:[%s401 + $0x10] sm:$0xff] %v2183
        %2192 = vst [vmem:[%s401 + $0x18] sm:$0xff] %v2184
        %2193 = vst [vmem:[%s401 + $0x20] sm:$0xff] %v2185
        %2194 = vst [vmem:[%s401 + $0x28] sm:$0xff] %v2186
        %2195 = vst [vmem:[%s401 + $0x30] sm:$0xff] %v2187
        %2196 = vst [vmem:[%s401 + $0x38] sm:$0xff] %v2188
        %p2197 = scmp.lt.s32.totalorder %s14, 1
        %s2198 = scalar_select %p2197, %s14, 1
        %s2199 = smul.addr %s2198, 8
        %s2200 = smul.addr %s2199, 8
        %s2201 = scalar_lea.vmem %s3, %s2200
        // Predicated region
        $region147: #{attention_forward.4} parent=133 // pred_check
          %p2202 = pneg %p110
        $region148: #{attention_forward.4} parent=133 // pred_check_branch
          %2204 = sbr.rel (%p2202) target = $region150
        $region149: #{attention_forward.4} parent=133 // pred_region
          _
        $region150: #{attention_forward.4} parent=133 // pred_fallthru
          _
      $region134: #{attention_forward.4} parent=5 // pred_fallthru
        _
      %p2205 = scmp.le.s32.totalorder 2, %s9
      // Predicated region
      $region151: #{attention_forward.4} parent=5 // pred_check
        %p2206 = pneg %p2205
      $region152: #{attention_forward.4} parent=5 // pred_check_branch
        %2208 = sbr.rel (%p2206) target = $region154
      $region153: #{attention_forward.4} parent=5 // pred_region
        %s2209 = ssub.s32 %s9, 2
        // Predicated region
        $region155: #{attention_forward.4} parent=153 // pred_check
          %p2210 = pneg %p116
        $region156: #{attention_forward.4} parent=153 // pred_check_branch
          %2212 = sbr.rel (%p2210) target = $region158
        $region157: #{attention_forward.4} parent=153 // pred_region
          %p2213 = scmp.lt.s32.totalorder %s15, 1
          %s2214 = scalar_select %p2213, %s15, 1
          %s2215 = smul.addr %s2214, 8
          %s2216 = smul.addr %s2215, 8
          %s2217 = scalar_lea.vmem %s3, %s2216
        $region158: #{attention_forward.4} parent=153 // pred_fallthru
          _
      $region154: #{attention_forward.4} parent=5 // pred_fallthru
        _
    $region6: #{attention_forward.4} parent=1 // loop_footer
      %s13 = sadd.s32 1, %s9
    $region7: #{attention_forward.4} parent=1 // loop_footer_branch
      %8 = sbr.rel target = $region3
    $region8: #{attention_forward.4} parent=1 // loop_exit
      _

</llo_original>
